<compile_context>
chip_gen: v7x
topology: tpu7x:2x2x1
jax: 0.10.0
libtpu: 0.0.40
codegen_flags: <defaults>
</compile_context>

<pallas_src>
import functools

import jax
import jax.numpy as jnp
from jax import lax
from jax.experimental import pallas as pl
from jax.experimental.pallas import tpu as pltpu


# ----------------------------------------------------------------------------
# Fused encoder kernel
# ----------------------------------------------------------------------------

def _layernorm(x, g, b, eps):
    """LayerNorm over last dim. x: [N, D], g/b: [1, D] (all f32)."""
    mu = jnp.mean(x, axis=-1, keepdims=True)
    xc = x - mu
    var = jnp.mean(xc * xc, axis=-1, keepdims=True)
    return xc * lax.rsqrt(var + eps) * g + b


def _encoder_kernel(mask_ref, x_ref,
                    wqkv_ref, bqkv_ref, wo_ref, bo_ref,
                    w1_ref, b1_ref, w2_ref, b2_ref,
                    ln1g_ref, ln1b_ref, ln2g_ref, ln2b_ref,
                    o_ref, *, n_layers, n_heads, head_dim, eps,
                    apply_pooling, unroll_layers):
    f32 = jnp.float32
    mdt = wqkv_ref.dtype              # MXU operand dtype (bf16 on v5e/v6e/v7x)

    x3 = x_ref[...].astype(f32)       # [Bt, S, D] -- resident for all layers
    m = mask_ref[...].astype(f32)     # [Bt, 1, S]  (1 = valid, 0 = pad)
    Bt, S, D = x3.shape
    hd = n_heads * head_dim
    scale = 1.0 / float(head_dim) ** 0.5
    key_bias = (1.0 - m) * -1e9       # additive key-only mask bias, [Bt, 1, S]

    def mm(a, w):
        # Weights already live in mdt; only cast the f32 activation side.
        return jnp.dot(a.astype(mdt), w, preferred_element_type=f32)

    x = x3.reshape(Bt * S, D)         # token-major 2-D view for all projections

    def layer_fn(l, x):
        # ---- fused Q|K|V projection over the whole (Bt*S)-token block ----
        qkv = mm(x, wqkv_ref[l]) + bqkv_ref[l]           # [Bt*S, 3*H*Dh] f32
        qkv_m = qkv.astype(mdt)                          # single cast, reused

        # ---- attention: score / P@V matmuls batched over Bt per head ----
        outs = []
        for h in range(n_heads):
            lo, hi = h * head_dim, (h + 1) * head_dim
            q_h = qkv_m[:, lo:hi].reshape(Bt, S, head_dim)
            k_h = qkv_m[:, hd + lo:hd + hi].reshape(Bt, S, head_dim)
            v_h = qkv_m[:, 2 * hd + lo:2 * hd + hi].reshape(Bt, S, head_dim)
            s = jnp.einsum('bqd,bkd->bqk', q_h, k_h,
                           preferred_element_type=f32) * scale + key_bias
            s_max = jnp.max(s, axis=-1, keepdims=True)
            p = jnp.exp(s - s_max)
            inv = pl.reciprocal(jnp.sum(p, axis=-1, keepdims=True), approx=True)
            o_h = jnp.einsum('bqk,bkd->bqd', p.astype(mdt), v_h,
                             preferred_element_type=f32) * inv
            outs.append(o_h)

        # ---- one out-projection over all concatenated heads, add & LN1 ----
        heads = jnp.concatenate(outs, axis=-1).reshape(Bt * S, hd)
        attn = mm(heads, wo_ref[l]) + bo_ref[l]
        x1 = _layernorm(attn + x, ln1g_ref[l], ln1b_ref[l], eps)

        # ---- ReLU FFN (dropout = identity in forward/eval), add & LN2 ----
        h1 = jnp.maximum(mm(x1, w1_ref[l]) + b1_ref[l], 0.0)
        ffn = mm(h1, w2_ref[l]) + b2_ref[l]
        return _layernorm(ffn + x1, ln2g_ref[l], ln2b_ref[l], eps)

    if unroll_layers:
        for l in range(n_layers):    # static unroll for small L
            x = layer_fn(l, x)
    else:                            # bound live ranges / compile time for big L
        x = lax.fori_loop(0, n_layers, layer_fn, x)

    if apply_pooling:
        xs = x.reshape(Bt, S, D)
        num = jnp.einsum('bks,bsd->bkd', m, xs,
                         preferred_element_type=f32)[:, 0, :]     # [Bt, D]
        den = jnp.maximum(jnp.sum(m, axis=-1), 1.0)               # [Bt, 1]
        pooled = num / den
        if len(o_ref.shape) == 2:                                 # dense (Bt, D) tile
            o_ref[...] = pooled.astype(o_ref.dtype)
        else:                                                     # (Bt, 1, D) fallback
            o_ref[...] = pooled[:, None, :].astype(o_ref.dtype)
    else:
        o_ref[...] = x.reshape(Bt, S, D).astype(o_ref.dtype)


# ----------------------------------------------------------------------------
# Parameter init (deterministic, synthetic) + packing + forward wrapper
# ----------------------------------------------------------------------------

def init_params(key, d_model, n_heads, head_dim, ffn_dim, n_layers,
                dtype=jnp.float32):
    d_qkv = n_heads * head_dim
    params = []
    for l in range(n_layers):
        ks = jax.random.split(jax.random.fold_in(key, l), 6)

        def w(k, shape, fan_in):
            return (jax.random.normal(k, shape) / jnp.sqrt(fan_in)).astype(dtype)

        params.append(dict(
            wq=w(ks[0], (d_model, d_qkv), d_model), bq=jnp.zeros((d_qkv,), dtype),
            wk=w(ks[1], (d_model, d_qkv), d_model), bk=jnp.zeros((d_qkv,), dtype),
            wv=w(ks[2], (d_model, d_qkv), d_model), bv=jnp.zeros((d_qkv,), dtype),
            wo=w(ks[3], (d_qkv, d_model), d_qkv),   bo=jnp.zeros((d_model,), dtype),
            w1=w(ks[4], (d_model, ffn_dim), d_model), b1=jnp.zeros((ffn_dim,), dtype),
            w2=w(ks[5], (ffn_dim, d_model), ffn_dim), b2=jnp.zeros((d_model,), dtype),
            ln1_g=jnp.ones((d_model,), dtype), ln1_b=jnp.zeros((d_model,), dtype),
            ln2_g=jnp.ones((d_model,), dtype), ln2_b=jnp.zeros((d_model,), dtype),
        ))
    return params


def pack_params(params, matmul_dtype=jnp.bfloat16):
    """Stack per-layer params along a leading L axis; fuse Q|K|V.

    Matmul weights are stored directly in `matmul_dtype` (bf16 default for the
    TPU MXU) so the kernel never re-casts them; biases / LN params stay f32.
    """
    L = len(params)

    def stack(name):
        return jnp.stack([p[name] for p in params], axis=0)

    wqkv = jnp.stack(
        [jnp.concatenate([p["wq"], p["wk"], p["wv"]], axis=1) for p in params], 0)
    bqkv = jnp.stack(
        [jnp.concatenate([p["bq"], p["bk"], p["bv"]], axis=0) for p in params], 0)

    def row(name):  # biases / LN params as f32 [L, 1, N] for clean broadcasting
        return stack(name).reshape(L, 1, -1).astype(jnp.float32)

    return dict(
        wqkv=wqkv.astype(matmul_dtype),                    # [L, D, 3*H*Dh]
        bqkv=bqkv.reshape(L, 1, -1).astype(jnp.float32),   # [L, 1, 3*H*Dh]
        wo=stack("wo").astype(matmul_dtype), bo=row("bo"),  # [L, H*Dh, D], [L,1,D]
        w1=stack("w1").astype(matmul_dtype), b1=row("b1"),  # [L, D, F],   [L,1,F]
        w2=stack("w2").astype(matmul_dtype), b2=row("b2"),  # [L, F, D],   [L,1,D]
        ln1_g=row("ln1_g"), ln1_b=row("ln1_b"),
        ln2_g=row("ln2_g"), ln2_b=row("ln2_b"),
    )


_WEIGHT_ORDER = ("wqkv", "bqkv", "wo", "bo", "w1", "b1", "w2", "b2",
                 "ln1_g", "ln1_b", "ln2_g", "ln2_b")


def _pick_block_b(batch, max_block_b=8):
    """Batch elements per grid step (must divide batch)."""
    if batch <= max_block_b:
        return batch
    for d in range(max_block_b, 0, -1):          # prefer multiples of 8
        if batch % d == 0 and d % 8 == 0:
            return d
    for d in range(max_block_b, 0, -1):
        if batch % d == 0:
            return d
    return 1


def merge_instances_forward(packed, vect, mask, n_heads, head_dim,
                            apply_pooling=True, output_attn_wts=False,
                            eps=1e-5, block_b=None):
    """MergeInstances.forward(vect, mask, apply_pooling, output_attn_wts).

    One fused pallas_call for the whole encoder (all layers [+ pooling]).
    """
    if output_attn_wts:
        # TODO(synk): returning per-layer attention maps is not implemented.
        raise NotImplementedError("output_attn_wts=True is not supported")

    B, S, D = vect.shape
    L = packed["wqkv"].shape[0]
    if block_b is None:
        block_b = _pick_block_b(B)
    assert B % block_b == 0, "block_b must divide the batch"
    grid = (B // block_b,)

    mask3 = mask.reshape(B, 1, S).astype(jnp.float32)
    weights = [packed[name] for name in _WEIGHT_ORDER]

    def full_spec(arr):
        nd = arr.ndim
        return pl.BlockSpec(arr.shape, lambda b, _nd=nd: (0,) * _nd)

    # Output: pooled result stored as a sublane-dense (block_b, D) tile when
    # the (8,128) rule allows, else as (block_b, 1, D) and reshaped outside.
    pooled_2d = apply_pooling and (block_b == B or block_b % 8 == 0)
    if apply_pooling:
        if pooled_2d:
            out_shape = jax.ShapeDtypeStruct((B, D), vect.dtype)
            out_spec = pl.BlockSpec((block_b, D), lambda b: (b, 0))
        else:
            out_shape = jax.ShapeDtypeStruct((B, 1, D), vect.dtype)
            out_spec = pl.BlockSpec((block_b, 1, D), lambda b: (b, 0, 0))
    else:
        out_shape = jax.ShapeDtypeStruct((B, S, D), vect.dtype)
        out_spec = pl.BlockSpec((block_b, S, D), lambda b: (b, 0, 0))

    # Scoped-VMEM budget: whole weight stack (double-buffered by pallas_call)
    # plus activation blocks + slack.  Explicit because v5e's default scoped
    # limit is only 16 MiB; clamped to 64 MiB so it stays legal on v7x.
    weight_bytes = sum(int(w.size) * w.dtype.itemsize for w in weights)
    ffn_dim = packed["w1"].shape[-1]
    act_bytes = 4 * block_b * S * (6 * D + 3 * n_heads * head_dim
                                   + ffn_dim + n_heads * S)
    vmem_limit = int(min(64 << 20,
                         max(32 << 20, 2 * weight_bytes + 4 * act_bytes + (4 << 20))))

    kernel = functools.partial(
        _encoder_kernel, n_layers=L, n_heads=n_heads, head_dim=head_dim,
        eps=eps, apply_pooling=apply_pooling, unroll_layers=(L <= 4))

    out = pl.pallas_call(
        kernel,
        out_shape=out_shape,
        grid=grid,
        in_specs=[pl.BlockSpec((block_b, 1, S), lambda b: (b, 0, 0)),   # mask [B,1,S]
                  pl.BlockSpec((block_b, S, D), lambda b: (b, 0, 0))]   # vect [B,S,D]
                 + [full_spec(w) for w in weights],                     # stacked weights
        out_specs=out_spec,
        compiler_params=pltpu.CompilerParams(
            dimension_semantics=("parallel",),          # v7x: 2 TCs split the batch
            vmem_limit_bytes=vmem_limit),
    )(mask3, vect, *weights)

    if apply_pooling and not pooled_2d:
        out = out.reshape(B, D)
    return out


# ----------------------------------------------------------------------------
# Demo
# ----------------------------------------------------------------------------

if __name__ == "__main__":
    # Small shapes consistent with MergeInstances / RTEncoder params:
    # project_dim=32, head_dims=8, n_heads=4, n_layer=2, dropout=0 (eval).
    B, S, D = 2, 8, 32
    n_heads, head_dim, n_layers, ffn_dim = 4, 8, 2, 64

    key = jax.random.PRNGKey(0)
    k_vec, k_par = jax.random.split(key)
    vect = jax.random.normal(k_vec, (B, S, D), jnp.float32)
    lengths = jnp.array([S, 5])
    mask = (jnp.arange(S)[None, :] < lengths[:, None]).astype(jnp.float32)  # [B, S]

    params = init_params(k_par, D, n_heads, head_dim, ffn_dim, n_layers)
    packed_bf16 = pack_params(params, matmul_dtype=jnp.bfloat16)  # MXU-native default
    packed_f32 = pack_params(params, matmul_dtype=jnp.float32)    # reference precision

    out_pooled = merge_instances_forward(packed_bf16, vect, mask, n_heads, head_dim,
                                         apply_pooling=True)
    out_seq = merge_instances_forward(packed_bf16, vect, mask, n_heads, head_dim,
                                      apply_pooling=False)
    out_f32 = merge_instances_forward(packed_f32, vect, mask, n_heads, head_dim,
                                      apply_pooling=True)

    out_pooled, out_seq, out_f32 = jax.block_until_ready(
        (out_pooled, out_seq, out_f32))

    assert out_pooled.shape == (B, D)
    assert out_seq.shape == (B, S, D)
    assert out_f32.shape == (B, D)
    assert bool(jnp.all(jnp.isfinite(out_pooled)))
    assert bool(jnp.all(jnp.isfinite(out_seq)))
    assert bool(jnp.all(jnp.isfinite(out_f32)))
    # bf16-weight MXU path should loosely agree with the f32-weight path.
    assert bool(jnp.all(jnp.abs(out_pooled - out_f32) < 0.5))
    print("KERNEL_OK")
</pallas_src>

<mosaic_0001>
module attributes {stable_mosaic.version = 11 : i64} {
  func.func @_encoder_kernel(%arg0: i32, %arg1: memref<2x1x8xf32, #tpu.memory_space<vmem>>, %arg2: memref<2x8x32xf32, #tpu.memory_space<vmem>>, %arg3: memref<2x32x96xbf16, #tpu.memory_space<vmem>>, %arg4: memref<2x1x96xf32, #tpu.memory_space<vmem>>, %arg5: memref<2x32x32xbf16, #tpu.memory_space<vmem>>, %arg6: memref<2x1x32xf32, #tpu.memory_space<vmem>>, %arg7: memref<2x32x64xbf16, #tpu.memory_space<vmem>>, %arg8: memref<2x1x64xf32, #tpu.memory_space<vmem>>, %arg9: memref<2x64x32xbf16, #tpu.memory_space<vmem>>, %arg10: memref<2x1x32xf32, #tpu.memory_space<vmem>>, %arg11: memref<2x1x32xf32, #tpu.memory_space<vmem>>, %arg12: memref<2x1x32xf32, #tpu.memory_space<vmem>>, %arg13: memref<2x1x32xf32, #tpu.memory_space<vmem>>, %arg14: memref<2x1x32xf32, #tpu.memory_space<vmem>>, %arg15: memref<2x32xf32, #tpu.memory_space<vmem>>) attributes {dimension_semantics = [#tpu.dimension_semantics<parallel>], iteration_bounds = array<i64: 1>, scalar_prefetch = 0 : i64, scratch_operands = 0 : i64, tpu.core_type = #tpu.core_type<tc>, window_params = [{transform_indices = @transform_0, window_bounds = array<i64: 2, 1, 8>}, {transform_indices = @transform_1, window_bounds = array<i64: 2, 8, 32>}, {pipeline_mode = #tpu.pipeline_mode<synchronous>, transform_indices = @transform_2, window_bounds = array<i64: 2, 32, 96>}, {pipeline_mode = #tpu.pipeline_mode<synchronous>, transform_indices = @transform_3, window_bounds = array<i64: 2, 1, 96>}, {pipeline_mode = #tpu.pipeline_mode<synchronous>, transform_indices = @transform_4, window_bounds = array<i64: 2, 32, 32>}, {pipeline_mode = #tpu.pipeline_mode<synchronous>, transform_indices = @transform_5, window_bounds = array<i64: 2, 1, 32>}, {pipeline_mode = #tpu.pipeline_mode<synchronous>, transform_indices = @transform_6, window_bounds = array<i64: 2, 32, 64>}, {pipeline_mode = #tpu.pipeline_mode<synchronous>, transform_indices = @transform_7, window_bounds = array<i64: 2, 1, 64>}, {pipeline_mode = #tpu.pipeline_mode<synchronous>, transform_indices = @transform_8, window_bounds = array<i64: 2, 64, 32>}, {pipeline_mode = #tpu.pipeline_mode<synchronous>, transform_indices = @transform_9, window_bounds = array<i64: 2, 1, 32>}, {pipeline_mode = #tpu.pipeline_mode<synchronous>, transform_indices = @transform_10, window_bounds = array<i64: 2, 1, 32>}, {pipeline_mode = #tpu.pipeline_mode<synchronous>, transform_indices = @transform_11, window_bounds = array<i64: 2, 1, 32>}, {pipeline_mode = #tpu.pipeline_mode<synchronous>, transform_indices = @transform_12, window_bounds = array<i64: 2, 1, 32>}, {pipeline_mode = #tpu.pipeline_mode<synchronous>, transform_indices = @transform_13, window_bounds = array<i64: 2, 1, 32>}, {transform_indices = @transform_14, window_bounds = array<i64: 2, 32>}]} {
    %c0 = arith.constant 0 : index
    %c0_0 = arith.constant 0 : index
    %c0_1 = arith.constant 0 : index
    %0 = vector.load %arg2[%c0, %c0_0, %c0_1] : memref<2x8x32xf32, #tpu.memory_space<vmem>>, vector<2x8x32xf32>
    %c0_2 = arith.constant 0 : index
    %c0_3 = arith.constant 0 : index
    %c0_4 = arith.constant 0 : index
    %1 = vector.load %arg1[%c0_2, %c0_3, %c0_4] : memref<2x1x8xf32, #tpu.memory_space<vmem>>, vector<2x1x8xf32>
    %cst = arith.constant 1.000000e+00 : f32
    %2 = vector.broadcast %cst : f32 to vector<2x1x8xf32>
    %3 = arith.subf %2, %1 : vector<2x1x8xf32>
    %cst_5 = arith.constant -1.000000e+09 : f32
    %4 = vector.broadcast %cst_5 : f32 to vector<2x1x8xf32>
    %5 = arith.mulf %3, %4 : vector<2x1x8xf32>
    %6 = vector.shape_cast %0 : vector<2x8x32xf32> to vector<16x32xf32>
    %c0_6 = arith.constant 0 : index
    %c0_7 = arith.constant 0 : index
    %c0_8 = arith.constant 0 : index
    %7 = vector.load %arg3[%c0_6, %c0_7, %c0_8] : memref<2x32x96xbf16, #tpu.memory_space<vmem>>, vector<1x32x96xbf16>
    %8 = vector.shape_cast %7 : vector<1x32x96xbf16> to vector<32x96xbf16>
    %9 = arith.truncf %6 : vector<16x32xf32> to vector<16x32xbf16>
    %cst_9 = arith.constant dense<0.000000e+00> : vector<16x96xf32>
    %10 = tpu.matmul %9, %8, %cst_9 {dimension_numbers = #tpu.dot_dimension_numbers<[1], [0], [0], [1], [0, 0, 1, 1], [], []>} : vector<16x32xbf16>, vector<32x96xbf16>, vector<16x96xf32> -> vector<16x96xf32>
    %c0_10 = arith.constant 0 : index
    %c0_11 = arith.constant 0 : index
    %c0_12 = arith.constant 0 : index
    %11 = vector.load %arg4[%c0_10, %c0_11, %c0_12] : memref<2x1x96xf32, #tpu.memory_space<vmem>>, vector<1x1x96xf32>
    %12 = vector.shape_cast %11 : vector<1x1x96xf32> to vector<1x96xf32>
    %13 = vector.broadcast %12 : vector<1x96xf32> to vector<16x96xf32>
    %14 = arith.addf %10, %13 : vector<16x96xf32>
    %15 = arith.truncf %14 : vector<16x96xf32> to vector<16x96xbf16>
    %16 = vector.extract_strided_slice %15 {offsets = [0, 0], sizes = [16, 8], strides = [1, 1]} : vector<16x96xbf16> to vector<16x8xbf16>
    %17 = vector.shape_cast %16 : vector<16x8xbf16> to vector<2x8x8xbf16>
    %18 = vector.extract_strided_slice %15 {offsets = [0, 32], sizes = [16, 8], strides = [1, 1]} : vector<16x96xbf16> to vector<16x8xbf16>
    %19 = vector.shape_cast %18 : vector<16x8xbf16> to vector<2x8x8xbf16>
    %20 = vector.extract_strided_slice %15 {offsets = [0, 64], sizes = [16, 8], strides = [1, 1]} : vector<16x96xbf16> to vector<16x8xbf16>
    %21 = vector.shape_cast %20 : vector<16x8xbf16> to vector<2x8x8xbf16>
    "tpu.trace_start"() <{level = 10 : i32, message = "bqd,bkd->bqk"}> : () -> ()
    %cst_13 = arith.constant dense<0.000000e+00> : vector<2x8x8xf32>
    %22 = tpu.matmul %17, %19, %cst_13 {dimension_numbers = #tpu.dot_dimension_numbers<[2], [2], [1], [1], [0, 0, 0, 1, 1, 1], [0], [0]>} : vector<2x8x8xbf16>, vector<2x8x8xbf16>, vector<2x8x8xf32> -> vector<2x8x8xf32>
    "tpu.trace_stop"() : () -> ()
    %cst_14 = arith.constant 0.353553385 : f32
    %23 = vector.broadcast %cst_14 : f32 to vector<2x8x8xf32>
    %24 = arith.mulf %22, %23 : vector<2x8x8xf32>
    %25 = vector.broadcast %5 : vector<2x1x8xf32> to vector<2x8x8xf32>
    %26 = arith.addf %24, %25 : vector<2x8x8xf32>
    %cst_15 = arith.constant dense<0xFF800000> : vector<2x8xf32>
    %27 = vector.multi_reduction <maximumf>, %26, %cst_15 [2] : vector<2x8x8xf32> to vector<2x8xf32>
    %28 = vector.shape_cast %27 : vector<2x8xf32> to vector<2x8x1xf32>
    %29 = vector.broadcast %28 : vector<2x8x1xf32> to vector<2x8x8xf32>
    %30 = arith.subf %26, %29 : vector<2x8x8xf32>
    %31 = math.exp %30 : vector<2x8x8xf32>
    %cst_16 = arith.constant dense<0.000000e+00> : vector<2x8xf32>
    %32 = vector.multi_reduction <add>, %31, %cst_16 [2] : vector<2x8x8xf32> to vector<2x8xf32>
    %33 = vector.shape_cast %32 : vector<2x8xf32> to vector<2x8x1xf32>
    %34 = tpu.reciprocal %33 {approx = true} : vector<2x8x1xf32> -> vector<2x8x1xf32>
    %35 = arith.truncf %31 : vector<2x8x8xf32> to vector<2x8x8xbf16>
    "tpu.trace_start"() <{level = 10 : i32, message = "bqk,bkd->bqd"}> : () -> ()
    %cst_17 = arith.constant dense<0.000000e+00> : vector<2x8x8xf32>
    %36 = tpu.matmul %35, %21, %cst_17 {dimension_numbers = #tpu.dot_dimension_numbers<[2], [1], [1], [2], [0, 0, 0, 1, 1, 2], [0], [0]>} : vector<2x8x8xbf16>, vector<2x8x8xbf16>, vector<2x8x8xf32> -> vector<2x8x8xf32>
    "tpu.trace_stop"() : () -> ()
    %37 = vector.broadcast %34 : vector<2x8x1xf32> to vector<2x8x8xf32>
    %38 = arith.mulf %36, %37 : vector<2x8x8xf32>
    %39 = vector.extract_strided_slice %15 {offsets = [0, 8], sizes = [16, 8], strides = [1, 1]} : vector<16x96xbf16> to vector<16x8xbf16>
    %40 = vector.shape_cast %39 : vector<16x8xbf16> to vector<2x8x8xbf16>
    %41 = vector.extract_strided_slice %15 {offsets = [0, 40], sizes = [16, 8], strides = [1, 1]} : vector<16x96xbf16> to vector<16x8xbf16>
    %42 = vector.shape_cast %41 : vector<16x8xbf16> to vector<2x8x8xbf16>
    %43 = vector.extract_strided_slice %15 {offsets = [0, 72], sizes = [16, 8], strides = [1, 1]} : vector<16x96xbf16> to vector<16x8xbf16>
    %44 = vector.shape_cast %43 : vector<16x8xbf16> to vector<2x8x8xbf16>
    "tpu.trace_start"() <{level = 10 : i32, message = "bqd,bkd->bqk"}> : () -> ()
    %cst_18 = arith.constant dense<0.000000e+00> : vector<2x8x8xf32>
    %45 = tpu.matmul %40, %42, %cst_18 {dimension_numbers = #tpu.dot_dimension_numbers<[2], [2], [1], [1], [0, 0, 0, 1, 1, 1], [0], [0]>} : vector<2x8x8xbf16>, vector<2x8x8xbf16>, vector<2x8x8xf32> -> vector<2x8x8xf32>
    "tpu.trace_stop"() : () -> ()
    %cst_19 = arith.constant 0.353553385 : f32
    %46 = vector.broadcast %cst_19 : f32 to vector<2x8x8xf32>
    %47 = arith.mulf %45, %46 : vector<2x8x8xf32>
    %48 = vector.broadcast %5 : vector<2x1x8xf32> to vector<2x8x8xf32>
    %49 = arith.addf %47, %48 : vector<2x8x8xf32>
    %cst_20 = arith.constant dense<0xFF800000> : vector<2x8xf32>
    %50 = vector.multi_reduction <maximumf>, %49, %cst_20 [2] : vector<2x8x8xf32> to vector<2x8xf32>
    %51 = vector.shape_cast %50 : vector<2x8xf32> to vector<2x8x1xf32>
    %52 = vector.broadcast %51 : vector<2x8x1xf32> to vector<2x8x8xf32>
    %53 = arith.subf %49, %52 : vector<2x8x8xf32>
    %54 = math.exp %53 : vector<2x8x8xf32>
    %cst_21 = arith.constant dense<0.000000e+00> : vector<2x8xf32>
    %55 = vector.multi_reduction <add>, %54, %cst_21 [2] : vector<2x8x8xf32> to vector<2x8xf32>
    %56 = vector.shape_cast %55 : vector<2x8xf32> to vector<2x8x1xf32>
    %57 = tpu.reciprocal %56 {approx = true} : vector<2x8x1xf32> -> vector<2x8x1xf32>
    %58 = arith.truncf %54 : vector<2x8x8xf32> to vector<2x8x8xbf16>
    "tpu.trace_start"() <{level = 10 : i32, message = "bqk,bkd->bqd"}> : () -> ()
    %cst_22 = arith.constant dense<0.000000e+00> : vector<2x8x8xf32>
    %59 = tpu.matmul %58, %44, %cst_22 {dimension_numbers = #tpu.dot_dimension_numbers<[2], [1], [1], [2], [0, 0, 0, 1, 1, 2], [0], [0]>} : vector<2x8x8xbf16>, vector<2x8x8xbf16>, vector<2x8x8xf32> -> vector<2x8x8xf32>
    "tpu.trace_stop"() : () -> ()
    %60 = vector.broadcast %57 : vector<2x8x1xf32> to vector<2x8x8xf32>
    %61 = arith.mulf %59, %60 : vector<2x8x8xf32>
    %62 = vector.extract_strided_slice %15 {offsets = [0, 16], sizes = [16, 8], strides = [1, 1]} : vector<16x96xbf16> to vector<16x8xbf16>
    %63 = vector.shape_cast %62 : vector<16x8xbf16> to vector<2x8x8xbf16>
    %64 = vector.extract_strided_slice %15 {offsets = [0, 48], sizes = [16, 8], strides = [1, 1]} : vector<16x96xbf16> to vector<16x8xbf16>
    %65 = vector.shape_cast %64 : vector<16x8xbf16> to vector<2x8x8xbf16>
    %66 = vector.extract_strided_slice %15 {offsets = [0, 80], sizes = [16, 8], strides = [1, 1]} : vector<16x96xbf16> to vector<16x8xbf16>
    %67 = vector.shape_cast %66 : vector<16x8xbf16> to vector<2x8x8xbf16>
    "tpu.trace_start"() <{level = 10 : i32, message = "bqd,bkd->bqk"}> : () -> ()
    %cst_23 = arith.constant dense<0.000000e+00> : vector<2x8x8xf32>
    %68 = tpu.matmul %63, %65, %cst_23 {dimension_numbers = #tpu.dot_dimension_numbers<[2], [2], [1], [1], [0, 0, 0, 1, 1, 1], [0], [0]>} : vector<2x8x8xbf16>, vector<2x8x8xbf16>, vector<2x8x8xf32> -> vector<2x8x8xf32>
    "tpu.trace_stop"() : () -> ()
    %cst_24 = arith.constant 0.353553385 : f32
    %69 = vector.broadcast %cst_24 : f32 to vector<2x8x8xf32>
    %70 = arith.mulf %68, %69 : vector<2x8x8xf32>
    %71 = vector.broadcast %5 : vector<2x1x8xf32> to vector<2x8x8xf32>
    %72 = arith.addf %70, %71 : vector<2x8x8xf32>
    %cst_25 = arith.constant dense<0xFF800000> : vector<2x8xf32>
    %73 = vector.multi_reduction <maximumf>, %72, %cst_25 [2] : vector<2x8x8xf32> to vector<2x8xf32>
    %74 = vector.shape_cast %73 : vector<2x8xf32> to vector<2x8x1xf32>
    %75 = vector.broadcast %74 : vector<2x8x1xf32> to vector<2x8x8xf32>
    %76 = arith.subf %72, %75 : vector<2x8x8xf32>
    %77 = math.exp %76 : vector<2x8x8xf32>
    %cst_26 = arith.constant dense<0.000000e+00> : vector<2x8xf32>
    %78 = vector.multi_reduction <add>, %77, %cst_26 [2] : vector<2x8x8xf32> to vector<2x8xf32>
    %79 = vector.shape_cast %78 : vector<2x8xf32> to vector<2x8x1xf32>
    %80 = tpu.reciprocal %79 {approx = true} : vector<2x8x1xf32> -> vector<2x8x1xf32>
    %81 = arith.truncf %77 : vector<2x8x8xf32> to vector<2x8x8xbf16>
    "tpu.trace_start"() <{level = 10 : i32, message = "bqk,bkd->bqd"}> : () -> ()
    %cst_27 = arith.constant dense<0.000000e+00> : vector<2x8x8xf32>
    %82 = tpu.matmul %81, %67, %cst_27 {dimension_numbers = #tpu.dot_dimension_numbers<[2], [1], [1], [2], [0, 0, 0, 1, 1, 2], [0], [0]>} : vector<2x8x8xbf16>, vector<2x8x8xbf16>, vector<2x8x8xf32> -> vector<2x8x8xf32>
    "tpu.trace_stop"() : () -> ()
    %83 = vector.broadcast %80 : vector<2x8x1xf32> to vector<2x8x8xf32>
    %84 = arith.mulf %82, %83 : vector<2x8x8xf32>
    %85 = vector.extract_strided_slice %15 {offsets = [0, 24], sizes = [16, 8], strides = [1, 1]} : vector<16x96xbf16> to vector<16x8xbf16>
    %86 = vector.shape_cast %85 : vector<16x8xbf16> to vector<2x8x8xbf16>
    %87 = vector.extract_strided_slice %15 {offsets = [0, 56], sizes = [16, 8], strides = [1, 1]} : vector<16x96xbf16> to vector<16x8xbf16>
    %88 = vector.shape_cast %87 : vector<16x8xbf16> to vector<2x8x8xbf16>
    %89 = vector.extract_strided_slice %15 {offsets = [0, 88], sizes = [16, 8], strides = [1, 1]} : vector<16x96xbf16> to vector<16x8xbf16>
    %90 = vector.shape_cast %89 : vector<16x8xbf16> to vector<2x8x8xbf16>
    "tpu.trace_start"() <{level = 10 : i32, message = "bqd,bkd->bqk"}> : () -> ()
    %cst_28 = arith.constant dense<0.000000e+00> : vector<2x8x8xf32>
    %91 = tpu.matmul %86, %88, %cst_28 {dimension_numbers = #tpu.dot_dimension_numbers<[2], [2], [1], [1], [0, 0, 0, 1, 1, 1], [0], [0]>} : vector<2x8x8xbf16>, vector<2x8x8xbf16>, vector<2x8x8xf32> -> vector<2x8x8xf32>
    "tpu.trace_stop"() : () -> ()
    %cst_29 = arith.constant 0.353553385 : f32
    %92 = vector.broadcast %cst_29 : f32 to vector<2x8x8xf32>
    %93 = arith.mulf %91, %92 : vector<2x8x8xf32>
    %94 = vector.broadcast %5 : vector<2x1x8xf32> to vector<2x8x8xf32>
    %95 = arith.addf %93, %94 : vector<2x8x8xf32>
    %cst_30 = arith.constant dense<0xFF800000> : vector<2x8xf32>
    %96 = vector.multi_reduction <maximumf>, %95, %cst_30 [2] : vector<2x8x8xf32> to vector<2x8xf32>
    %97 = vector.shape_cast %96 : vector<2x8xf32> to vector<2x8x1xf32>
    %98 = vector.broadcast %97 : vector<2x8x1xf32> to vector<2x8x8xf32>
    %99 = arith.subf %95, %98 : vector<2x8x8xf32>
    %100 = math.exp %99 : vector<2x8x8xf32>
    %cst_31 = arith.constant dense<0.000000e+00> : vector<2x8xf32>
    %101 = vector.multi_reduction <add>, %100, %cst_31 [2] : vector<2x8x8xf32> to vector<2x8xf32>
    %102 = vector.shape_cast %101 : vector<2x8xf32> to vector<2x8x1xf32>
    %103 = tpu.reciprocal %102 {approx = true} : vector<2x8x1xf32> -> vector<2x8x1xf32>
    %104 = arith.truncf %100 : vector<2x8x8xf32> to vector<2x8x8xbf16>
    "tpu.trace_start"() <{level = 10 : i32, message = "bqk,bkd->bqd"}> : () -> ()
    %cst_32 = arith.constant dense<0.000000e+00> : vector<2x8x8xf32>
    %105 = tpu.matmul %104, %90, %cst_32 {dimension_numbers = #tpu.dot_dimension_numbers<[2], [1], [1], [2], [0, 0, 0, 1, 1, 2], [0], [0]>} : vector<2x8x8xbf16>, vector<2x8x8xbf16>, vector<2x8x8xf32> -> vector<2x8x8xf32>
    "tpu.trace_stop"() : () -> ()
    %106 = vector.broadcast %103 : vector<2x8x1xf32> to vector<2x8x8xf32>
    %107 = arith.mulf %105, %106 : vector<2x8x8xf32>
    %108 = tpu.concatenate %38, %61, %84, %107 in 2 : vector<2x8x8xf32>, vector<2x8x8xf32>, vector<2x8x8xf32>, vector<2x8x8xf32> -> vector<2x8x32xf32>
    %109 = vector.shape_cast %108 : vector<2x8x32xf32> to vector<16x32xf32>
    %c0_33 = arith.constant 0 : index
    %c0_34 = arith.constant 0 : index
    %c0_35 = arith.constant 0 : index
    %110 = vector.load %arg5[%c0_33, %c0_34, %c0_35] : memref<2x32x32xbf16, #tpu.memory_space<vmem>>, vector<1x32x32xbf16>
    %111 = vector.shape_cast %110 : vector<1x32x32xbf16> to vector<32x32xbf16>
    %112 = arith.truncf %109 : vector<16x32xf32> to vector<16x32xbf16>
    %cst_36 = arith.constant dense<0.000000e+00> : vector<16x32xf32>
    %113 = tpu.matmul %112, %111, %cst_36 {dimension_numbers = #tpu.dot_dimension_numbers<[1], [0], [0], [1], [0, 0, 1, 1], [], []>} : vector<16x32xbf16>, vector<32x32xbf16>, vector<16x32xf32> -> vector<16x32xf32>
    %c0_37 = arith.constant 0 : index
    %c0_38 = arith.constant 0 : index
    %c0_39 = arith.constant 0 : index
    %114 = vector.load %arg6[%c0_37, %c0_38, %c0_39] : memref<2x1x32xf32, #tpu.memory_space<vmem>>, vector<1x1x32xf32>
    %115 = vector.shape_cast %114 : vector<1x1x32xf32> to vector<1x32xf32>
    %116 = vector.broadcast %115 : vector<1x32xf32> to vector<16x32xf32>
    %117 = arith.addf %113, %116 : vector<16x32xf32>
    %118 = arith.addf %117, %6 : vector<16x32xf32>
    %c0_40 = arith.constant 0 : index
    %c0_41 = arith.constant 0 : index
    %c0_42 = arith.constant 0 : index
    %119 = vector.load %arg11[%c0_40, %c0_41, %c0_42] : memref<2x1x32xf32, #tpu.memory_space<vmem>>, vector<1x1x32xf32>
    %120 = vector.shape_cast %119 : vector<1x1x32xf32> to vector<1x32xf32>
    %c0_43 = arith.constant 0 : index
    %c0_44 = arith.constant 0 : index
    %c0_45 = arith.constant 0 : index
    %121 = vector.load %arg12[%c0_43, %c0_44, %c0_45] : memref<2x1x32xf32, #tpu.memory_space<vmem>>, vector<1x1x32xf32>
    %122 = vector.shape_cast %121 : vector<1x1x32xf32> to vector<1x32xf32>
    %cst_46 = arith.constant dense<0.000000e+00> : vector<16xf32>
    %123 = vector.multi_reduction <add>, %118, %cst_46 [1] : vector<16x32xf32> to vector<16xf32>
    %124 = vector.shape_cast %123 : vector<16xf32> to vector<16x1xf32>
    %cst_47 = arith.constant 3.200000e+01 : f32
    %125 = vector.broadcast %cst_47 : f32 to vector<16x1xf32>
    %126 = arith.divf %124, %125 : vector<16x1xf32>
    %127 = vector.broadcast %126 : vector<16x1xf32> to vector<16x32xf32>
    %128 = arith.subf %118, %127 : vector<16x32xf32>
    %129 = arith.mulf %128, %128 : vector<16x32xf32>
    %cst_48 = arith.constant dense<0.000000e+00> : vector<16xf32>
    %130 = vector.multi_reduction <add>, %129, %cst_48 [1] : vector<16x32xf32> to vector<16xf32>
    %131 = vector.shape_cast %130 : vector<16xf32> to vector<16x1xf32>
    %cst_49 = arith.constant 3.200000e+01 : f32
    %132 = vector.broadcast %cst_49 : f32 to vector<16x1xf32>
    %133 = arith.divf %131, %132 : vector<16x1xf32>
    %cst_50 = arith.constant 9.99999974E-6 : f32
    %134 = vector.broadcast %cst_50 : f32 to vector<16x1xf32>
    %135 = arith.addf %133, %134 : vector<16x1xf32>
    %136 = math.rsqrt %135 : vector<16x1xf32>
    %137 = vector.broadcast %136 : vector<16x1xf32> to vector<16x32xf32>
    %138 = arith.mulf %128, %137 : vector<16x32xf32>
    %139 = vector.broadcast %120 : vector<1x32xf32> to vector<16x32xf32>
    %140 = arith.mulf %138, %139 : vector<16x32xf32>
    %141 = vector.broadcast %122 : vector<1x32xf32> to vector<16x32xf32>
    %142 = arith.addf %140, %141 : vector<16x32xf32>
    %c0_51 = arith.constant 0 : index
    %c0_52 = arith.constant 0 : index
    %c0_53 = arith.constant 0 : index
    %143 = vector.load %arg7[%c0_51, %c0_52, %c0_53] : memref<2x32x64xbf16, #tpu.memory_space<vmem>>, vector<1x32x64xbf16>
    %144 = vector.shape_cast %143 : vector<1x32x64xbf16> to vector<32x64xbf16>
    %145 = arith.truncf %142 : vector<16x32xf32> to vector<16x32xbf16>
    %cst_54 = arith.constant dense<0.000000e+00> : vector<16x64xf32>
    %146 = tpu.matmul %145, %144, %cst_54 {dimension_numbers = #tpu.dot_dimension_numbers<[1], [0], [0], [1], [0, 0, 1, 1], [], []>} : vector<16x32xbf16>, vector<32x64xbf16>, vector<16x64xf32> -> vector<16x64xf32>
    %c0_55 = arith.constant 0 : index
    %c0_56 = arith.constant 0 : index
    %c0_57 = arith.constant 0 : index
    %147 = vector.load %arg8[%c0_55, %c0_56, %c0_57] : memref<2x1x64xf32, #tpu.memory_space<vmem>>, vector<1x1x64xf32>
    %148 = vector.shape_cast %147 : vector<1x1x64xf32> to vector<1x64xf32>
    %149 = vector.broadcast %148 : vector<1x64xf32> to vector<16x64xf32>
    %150 = arith.addf %146, %149 : vector<16x64xf32>
    %cst_58 = arith.constant 0.000000e+00 : f32
    %151 = vector.broadcast %cst_58 : f32 to vector<16x64xf32>
    %152 = arith.maximumf %150, %151 : vector<16x64xf32>
    %c0_59 = arith.constant 0 : index
    %c0_60 = arith.constant 0 : index
    %c0_61 = arith.constant 0 : index
    %153 = vector.load %arg9[%c0_59, %c0_60, %c0_61] : memref<2x64x32xbf16, #tpu.memory_space<vmem>>, vector<1x64x32xbf16>
    %154 = vector.shape_cast %153 : vector<1x64x32xbf16> to vector<64x32xbf16>
    %155 = arith.truncf %152 : vector<16x64xf32> to vector<16x64xbf16>
    %cst_62 = arith.constant dense<0.000000e+00> : vector<16x32xf32>
    %156 = tpu.matmul %155, %154, %cst_62 {dimension_numbers = #tpu.dot_dimension_numbers<[1], [0], [0], [1], [0, 0, 1, 1], [], []>} : vector<16x64xbf16>, vector<64x32xbf16>, vector<16x32xf32> -> vector<16x32xf32>
    %c0_63 = arith.constant 0 : index
    %c0_64 = arith.constant 0 : index
    %c0_65 = arith.constant 0 : index
    %157 = vector.load %arg10[%c0_63, %c0_64, %c0_65] : memref<2x1x32xf32, #tpu.memory_space<vmem>>, vector<1x1x32xf32>
    %158 = vector.shape_cast %157 : vector<1x1x32xf32> to vector<1x32xf32>
    %159 = vector.broadcast %158 : vector<1x32xf32> to vector<16x32xf32>
    %160 = arith.addf %156, %159 : vector<16x32xf32>
    %161 = arith.addf %160, %142 : vector<16x32xf32>
    %c0_66 = arith.constant 0 : index
    %c0_67 = arith.constant 0 : index
    %c0_68 = arith.constant 0 : index
    %162 = vector.load %arg13[%c0_66, %c0_67, %c0_68] : memref<2x1x32xf32, #tpu.memory_space<vmem>>, vector<1x1x32xf32>
    %163 = vector.shape_cast %162 : vector<1x1x32xf32> to vector<1x32xf32>
    %c0_69 = arith.constant 0 : index
    %c0_70 = arith.constant 0 : index
    %c0_71 = arith.constant 0 : index
    %164 = vector.load %arg14[%c0_69, %c0_70, %c0_71] : memref<2x1x32xf32, #tpu.memory_space<vmem>>, vector<1x1x32xf32>
    %165 = vector.shape_cast %164 : vector<1x1x32xf32> to vector<1x32xf32>
    %cst_72 = arith.constant dense<0.000000e+00> : vector<16xf32>
    %166 = vector.multi_reduction <add>, %161, %cst_72 [1] : vector<16x32xf32> to vector<16xf32>
    %167 = vector.shape_cast %166 : vector<16xf32> to vector<16x1xf32>
    %cst_73 = arith.constant 3.200000e+01 : f32
    %168 = vector.broadcast %cst_73 : f32 to vector<16x1xf32>
    %169 = arith.divf %167, %168 : vector<16x1xf32>
    %170 = vector.broadcast %169 : vector<16x1xf32> to vector<16x32xf32>
    %171 = arith.subf %161, %170 : vector<16x32xf32>
    %172 = arith.mulf %171, %171 : vector<16x32xf32>
    %cst_74 = arith.constant dense<0.000000e+00> : vector<16xf32>
    %173 = vector.multi_reduction <add>, %172, %cst_74 [1] : vector<16x32xf32> to vector<16xf32>
    %174 = vector.shape_cast %173 : vector<16xf32> to vector<16x1xf32>
    %cst_75 = arith.constant 3.200000e+01 : f32
    %175 = vector.broadcast %cst_75 : f32 to vector<16x1xf32>
    %176 = arith.divf %174, %175 : vector<16x1xf32>
    %cst_76 = arith.constant 9.99999974E-6 : f32
    %177 = vector.broadcast %cst_76 : f32 to vector<16x1xf32>
    %178 = arith.addf %176, %177 : vector<16x1xf32>
    %179 = math.rsqrt %178 : vector<16x1xf32>
    %180 = vector.broadcast %179 : vector<16x1xf32> to vector<16x32xf32>
    %181 = arith.mulf %171, %180 : vector<16x32xf32>
    %182 = vector.broadcast %163 : vector<1x32xf32> to vector<16x32xf32>
    %183 = arith.mulf %181, %182 : vector<16x32xf32>
    %184 = vector.broadcast %165 : vector<1x32xf32> to vector<16x32xf32>
    %185 = arith.addf %183, %184 : vector<16x32xf32>
    %c1 = arith.constant 1 : index
    %c0_77 = arith.constant 0 : index
    %c0_78 = arith.constant 0 : index
    %186 = vector.load %arg3[%c1, %c0_77, %c0_78] : memref<2x32x96xbf16, #tpu.memory_space<vmem>>, vector<1x32x96xbf16>
    %187 = vector.shape_cast %186 : vector<1x32x96xbf16> to vector<32x96xbf16>
    %188 = arith.truncf %185 : vector<16x32xf32> to vector<16x32xbf16>
    %cst_79 = arith.constant dense<0.000000e+00> : vector<16x96xf32>
    %189 = tpu.matmul %188, %187, %cst_79 {dimension_numbers = #tpu.dot_dimension_numbers<[1], [0], [0], [1], [0, 0, 1, 1], [], []>} : vector<16x32xbf16>, vector<32x96xbf16>, vector<16x96xf32> -> vector<16x96xf32>
    %c1_80 = arith.constant 1 : index
    %c0_81 = arith.constant 0 : index
    %c0_82 = arith.constant 0 : index
    %190 = vector.load %arg4[%c1_80, %c0_81, %c0_82] : memref<2x1x96xf32, #tpu.memory_space<vmem>>, vector<1x1x96xf32>
    %191 = vector.shape_cast %190 : vector<1x1x96xf32> to vector<1x96xf32>
    %192 = vector.broadcast %191 : vector<1x96xf32> to vector<16x96xf32>
    %193 = arith.addf %189, %192 : vector<16x96xf32>
    %194 = arith.truncf %193 : vector<16x96xf32> to vector<16x96xbf16>
    %195 = vector.extract_strided_slice %194 {offsets = [0, 0], sizes = [16, 8], strides = [1, 1]} : vector<16x96xbf16> to vector<16x8xbf16>
    %196 = vector.shape_cast %195 : vector<16x8xbf16> to vector<2x8x8xbf16>
    %197 = vector.extract_strided_slice %194 {offsets = [0, 32], sizes = [16, 8], strides = [1, 1]} : vector<16x96xbf16> to vector<16x8xbf16>
    %198 = vector.shape_cast %197 : vector<16x8xbf16> to vector<2x8x8xbf16>
    %199 = vector.extract_strided_slice %194 {offsets = [0, 64], sizes = [16, 8], strides = [1, 1]} : vector<16x96xbf16> to vector<16x8xbf16>
    %200 = vector.shape_cast %199 : vector<16x8xbf16> to vector<2x8x8xbf16>
    "tpu.trace_start"() <{level = 10 : i32, message = "bqd,bkd->bqk"}> : () -> ()
    %cst_83 = arith.constant dense<0.000000e+00> : vector<2x8x8xf32>
    %201 = tpu.matmul %196, %198, %cst_83 {dimension_numbers = #tpu.dot_dimension_numbers<[2], [2], [1], [1], [0, 0, 0, 1, 1, 1], [0], [0]>} : vector<2x8x8xbf16>, vector<2x8x8xbf16>, vector<2x8x8xf32> -> vector<2x8x8xf32>
    "tpu.trace_stop"() : () -> ()
    %cst_84 = arith.constant 0.353553385 : f32
    %202 = vector.broadcast %cst_84 : f32 to vector<2x8x8xf32>
    %203 = arith.mulf %201, %202 : vector<2x8x8xf32>
    %204 = vector.broadcast %5 : vector<2x1x8xf32> to vector<2x8x8xf32>
    %205 = arith.addf %203, %204 : vector<2x8x8xf32>
    %cst_85 = arith.constant dense<0xFF800000> : vector<2x8xf32>
    %206 = vector.multi_reduction <maximumf>, %205, %cst_85 [2] : vector<2x8x8xf32> to vector<2x8xf32>
    %207 = vector.shape_cast %206 : vector<2x8xf32> to vector<2x8x1xf32>
    %208 = vector.broadcast %207 : vector<2x8x1xf32> to vector<2x8x8xf32>
    %209 = arith.subf %205, %208 : vector<2x8x8xf32>
    %210 = math.exp %209 : vector<2x8x8xf32>
    %cst_86 = arith.constant dense<0.000000e+00> : vector<2x8xf32>
    %211 = vector.multi_reduction <add>, %210, %cst_86 [2] : vector<2x8x8xf32> to vector<2x8xf32>
    %212 = vector.shape_cast %211 : vector<2x8xf32> to vector<2x8x1xf32>
    %213 = tpu.reciprocal %212 {approx = true} : vector<2x8x1xf32> -> vector<2x8x1xf32>
    %214 = arith.truncf %210 : vector<2x8x8xf32> to vector<2x8x8xbf16>
    "tpu.trace_start"() <{level = 10 : i32, message = "bqk,bkd->bqd"}> : () -> ()
    %cst_87 = arith.constant dense<0.000000e+00> : vector<2x8x8xf32>
    %215 = tpu.matmul %214, %200, %cst_87 {dimension_numbers = #tpu.dot_dimension_numbers<[2], [1], [1], [2], [0, 0, 0, 1, 1, 2], [0], [0]>} : vector<2x8x8xbf16>, vector<2x8x8xbf16>, vector<2x8x8xf32> -> vector<2x8x8xf32>
    "tpu.trace_stop"() : () -> ()
    %216 = vector.broadcast %213 : vector<2x8x1xf32> to vector<2x8x8xf32>
    %217 = arith.mulf %215, %216 : vector<2x8x8xf32>
    %218 = vector.extract_strided_slice %194 {offsets = [0, 8], sizes = [16, 8], strides = [1, 1]} : vector<16x96xbf16> to vector<16x8xbf16>
    %219 = vector.shape_cast %218 : vector<16x8xbf16> to vector<2x8x8xbf16>
    %220 = vector.extract_strided_slice %194 {offsets = [0, 40], sizes = [16, 8], strides = [1, 1]} : vector<16x96xbf16> to vector<16x8xbf16>
    %221 = vector.shape_cast %220 : vector<16x8xbf16> to vector<2x8x8xbf16>
    %222 = vector.extract_strided_slice %194 {offsets = [0, 72], sizes = [16, 8], strides = [1, 1]} : vector<16x96xbf16> to vector<16x8xbf16>
    %223 = vector.shape_cast %222 : vector<16x8xbf16> to vector<2x8x8xbf16>
    "tpu.trace_start"() <{level = 10 : i32, message = "bqd,bkd->bqk"}> : () -> ()
    %cst_88 = arith.constant dense<0.000000e+00> : vector<2x8x8xf32>
    %224 = tpu.matmul %219, %221, %cst_88 {dimension_numbers = #tpu.dot_dimension_numbers<[2], [2], [1], [1], [0, 0, 0, 1, 1, 1], [0], [0]>} : vector<2x8x8xbf16>, vector<2x8x8xbf16>, vector<2x8x8xf32> -> vector<2x8x8xf32>
    "tpu.trace_stop"() : () -> ()
    %cst_89 = arith.constant 0.353553385 : f32
    %225 = vector.broadcast %cst_89 : f32 to vector<2x8x8xf32>
    %226 = arith.mulf %224, %225 : vector<2x8x8xf32>
    %227 = vector.broadcast %5 : vector<2x1x8xf32> to vector<2x8x8xf32>
    %228 = arith.addf %226, %227 : vector<2x8x8xf32>
    %cst_90 = arith.constant dense<0xFF800000> : vector<2x8xf32>
    %229 = vector.multi_reduction <maximumf>, %228, %cst_90 [2] : vector<2x8x8xf32> to vector<2x8xf32>
    %230 = vector.shape_cast %229 : vector<2x8xf32> to vector<2x8x1xf32>
    %231 = vector.broadcast %230 : vector<2x8x1xf32> to vector<2x8x8xf32>
    %232 = arith.subf %228, %231 : vector<2x8x8xf32>
    %233 = math.exp %232 : vector<2x8x8xf32>
    %cst_91 = arith.constant dense<0.000000e+00> : vector<2x8xf32>
    %234 = vector.multi_reduction <add>, %233, %cst_91 [2] : vector<2x8x8xf32> to vector<2x8xf32>
    %235 = vector.shape_cast %234 : vector<2x8xf32> to vector<2x8x1xf32>
    %236 = tpu.reciprocal %235 {approx = true} : vector<2x8x1xf32> -> vector<2x8x1xf32>
    %237 = arith.truncf %233 : vector<2x8x8xf32> to vector<2x8x8xbf16>
    "tpu.trace_start"() <{level = 10 : i32, message = "bqk,bkd->bqd"}> : () -> ()
    %cst_92 = arith.constant dense<0.000000e+00> : vector<2x8x8xf32>
    %238 = tpu.matmul %237, %223, %cst_92 {dimension_numbers = #tpu.dot_dimension_numbers<[2], [1], [1], [2], [0, 0, 0, 1, 1, 2], [0], [0]>} : vector<2x8x8xbf16>, vector<2x8x8xbf16>, vector<2x8x8xf32> -> vector<2x8x8xf32>
    "tpu.trace_stop"() : () -> ()
    %239 = vector.broadcast %236 : vector<2x8x1xf32> to vector<2x8x8xf32>
    %240 = arith.mulf %238, %239 : vector<2x8x8xf32>
    %241 = vector.extract_strided_slice %194 {offsets = [0, 16], sizes = [16, 8], strides = [1, 1]} : vector<16x96xbf16> to vector<16x8xbf16>
    %242 = vector.shape_cast %241 : vector<16x8xbf16> to vector<2x8x8xbf16>
    %243 = vector.extract_strided_slice %194 {offsets = [0, 48], sizes = [16, 8], strides = [1, 1]} : vector<16x96xbf16> to vector<16x8xbf16>
    %244 = vector.shape_cast %243 : vector<16x8xbf16> to vector<2x8x8xbf16>
    %245 = vector.extract_strided_slice %194 {offsets = [0, 80], sizes = [16, 8], strides = [1, 1]} : vector<16x96xbf16> to vector<16x8xbf16>
    %246 = vector.shape_cast %245 : vector<16x8xbf16> to vector<2x8x8xbf16>
    "tpu.trace_start"() <{level = 10 : i32, message = "bqd,bkd->bqk"}> : () -> ()
    %cst_93 = arith.constant dense<0.000000e+00> : vector<2x8x8xf32>
    %247 = tpu.matmul %242, %244, %cst_93 {dimension_numbers = #tpu.dot_dimension_numbers<[2], [2], [1], [1], [0, 0, 0, 1, 1, 1], [0], [0]>} : vector<2x8x8xbf16>, vector<2x8x8xbf16>, vector<2x8x8xf32> -> vector<2x8x8xf32>
    "tpu.trace_stop"() : () -> ()
    %cst_94 = arith.constant 0.353553385 : f32
    %248 = vector.broadcast %cst_94 : f32 to vector<2x8x8xf32>
    %249 = arith.mulf %247, %248 : vector<2x8x8xf32>
    %250 = vector.broadcast %5 : vector<2x1x8xf32> to vector<2x8x8xf32>
    %251 = arith.addf %249, %250 : vector<2x8x8xf32>
    %cst_95 = arith.constant dense<0xFF800000> : vector<2x8xf32>
    %252 = vector.multi_reduction <maximumf>, %251, %cst_95 [2] : vector<2x8x8xf32> to vector<2x8xf32>
    %253 = vector.shape_cast %252 : vector<2x8xf32> to vector<2x8x1xf32>
    %254 = vector.broadcast %253 : vector<2x8x1xf32> to vector<2x8x8xf32>
    %255 = arith.subf %251, %254 : vector<2x8x8xf32>
    %256 = math.exp %255 : vector<2x8x8xf32>
    %cst_96 = arith.constant dense<0.000000e+00> : vector<2x8xf32>
    %257 = vector.multi_reduction <add>, %256, %cst_96 [2] : vector<2x8x8xf32> to vector<2x8xf32>
    %258 = vector.shape_cast %257 : vector<2x8xf32> to vector<2x8x1xf32>
    %259 = tpu.reciprocal %258 {approx = true} : vector<2x8x1xf32> -> vector<2x8x1xf32>
    %260 = arith.truncf %256 : vector<2x8x8xf32> to vector<2x8x8xbf16>
    "tpu.trace_start"() <{level = 10 : i32, message = "bqk,bkd->bqd"}> : () -> ()
    %cst_97 = arith.constant dense<0.000000e+00> : vector<2x8x8xf32>
    %261 = tpu.matmul %260, %246, %cst_97 {dimension_numbers = #tpu.dot_dimension_numbers<[2], [1], [1], [2], [0, 0, 0, 1, 1, 2], [0], [0]>} : vector<2x8x8xbf16>, vector<2x8x8xbf16>, vector<2x8x8xf32> -> vector<2x8x8xf32>
    "tpu.trace_stop"() : () -> ()
    %262 = vector.broadcast %259 : vector<2x8x1xf32> to vector<2x8x8xf32>
    %263 = arith.mulf %261, %262 : vector<2x8x8xf32>
    %264 = vector.extract_strided_slice %194 {offsets = [0, 24], sizes = [16, 8], strides = [1, 1]} : vector<16x96xbf16> to vector<16x8xbf16>
    %265 = vector.shape_cast %264 : vector<16x8xbf16> to vector<2x8x8xbf16>
    %266 = vector.extract_strided_slice %194 {offsets = [0, 56], sizes = [16, 8], strides = [1, 1]} : vector<16x96xbf16> to vector<16x8xbf16>
    %267 = vector.shape_cast %266 : vector<16x8xbf16> to vector<2x8x8xbf16>
    %268 = vector.extract_strided_slice %194 {offsets = [0, 88], sizes = [16, 8], strides = [1, 1]} : vector<16x96xbf16> to vector<16x8xbf16>
    %269 = vector.shape_cast %268 : vector<16x8xbf16> to vector<2x8x8xbf16>
    "tpu.trace_start"() <{level = 10 : i32, message = "bqd,bkd->bqk"}> : () -> ()
    %cst_98 = arith.constant dense<0.000000e+00> : vector<2x8x8xf32>
    %270 = tpu.matmul %265, %267, %cst_98 {dimension_numbers = #tpu.dot_dimension_numbers<[2], [2], [1], [1], [0, 0, 0, 1, 1, 1], [0], [0]>} : vector<2x8x8xbf16>, vector<2x8x8xbf16>, vector<2x8x8xf32> -> vector<2x8x8xf32>
    "tpu.trace_stop"() : () -> ()
    %cst_99 = arith.constant 0.353553385 : f32
    %271 = vector.broadcast %cst_99 : f32 to vector<2x8x8xf32>
    %272 = arith.mulf %270, %271 : vector<2x8x8xf32>
    %273 = vector.broadcast %5 : vector<2x1x8xf32> to vector<2x8x8xf32>
    %274 = arith.addf %272, %273 : vector<2x8x8xf32>
    %cst_100 = arith.constant dense<0xFF800000> : vector<2x8xf32>
    %275 = vector.multi_reduction <maximumf>, %274, %cst_100 [2] : vector<2x8x8xf32> to vector<2x8xf32>
    %276 = vector.shape_cast %275 : vector<2x8xf32> to vector<2x8x1xf32>
    %277 = vector.broadcast %276 : vector<2x8x1xf32> to vector<2x8x8xf32>
    %278 = arith.subf %274, %277 : vector<2x8x8xf32>
    %279 = math.exp %278 : vector<2x8x8xf32>
    %cst_101 = arith.constant dense<0.000000e+00> : vector<2x8xf32>
    %280 = vector.multi_reduction <add>, %279, %cst_101 [2] : vector<2x8x8xf32> to vector<2x8xf32>
    %281 = vector.shape_cast %280 : vector<2x8xf32> to vector<2x8x1xf32>
    %282 = tpu.reciprocal %281 {approx = true} : vector<2x8x1xf32> -> vector<2x8x1xf32>
    %283 = arith.truncf %279 : vector<2x8x8xf32> to vector<2x8x8xbf16>
    "tpu.trace_start"() <{level = 10 : i32, message = "bqk,bkd->bqd"}> : () -> ()
    %cst_102 = arith.constant dense<0.000000e+00> : vector<2x8x8xf32>
    %284 = tpu.matmul %283, %269, %cst_102 {dimension_numbers = #tpu.dot_dimension_numbers<[2], [1], [1], [2], [0, 0, 0, 1, 1, 2], [0], [0]>} : vector<2x8x8xbf16>, vector<2x8x8xbf16>, vector<2x8x8xf32> -> vector<2x8x8xf32>
    "tpu.trace_stop"() : () -> ()
    %285 = vector.broadcast %282 : vector<2x8x1xf32> to vector<2x8x8xf32>
    %286 = arith.mulf %284, %285 : vector<2x8x8xf32>
    %287 = tpu.concatenate %217, %240, %263, %286 in 2 : vector<2x8x8xf32>, vector<2x8x8xf32>, vector<2x8x8xf32>, vector<2x8x8xf32> -> vector<2x8x32xf32>
    %288 = vector.shape_cast %287 : vector<2x8x32xf32> to vector<16x32xf32>
    %c1_103 = arith.constant 1 : index
    %c0_104 = arith.constant 0 : index
    %c0_105 = arith.constant 0 : index
    %289 = vector.load %arg5[%c1_103, %c0_104, %c0_105] : memref<2x32x32xbf16, #tpu.memory_space<vmem>>, vector<1x32x32xbf16>
    %290 = vector.shape_cast %289 : vector<1x32x32xbf16> to vector<32x32xbf16>
    %291 = arith.truncf %288 : vector<16x32xf32> to vector<16x32xbf16>
    %cst_106 = arith.constant dense<0.000000e+00> : vector<16x32xf32>
    %292 = tpu.matmul %291, %290, %cst_106 {dimension_numbers = #tpu.dot_dimension_numbers<[1], [0], [0], [1], [0, 0, 1, 1], [], []>} : vector<16x32xbf16>, vector<32x32xbf16>, vector<16x32xf32> -> vector<16x32xf32>
    %c1_107 = arith.constant 1 : index
    %c0_108 = arith.constant 0 : index
    %c0_109 = arith.constant 0 : index
    %293 = vector.load %arg6[%c1_107, %c0_108, %c0_109] : memref<2x1x32xf32, #tpu.memory_space<vmem>>, vector<1x1x32xf32>
    %294 = vector.shape_cast %293 : vector<1x1x32xf32> to vector<1x32xf32>
    %295 = vector.broadcast %294 : vector<1x32xf32> to vector<16x32xf32>
    %296 = arith.addf %292, %295 : vector<16x32xf32>
    %297 = arith.addf %296, %185 : vector<16x32xf32>
    %c1_110 = arith.constant 1 : index
    %c0_111 = arith.constant 0 : index
    %c0_112 = arith.constant 0 : index
    %298 = vector.load %arg11[%c1_110, %c0_111, %c0_112] : memref<2x1x32xf32, #tpu.memory_space<vmem>>, vector<1x1x32xf32>
    %299 = vector.shape_cast %298 : vector<1x1x32xf32> to vector<1x32xf32>
    %c1_113 = arith.constant 1 : index
    %c0_114 = arith.constant 0 : index
    %c0_115 = arith.constant 0 : index
    %300 = vector.load %arg12[%c1_113, %c0_114, %c0_115] : memref<2x1x32xf32, #tpu.memory_space<vmem>>, vector<1x1x32xf32>
    %301 = vector.shape_cast %300 : vector<1x1x32xf32> to vector<1x32xf32>
    %cst_116 = arith.constant dense<0.000000e+00> : vector<16xf32>
    %302 = vector.multi_reduction <add>, %297, %cst_116 [1] : vector<16x32xf32> to vector<16xf32>
    %303 = vector.shape_cast %302 : vector<16xf32> to vector<16x1xf32>
    %cst_117 = arith.constant 3.200000e+01 : f32
    %304 = vector.broadcast %cst_117 : f32 to vector<16x1xf32>
    %305 = arith.divf %303, %304 : vector<16x1xf32>
    %306 = vector.broadcast %305 : vector<16x1xf32> to vector<16x32xf32>
    %307 = arith.subf %297, %306 : vector<16x32xf32>
    %308 = arith.mulf %307, %307 : vector<16x32xf32>
    %cst_118 = arith.constant dense<0.000000e+00> : vector<16xf32>
    %309 = vector.multi_reduction <add>, %308, %cst_118 [1] : vector<16x32xf32> to vector<16xf32>
    %310 = vector.shape_cast %309 : vector<16xf32> to vector<16x1xf32>
    %cst_119 = arith.constant 3.200000e+01 : f32
    %311 = vector.broadcast %cst_119 : f32 to vector<16x1xf32>
    %312 = arith.divf %310, %311 : vector<16x1xf32>
    %cst_120 = arith.constant 9.99999974E-6 : f32
    %313 = vector.broadcast %cst_120 : f32 to vector<16x1xf32>
    %314 = arith.addf %312, %313 : vector<16x1xf32>
    %315 = math.rsqrt %314 : vector<16x1xf32>
    %316 = vector.broadcast %315 : vector<16x1xf32> to vector<16x32xf32>
    %317 = arith.mulf %307, %316 : vector<16x32xf32>
    %318 = vector.broadcast %299 : vector<1x32xf32> to vector<16x32xf32>
    %319 = arith.mulf %317, %318 : vector<16x32xf32>
    %320 = vector.broadcast %301 : vector<1x32xf32> to vector<16x32xf32>
    %321 = arith.addf %319, %320 : vector<16x32xf32>
    %c1_121 = arith.constant 1 : index
    %c0_122 = arith.constant 0 : index
    %c0_123 = arith.constant 0 : index
    %322 = vector.load %arg7[%c1_121, %c0_122, %c0_123] : memref<2x32x64xbf16, #tpu.memory_space<vmem>>, vector<1x32x64xbf16>
    %323 = vector.shape_cast %322 : vector<1x32x64xbf16> to vector<32x64xbf16>
    %324 = arith.truncf %321 : vector<16x32xf32> to vector<16x32xbf16>
    %cst_124 = arith.constant dense<0.000000e+00> : vector<16x64xf32>
    %325 = tpu.matmul %324, %323, %cst_124 {dimension_numbers = #tpu.dot_dimension_numbers<[1], [0], [0], [1], [0, 0, 1, 1], [], []>} : vector<16x32xbf16>, vector<32x64xbf16>, vector<16x64xf32> -> vector<16x64xf32>
    %c1_125 = arith.constant 1 : index
    %c0_126 = arith.constant 0 : index
    %c0_127 = arith.constant 0 : index
    %326 = vector.load %arg8[%c1_125, %c0_126, %c0_127] : memref<2x1x64xf32, #tpu.memory_space<vmem>>, vector<1x1x64xf32>
    %327 = vector.shape_cast %326 : vector<1x1x64xf32> to vector<1x64xf32>
    %328 = vector.broadcast %327 : vector<1x64xf32> to vector<16x64xf32>
    %329 = arith.addf %325, %328 : vector<16x64xf32>
    %cst_128 = arith.constant 0.000000e+00 : f32
    %330 = vector.broadcast %cst_128 : f32 to vector<16x64xf32>
    %331 = arith.maximumf %329, %330 : vector<16x64xf32>
    %c1_129 = arith.constant 1 : index
    %c0_130 = arith.constant 0 : index
    %c0_131 = arith.constant 0 : index
    %332 = vector.load %arg9[%c1_129, %c0_130, %c0_131] : memref<2x64x32xbf16, #tpu.memory_space<vmem>>, vector<1x64x32xbf16>
    %333 = vector.shape_cast %332 : vector<1x64x32xbf16> to vector<64x32xbf16>
    %334 = arith.truncf %331 : vector<16x64xf32> to vector<16x64xbf16>
    %cst_132 = arith.constant dense<0.000000e+00> : vector<16x32xf32>
    %335 = tpu.matmul %334, %333, %cst_132 {dimension_numbers = #tpu.dot_dimension_numbers<[1], [0], [0], [1], [0, 0, 1, 1], [], []>} : vector<16x64xbf16>, vector<64x32xbf16>, vector<16x32xf32> -> vector<16x32xf32>
    %c1_133 = arith.constant 1 : index
    %c0_134 = arith.constant 0 : index
    %c0_135 = arith.constant 0 : index
    %336 = vector.load %arg10[%c1_133, %c0_134, %c0_135] : memref<2x1x32xf32, #tpu.memory_space<vmem>>, vector<1x1x32xf32>
    %337 = vector.shape_cast %336 : vector<1x1x32xf32> to vector<1x32xf32>
    %338 = vector.broadcast %337 : vector<1x32xf32> to vector<16x32xf32>
    %339 = arith.addf %335, %338 : vector<16x32xf32>
    %340 = arith.addf %339, %321 : vector<16x32xf32>
    %c1_136 = arith.constant 1 : index
    %c0_137 = arith.constant 0 : index
    %c0_138 = arith.constant 0 : index
    %341 = vector.load %arg13[%c1_136, %c0_137, %c0_138] : memref<2x1x32xf32, #tpu.memory_space<vmem>>, vector<1x1x32xf32>
    %342 = vector.shape_cast %341 : vector<1x1x32xf32> to vector<1x32xf32>
    %c1_139 = arith.constant 1 : index
    %c0_140 = arith.constant 0 : index
    %c0_141 = arith.constant 0 : index
    %343 = vector.load %arg14[%c1_139, %c0_140, %c0_141] : memref<2x1x32xf32, #tpu.memory_space<vmem>>, vector<1x1x32xf32>
    %344 = vector.shape_cast %343 : vector<1x1x32xf32> to vector<1x32xf32>
    %cst_142 = arith.constant dense<0.000000e+00> : vector<16xf32>
    %345 = vector.multi_reduction <add>, %340, %cst_142 [1] : vector<16x32xf32> to vector<16xf32>
    %346 = vector.shape_cast %345 : vector<16xf32> to vector<16x1xf32>
    %cst_143 = arith.constant 3.200000e+01 : f32
    %347 = vector.broadcast %cst_143 : f32 to vector<16x1xf32>
    %348 = arith.divf %346, %347 : vector<16x1xf32>
    %349 = vector.broadcast %348 : vector<16x1xf32> to vector<16x32xf32>
    %350 = arith.subf %340, %349 : vector<16x32xf32>
    %351 = arith.mulf %350, %350 : vector<16x32xf32>
    %cst_144 = arith.constant dense<0.000000e+00> : vector<16xf32>
    %352 = vector.multi_reduction <add>, %351, %cst_144 [1] : vector<16x32xf32> to vector<16xf32>
    %353 = vector.shape_cast %352 : vector<16xf32> to vector<16x1xf32>
    %cst_145 = arith.constant 3.200000e+01 : f32
    %354 = vector.broadcast %cst_145 : f32 to vector<16x1xf32>
    %355 = arith.divf %353, %354 : vector<16x1xf32>
    %cst_146 = arith.constant 9.99999974E-6 : f32
    %356 = vector.broadcast %cst_146 : f32 to vector<16x1xf32>
    %357 = arith.addf %355, %356 : vector<16x1xf32>
    %358 = math.rsqrt %357 : vector<16x1xf32>
    %359 = vector.broadcast %358 : vector<16x1xf32> to vector<16x32xf32>
    %360 = arith.mulf %350, %359 : vector<16x32xf32>
    %361 = vector.broadcast %342 : vector<1x32xf32> to vector<16x32xf32>
    %362 = arith.mulf %360, %361 : vector<16x32xf32>
    %363 = vector.broadcast %344 : vector<1x32xf32> to vector<16x32xf32>
    %364 = arith.addf %362, %363 : vector<16x32xf32>
    %365 = vector.shape_cast %364 : vector<16x32xf32> to vector<2x8x32xf32>
    "tpu.trace_start"() <{level = 10 : i32, message = "bks,bsd->bkd"}> : () -> ()
    %cst_147 = arith.constant dense<0.000000e+00> : vector<2x1x32xf32>
    %366 = tpu.matmul %1, %365, %cst_147 {dimension_numbers = #tpu.dot_dimension_numbers<[2], [1], [1], [2], [0, 0, 0, 1, 1, 2], [0], [0]>} : vector<2x1x8xf32>, vector<2x8x32xf32>, vector<2x1x32xf32> -> vector<2x1x32xf32>
    "tpu.trace_stop"() : () -> ()
    %367 = vector.shape_cast %366 : vector<2x1x32xf32> to vector<2x32xf32>
    %cst_148 = arith.constant dense<0.000000e+00> : vector<2x1xf32>
    %368 = vector.multi_reduction <add>, %1, %cst_148 [2] : vector<2x1x8xf32> to vector<2x1xf32>
    %cst_149 = arith.constant 1.000000e+00 : f32
    %369 = vector.broadcast %cst_149 : f32 to vector<2x1xf32>
    %370 = arith.maximumf %368, %369 : vector<2x1xf32>
    %371 = vector.broadcast %370 : vector<2x1xf32> to vector<2x32xf32>
    %372 = arith.divf %367, %371 : vector<2x32xf32>
    %c0_150 = arith.constant 0 : index
    %c0_151 = arith.constant 0 : index
    %373 = vector.load %arg15[%c0_150, %c0_151] : memref<2x32xf32, #tpu.memory_space<vmem>>, vector<2x32xf32>
    tpu.vector_store %arg15[%c0_150, %c0_151], %372 {strides = array<i32>} : memref<2x32xf32, #tpu.memory_space<vmem>>, vector<2x32xf32>,
    return
  }
  func.func @transform_0(%arg0: i32) -> (i32, i32, i32) {
    %c0_i32 = arith.constant 0 : i32
    %c0_i32_0 = arith.constant 0 : i32
    %c0_i32_1 = arith.constant 0 : i32
    return %arg0, %c0_i32, %c0_i32_0 : i32, i32, i32
  }
  func.func @transform_1(%arg0: i32) -> (i32, i32, i32) {
    %c0_i32 = arith.constant 0 : i32
    %c0_i32_0 = arith.constant 0 : i32
    %c0_i32_1 = arith.constant 0 : i32
    return %arg0, %c0_i32, %c0_i32_0 : i32, i32, i32
  }
  func.func @transform_2(%arg0: i32) -> (i32, i32, i32) {
    %c0_i32 = arith.constant 0 : i32
    %c0_i32_0 = arith.constant 0 : i32
    %c0_i32_1 = arith.constant 0 : i32
    %c0_i32_2 = arith.constant 0 : i32
    return %c0_i32, %c0_i32_0, %c0_i32_1 : i32, i32, i32
  }
  func.func @transform_3(%arg0: i32) -> (i32, i32, i32) {
    %c0_i32 = arith.constant 0 : i32
    %c0_i32_0 = arith.constant 0 : i32
    %c0_i32_1 = arith.constant 0 : i32
    %c0_i32_2 = arith.constant 0 : i32
    return %c0_i32, %c0_i32_0, %c0_i32_1 : i32, i32, i32
  }
  func.func @transform_4(%arg0: i32) -> (i32, i32, i32) {
    %c0_i32 = arith.constant 0 : i32
    %c0_i32_0 = arith.constant 0 : i32
    %c0_i32_1 = arith.constant 0 : i32
    %c0_i32_2 = arith.constant 0 : i32
    return %c0_i32, %c0_i32_0, %c0_i32_1 : i32, i32, i32
  }
  func.func @transform_5(%arg0: i32) -> (i32, i32, i32) {
    %c0_i32 = arith.constant 0 : i32
    %c0_i32_0 = arith.constant 0 : i32
    %c0_i32_1 = arith.constant 0 : i32
    %c0_i32_2 = arith.constant 0 : i32
    return %c0_i32, %c0_i32_0, %c0_i32_1 : i32, i32, i32
  }
  func.func @transform_6(%arg0: i32) -> (i32, i32, i32) {
    %c0_i32 = arith.constant 0 : i32
    %c0_i32_0 = arith.constant 0 : i32
    %c0_i32_1 = arith.constant 0 : i32
    %c0_i32_2 = arith.constant 0 : i32
    return %c0_i32, %c0_i32_0, %c0_i32_1 : i32, i32, i32
  }
  func.func @transform_7(%arg0: i32) -> (i32, i32, i32) {
    %c0_i32 = arith.constant 0 : i32
    %c0_i32_0 = arith.constant 0 : i32
    %c0_i32_1 = arith.constant 0 : i32
    %c0_i32_2 = arith.constant 0 : i32
    return %c0_i32, %c0_i32_0, %c0_i32_1 : i32, i32, i32
  }
  func.func @transform_8(%arg0: i32) -> (i32, i32, i32) {
    %c0_i32 = arith.constant 0 : i32
    %c0_i32_0 = arith.constant 0 : i32
    %c0_i32_1 = arith.constant 0 : i32
    %c0_i32_2 = arith.constant 0 : i32
    return %c0_i32, %c0_i32_0, %c0_i32_1 : i32, i32, i32
  }
  func.func @transform_9(%arg0: i32) -> (i32, i32, i32) {
    %c0_i32 = arith.constant 0 : i32
    %c0_i32_0 = arith.constant 0 : i32
    %c0_i32_1 = arith.constant 0 : i32
    %c0_i32_2 = arith.constant 0 : i32
    return %c0_i32, %c0_i32_0, %c0_i32_1 : i32, i32, i32
  }
  func.func @transform_10(%arg0: i32) -> (i32, i32, i32) {
    %c0_i32 = arith.constant 0 : i32
    %c0_i32_0 = arith.constant 0 : i32
    %c0_i32_1 = arith.constant 0 : i32
    %c0_i32_2 = arith.constant 0 : i32
    return %c0_i32, %c0_i32_0, %c0_i32_1 : i32, i32, i32
  }
  func.func @transform_11(%arg0: i32) -> (i32, i32, i32) {
    %c0_i32 = arith.constant 0 : i32
    %c0_i32_0 = arith.constant 0 : i32
    %c0_i32_1 = arith.constant 0 : i32
    %c0_i32_2 = arith.constant 0 : i32
    return %c0_i32, %c0_i32_0, %c0_i32_1 : i32, i32, i32
  }
  func.func @transform_12(%arg0: i32) -> (i32, i32, i32) {
    %c0_i32 = arith.constant 0 : i32
    %c0_i32_0 = arith.constant 0 : i32
    %c0_i32_1 = arith.constant 0 : i32
    %c0_i32_2 = arith.constant 0 : i32
    return %c0_i32, %c0_i32_0, %c0_i32_1 : i32, i32, i32
  }
  func.func @transform_13(%arg0: i32) -> (i32, i32, i32) {
    %c0_i32 = arith.constant 0 : i32
    %c0_i32_0 = arith.constant 0 : i32
    %c0_i32_1 = arith.constant 0 : i32
    %c0_i32_2 = arith.constant 0 : i32
    return %c0_i32, %c0_i32_0, %c0_i32_1 : i32, i32, i32
  }
  func.func @transform_14(%arg0: i32) -> (i32, i32) {
    %c0_i32 = arith.constant 0 : i32
    %c0_i32_0 = arith.constant 0 : i32
    return %arg0, %c0_i32 : i32, i32
  }
}

</mosaic_0001>

<llo_original>
// kernel: tpu_custom_call.1
$region0: #{tpu_custom_call.1}
  #allocation0 [shape = 'u32[]', space=smem, size = 0x4, offset = 0x4, fixed_abs, tag = 'smem constant byte address 0x4 - core index']
  #allocation1 [shape = 'u32[144,128]{1,0:T(1,128)}', space=vmem, size = 0x12000, scoped, tag = 'internal scratch']
  %s0 = inlined_call_operand.hbm [shape: f32[2,1,8], index: 0, kind: input, shape index: {}]
  %s1 = inlined_call_operand.hbm [shape: f32[2,8,32], index: 1, kind: input, shape index: {}]
  %s2 = inlined_call_operand.vmem [shape: bf16[2,32,96], index: 2, kind: input, shape index: {}]
  %s3 = inlined_call_operand.vmem [shape: f32[2,1,96], index: 3, kind: input, shape index: {}]
  %s4 = inlined_call_operand.vmem [shape: bf16[2,32,32], index: 4, kind: input, shape index: {}]
  %s5 = inlined_call_operand.vmem [shape: f32[2,1,32], index: 5, kind: input, shape index: {}]
  %s6 = inlined_call_operand.vmem [shape: bf16[2,32,64], index: 6, kind: input, shape index: {}]
  %s7 = inlined_call_operand.vmem [shape: f32[2,1,64], index: 7, kind: input, shape index: {}]
  %s8 = inlined_call_operand.vmem [shape: bf16[2,64,32], index: 8, kind: input, shape index: {}]
  %s9 = inlined_call_operand.vmem [shape: f32[2,1,32], index: 9, kind: input, shape index: {}]
  %s10 = inlined_call_operand.vmem [shape: f32[2,1,32], index: 10, kind: input, shape index: {}]
  %s11 = inlined_call_operand.vmem [shape: f32[2,1,32], index: 11, kind: input, shape index: {}]
  %s12 = inlined_call_operand.vmem [shape: f32[2,1,32], index: 12, kind: input, shape index: {}]
  %s13 = inlined_call_operand.vmem [shape: f32[2,1,32], index: 13, kind: input, shape index: {}]
  %s14 = inlined_call_operand.hbm [shape: f32[2,32], index: 14, kind: output, shape index: {}]
  %s15 = sld [smem:[#allocation0]]
  $region74: #{tpu_custom_call.1} parent=0
    _
  %s17 = ssub.s32 1, %s15
  %s18 = scalar_select 0, %s17, %s15
  $region1: #{tpu_custom_call.1} parent=0
    #allocation2 [shape = 'u8[1024]{0}', space=vmem, size = 0x400, scoped, tag = 'input window, operand 0, single buffered']
    #allocation3 [shape = 's32[1]{0}', space=sflag, size = 0x4, scoped, tag = 'scoped memory for tpu_custom_call.1']
    #allocation4 [shape = 's32[1]{0}', space=sflag, size = 0x4, scoped, tag = 'scoped memory for tpu_custom_call.1']
    #allocation5 [shape = 'u8[8192]{0}', space=vmem, size = 0x2000, scoped, tag = 'input window, operand 1, single buffered']
    #allocation6 [shape = 's32[1]{0}', space=sflag, size = 0x4, scoped, tag = 'scoped memory for tpu_custom_call.1']
    #allocation7 [shape = 'u8[1024]{0}', space=vmem, size = 0x400, scoped, tag = 'output window, operand 0, single buffered']
    %19 = vsyncpa [#allocation3], 0
    %20 = vsyncpa [#allocation6], 0
    %21 = vsyncpa [#allocation4], 0
    // Predicated region
    $region2: #{tpu_custom_call.1} parent=1 // pred_check
      _
    $region3: #{tpu_custom_call.1} parent=1 // pred_check_branch
      %23 = sbr.rel (0) target = $region5
    $region4: #{tpu_custom_call.1} parent=1 // pred_region
      %s25 = ssub.s32 32, 32
      %26 = vsyncadd [#allocation3], %s25
      %s27 = sshll.u32 [#allocation2], 4
      %s28 = int_to_ptr.vmem [resolvable:$true] %s27
      %33 = dma.hbm_to_vmem [thread:$0]  %s0, 32, %s28, [#allocation3], 16, 16, 1
    $region5: #{tpu_custom_call.1} parent=1 // pred_fallthru
      _
    // Predicated region
    $region6: #{tpu_custom_call.1} parent=1 // pred_check
      _
    $region7: #{tpu_custom_call.1} parent=1 // pred_check_branch
      %35 = sbr.rel (0) target = $region9
    $region8: #{tpu_custom_call.1} parent=1 // pred_region
      %s37 = ssub.s32 256, 256
      %38 = vsyncadd [#allocation6], %s37
      %s39 = sshll.u32 [#allocation5], 4
      %s40 = int_to_ptr.vmem [resolvable:$true] %s39
      %45 = dma.hbm_to_vmem [thread:$0]  %s1, 256, %s40, [#allocation6], 128, 128, 8
    $region9: #{tpu_custom_call.1} parent=1 // pred_fallthru
      _
    // Predicated region
    $region10: #{tpu_custom_call.1} parent=1 // pred_check
      _
    $region11: #{tpu_custom_call.1} parent=1 // pred_check_branch
      %47 = sbr.rel (0) target = $region13
    $region12: #{tpu_custom_call.1} parent=1 // pred_region
      _
    $region13: #{tpu_custom_call.1} parent=1 // pred_fallthru
      _
    // Predicated region
    $region14: #{tpu_custom_call.1} parent=1 // pred_check
      _
    $region15: #{tpu_custom_call.1} parent=1 // pred_check_branch
      %49 = sbr.rel (0) target = $region17
    $region16: #{tpu_custom_call.1} parent=1 // pred_region
      _
    $region17: #{tpu_custom_call.1} parent=1 // pred_fallthru
      _
    // Predicated region
    $region18: #{tpu_custom_call.1} parent=1 // pred_check
      _
    $region19: #{tpu_custom_call.1} parent=1 // pred_check_branch
      %51 = sbr.rel (0) target = $region21
    $region20: #{tpu_custom_call.1} parent=1 // pred_region
      _
    $region21: #{tpu_custom_call.1} parent=1 // pred_fallthru
      _
    // Predicated region
    $region22: #{tpu_custom_call.1} parent=1 // pred_check
      _
    $region23: #{tpu_custom_call.1} parent=1 // pred_check_branch
      %53 = sbr.rel (0) target = $region25
    $region24: #{tpu_custom_call.1} parent=1 // pred_region
      _
    $region25: #{tpu_custom_call.1} parent=1 // pred_fallthru
      _
    // Predicated region
    $region26: #{tpu_custom_call.1} parent=1 // pred_check
      _
    $region27: #{tpu_custom_call.1} parent=1 // pred_check_branch
      %55 = sbr.rel (0) target = $region29
    $region28: #{tpu_custom_call.1} parent=1 // pred_region
      _
    $region29: #{tpu_custom_call.1} parent=1 // pred_fallthru
      _
    // Predicated region
    $region30: #{tpu_custom_call.1} parent=1 // pred_check
      _
    $region31: #{tpu_custom_call.1} parent=1 // pred_check_branch
      %57 = sbr.rel (0) target = $region33
    $region32: #{tpu_custom_call.1} parent=1 // pred_region
      _
    $region33: #{tpu_custom_call.1} parent=1 // pred_fallthru
      _
    // Predicated region
    $region34: #{tpu_custom_call.1} parent=1 // pred_check
      _
    $region35: #{tpu_custom_call.1} parent=1 // pred_check_branch
      %59 = sbr.rel (0) target = $region37
    $region36: #{tpu_custom_call.1} parent=1 // pred_region
      _
    $region37: #{tpu_custom_call.1} parent=1 // pred_fallthru
      _
    // Predicated region
    $region38: #{tpu_custom_call.1} parent=1 // pred_check
      _
    $region39: #{tpu_custom_call.1} parent=1 // pred_check_branch
      %61 = sbr.rel (0) target = $region41
    $region40: #{tpu_custom_call.1} parent=1 // pred_region
      _
    $region41: #{tpu_custom_call.1} parent=1 // pred_fallthru
      _
    // Predicated region
    $region42: #{tpu_custom_call.1} parent=1 // pred_check
      _
    $region43: #{tpu_custom_call.1} parent=1 // pred_check_branch
      %63 = sbr.rel (0) target = $region45
    $region44: #{tpu_custom_call.1} parent=1 // pred_region
      _
    $region45: #{tpu_custom_call.1} parent=1 // pred_fallthru
      _
    // Predicated region
    $region46: #{tpu_custom_call.1} parent=1 // pred_check
      _
    $region47: #{tpu_custom_call.1} parent=1 // pred_check_branch
      %65 = sbr.rel (0) target = $region49
    $region48: #{tpu_custom_call.1} parent=1 // pred_region
      _
    $region49: #{tpu_custom_call.1} parent=1 // pred_fallthru
      _
    // Predicated region
    $region50: #{tpu_custom_call.1} parent=1 // pred_check
      _
    $region51: #{tpu_custom_call.1} parent=1 // pred_check_branch
      %67 = sbr.rel (0) target = $region53
    $region52: #{tpu_custom_call.1} parent=1 // pred_region
      _
    $region53: #{tpu_custom_call.1} parent=1 // pred_fallthru
      _
    // Predicated region
    $region54: #{tpu_custom_call.1} parent=1 // pred_check
      _
    $region55: #{tpu_custom_call.1} parent=1 // pred_check_branch
      %69 = sbr.rel (0) target = $region57
    $region56: #{tpu_custom_call.1} parent=1 // pred_region
      _
    $region57: #{tpu_custom_call.1} parent=1 // pred_fallthru
      _
    // Predicated region
    $region58: #{tpu_custom_call.1} parent=1 // pred_check
      _
    $region59: #{tpu_custom_call.1} parent=1 // pred_check_branch
      %71 = sbr.rel (0) target = $region61
    $region60: #{tpu_custom_call.1} parent=1 // pred_region
      %72 = dma.done [#allocation3], 32
    $region61: #{tpu_custom_call.1} parent=1 // pred_fallthru
      _
    // Predicated region
    $region62: #{tpu_custom_call.1} parent=1 // pred_check
      _
    $region63: #{tpu_custom_call.1} parent=1 // pred_check_branch
      %74 = sbr.rel (0) target = $region65
    $region64: #{tpu_custom_call.1} parent=1 // pred_region
      %75 = dma.done [#allocation6], 256
    $region65: #{tpu_custom_call.1} parent=1 // pred_fallthru
      _
    %v77 = vld [vmem:[#allocation5] sm:$0xff]
    %v78 = vld [vmem:[#allocation5 + $0x8] sm:$0xff]
    %v79 = vld [vmem:[#allocation2] sm:$0x1]
    %v80 = vld [vmem:[#allocation2 + $0x1] sm:$0x1]
    %v81 = vsub.f32 1.0, %v79
    %v82 = vsub.f32 1.0, %v80
    %v83 = vmul.f32 %v81, -1e+09
    %v84 = vmul.f32 %v82, -1e+09
    %v85 = vld [vmem:[%s2] sm:$0xf]
    %v86 = vld [vmem:[%s2 + $0x4] sm:$0xf]
    %v87 = vld [vmem:[%s2 + $0x8] sm:$0xf]
    %v88 = vld [vmem:[%s2 + $0xc] sm:$0xf]
    %v89 = vpack.c.bf16 %v78, %v77
    %v90 = vld [vmem:[%s3] sm:$0x1]
    %v92 = vlaneseq
    %v93 = vshrl.u32 %v92, 7
    %v94 = vsub.s32 0, %v93
    %v95 = vrot.slane %v90, %v94
    %v101 = vunpack.c.l.b16 %v85
    %v102 = vunpack.c.l.b16 %v86
    %v103 = vunpack.c.l.b16 %v87
    %v104 = vunpack.c.l.b16 %v88
    %v105 = vpack.c.b16 %v102, %v101
    %v106 = vpack.c.b16 %v104, %v103
    %vm109 = vcmask 261120
    %v111 = vsel %vm109, %v89, 0
    %113 = vmatprep.subr.bf16.mxu0 0
    %114 = vmatpush1.bf16.msra.mxu0 %v105
    %115 = vmatprep.subr.bf16.mxu0 0
    %116 = vmatpush1.bf16.msra.mxu0 %v106
    %117 = vmatprep.subr.bf16.mxu0 0
    %118 = vmatpush1.bf16.msra.mxu0 0
    %119 = vmatprep.subr.bf16.mxu0 0
    %120 = vmatpush1.bf16.msra.mxu0 0
    %121 = vmatprep.subr.bf16.mxu0 0
    %122 = vmatpush1.bf16.msra.mxu0 0
    %123 = vmatprep.subr.bf16.mxu0 0
    %124 = vmatpush1.bf16.msra.mxu0 0
    %125 = vmatprep.subr.bf16.mxu0 0
    %126 = vmatpush1.bf16.msra.mxu0 0
    %127 = vmatprep.subr.bf16.mxu0 0
    %128 = vmatpush1.bf16.msra.mxu0 0
    %129 = vmatprep.subr.bf16.mxu0 0
    %130 = vmatpush1.bf16.msra.mxu0 0
    %131 = vmatprep.subr.bf16.mxu0 0
    %132 = vmatpush1.bf16.msra.mxu0 0
    %133 = vmatprep.subr.bf16.mxu0 0
    %134 = vmatpush1.bf16.msra.mxu0 0
    %135 = vmatprep.subr.bf16.mxu0 0
    %136 = vmatpush1.bf16.msra.mxu0 0
    %137 = vmatprep.subr.bf16.mxu0 0
    %138 = vmatpush1.bf16.msra.mxu0 0
    %139 = vmatprep.subr.bf16.mxu0 0
    %140 = vmatpush1.bf16.msra.mxu0 0
    %141 = vmatprep.subr.bf16.mxu0 0
    %142 = vmatpush1.bf16.msra.mxu0 0
    %143 = vmatprep.subr.bf16.mxu0 0
    %144 = vmatpush1.bf16.msra.mxu0 0
    %145 = vmatprep.mubr.bf16.mxu0 0
    %146 = vmatmul.mubr.bf16.gmra.mrb[0].mxu0 %v111
    %v147 = vpop.f32.mrb[0].mxu0
    %v148 = vadd.f32 %v95, %v147
    %v149 = vpop.f32.mrb[0].mxu0
    %v150 = vpop.f32.mrb[0].mxu0
    %v151 = vadd.f32 %v95, %v150
    %v152 = vpop.f32.mrb[0].mxu0
    %153 = vdwg.mxu0
    %v154 = vpack.c.bf16 %v151, %v148
    %v156 = vunpack.c.l.b16 %v154
    %v157 = vunpack.c.h.b16 %v154
    %v158 = vpack.c.b16 %v156, %v156
    %v159 = vpack.c.b16 %v157, %v157
    %160 = vrot.lane.b32.xlu0 %v158, 96
    %v161 = vpop.permute.xlu0 %160
    %vm162 = vcmask 64512
    %v164 = vsel %vm162, %v158, 0
    %v167 = vsel %vm162, %v161, 0
    %169 = vmatprep.subr.bf16.mxu0 0
    %170 = vmatpush1.bf16.xpose.msra.mxu0 %v167
    %171 = vmatprep.subr.bf16.mxu0 0
    %172 = vmatpush1.bf16.xpose.msra.mxu0 0
    %173 = vmatprep.subr.bf16.mxu0 0
    %174 = vmatpush1.bf16.xpose.msra.mxu0 0
    %175 = vmatprep.subr.bf16.mxu0 0
    %176 = vmatpush1.bf16.xpose.msra.mxu0 0
    %177 = vmatprep.subr.bf16.mxu0 0
    %178 = vmatpush1.bf16.xpose.msra.mxu0 0
    %179 = vmatprep.subr.bf16.mxu0 0
    %180 = vmatpush1.bf16.xpose.msra.mxu0 0
    %181 = vmatprep.subr.bf16.mxu0 0
    %182 = vmatpush1.bf16.xpose.msra.mxu0 0
    %183 = vmatprep.subr.bf16.mxu0 0
    %184 = vmatpush1.bf16.xpose.msra.mxu0 0
    %185 = vmatprep.subr.bf16.mxu0 0
    %186 = vmatpush1.bf16.xpose.msra.mxu0 0
    %187 = vmatprep.subr.bf16.mxu0 0
    %188 = vmatpush1.bf16.xpose.msra.mxu0 0
    %189 = vmatprep.subr.bf16.mxu0 0
    %190 = vmatpush1.bf16.xpose.msra.mxu0 0
    %191 = vmatprep.subr.bf16.mxu0 0
    %192 = vmatpush1.bf16.xpose.msra.mxu0 0
    %193 = vmatprep.subr.bf16.mxu0 0
    %194 = vmatpush1.bf16.xpose.msra.mxu0 0
    %195 = vmatprep.subr.bf16.mxu0 0
    %196 = vmatpush1.bf16.xpose.msra.mxu0 0
    %197 = vmatprep.subr.bf16.mxu0 0
    %198 = vmatpush1.bf16.xpose.msra.mxu0 0
    %199 = vmatprep.subr.bf16.mxu0 0
    %200 = vmatpush1.bf16.xpose.msra.mxu0 0
    %201 = vmatprep.mubr.bf16.mxu0 0
    %202 = vmatmul.mubr.bf16.gmra.mrb[0].mxu0 %v164
    %v203 = vpop.f32.mrb[0].mxu0
    %v204 = vadd.f32 0.0, %v203
    %v205 = vpop.f32.mrb[0].mxu0
    %v206 = vpop.f32.mrb[0].mxu0
    %v207 = vpop.f32.mrb[0].mxu0
    %208 = vdwg.mxu0
    %209 = vrot.lane.b32.xlu0 %v159, 96
    %v210 = vpop.permute.xlu0 %209
    %v212 = vsel %vm162, %v159, 0
    %v215 = vsel %vm162, %v210, 0
    %217 = vmatprep.subr.bf16.mxu0 0
    %218 = vmatpush1.bf16.xpose.msra.mxu0 %v215
    %219 = vmatprep.subr.bf16.mxu0 0
    %220 = vmatpush1.bf16.xpose.msra.mxu0 0
    %221 = vmatprep.subr.bf16.mxu0 0
    %222 = vmatpush1.bf16.xpose.msra.mxu0 0
    %223 = vmatprep.subr.bf16.mxu0 0
    %224 = vmatpush1.bf16.xpose.msra.mxu0 0
    %225 = vmatprep.subr.bf16.mxu0 0
    %226 = vmatpush1.bf16.xpose.msra.mxu0 0
    %227 = vmatprep.subr.bf16.mxu0 0
    %228 = vmatpush1.bf16.xpose.msra.mxu0 0
    %229 = vmatprep.subr.bf16.mxu0 0
    %230 = vmatpush1.bf16.xpose.msra.mxu0 0
    %231 = vmatprep.subr.bf16.mxu0 0
    %232 = vmatpush1.bf16.xpose.msra.mxu0 0
    %233 = vmatprep.subr.bf16.mxu0 0
    %234 = vmatpush1.bf16.xpose.msra.mxu0 0
    %235 = vmatprep.subr.bf16.mxu0 0
    %236 = vmatpush1.bf16.xpose.msra.mxu0 0
    %237 = vmatprep.subr.bf16.mxu0 0
    %238 = vmatpush1.bf16.xpose.msra.mxu0 0
    %239 = vmatprep.subr.bf16.mxu0 0
    %240 = vmatpush1.bf16.xpose.msra.mxu0 0
    %241 = vmatprep.subr.bf16.mxu0 0
    %242 = vmatpush1.bf16.xpose.msra.mxu0 0
    %243 = vmatprep.subr.bf16.mxu0 0
    %244 = vmatpush1.bf16.xpose.msra.mxu0 0
    %245 = vmatprep.subr.bf16.mxu0 0
    %246 = vmatpush1.bf16.xpose.msra.mxu0 0
    %247 = vmatprep.subr.bf16.mxu0 0
    %248 = vmatpush1.bf16.xpose.msra.mxu0 0
    %249 = vmatprep.mubr.bf16.mxu0 0
    %250 = vmatmul.mubr.bf16.gmra.mrb[0].mxu0 %v212
    %v251 = vpop.f32.mrb[0].mxu0
    %v252 = vadd.f32 0.0, %v251
    %v253 = vpop.f32.mrb[0].mxu0
    %v254 = vpop.f32.mrb[0].mxu0
    %v255 = vpop.f32.mrb[0].mxu0
    %256 = vdwg.mxu0
    %v257 = vmul.f32 %v204, 0.35355338
    %v258 = vmul.f32 %v252, 0.35355338
    %v261 = vlaneseq
    %v262 = vshrl.u32 %v261, 7
    %v263 = vsub.s32 0, %v262
    %v264 = vrot.slane %v83, %v263
    %v265 = vlaneseq
    %v266 = vshrl.u32 %v265, 7
    %v267 = vsub.s32 0, %v266
    %v268 = vrot.slane %v84, %v267
    %v271 = vadd.f32 %v257, %v264
    %v272 = vadd.f32 %v258, %v268
    %v273 = vsel %vm162, %v271, -inf
    %274 = vmax.xlane.f32.xlu0 %v273
    %v275 = vpop.xlane.xlu0 %274
    %v276 = vsel %vm162, %v272, -inf
    %277 = vmax.xlane.f32.xlu0 %v276
    %v278 = vpop.xlane.xlu0 %277
    %v279 = vsub.f32 %v271, %v275
    %v280 = vsub.f32 %v272, %v278
    %v281 = vmul.f32 %v279, 1.442695
    %v282 = vpow.pop %v281
    %v283 = vmul.f32 %v280, 1.442695
    %v284 = vpow.pop %v283
    %v285 = vsel %vm162, %v282, 0.0
    %286 = vadd.xlane.f32.xlu0 %v285
    %v287 = vpop.xlane.xlu0 %286
    %v288 = vsel %vm162, %v284, 0.0
    %289 = vadd.xlane.f32.xlu0 %v288
    %v290 = vpop.xlane.xlu0 %289
    %v291 = vrcp.pop %v287
    %v292 = vrcp.pop %v290
    %v293 = vpack.c.bf16 %v282, %v282
    %v294 = vpack.c.bf16 %v284, %v284
    %295 = vrot.lane.b32.xlu0 %v158, 64
    %v296 = vpop.permute.xlu0 %295
    %v298 = vsel %vm162, %v293, 0
    %vm300 = vcmask 1043456
    %v302 = vsel %vm300, %v296, 0
    %304 = vmatprep.subr.bf16.mxu0 0
    %305 = vmatpush1.bf16.msra.mxu0 %v302
    %306 = vmatprep.subr.bf16.mxu0 0
    %307 = vmatpush1.bf16.msra.mxu0 0
    %308 = vmatprep.subr.bf16.mxu0 0
    %309 = vmatpush1.bf16.msra.mxu0 0
    %310 = vmatprep.subr.bf16.mxu0 0
    %311 = vmatpush1.bf16.msra.mxu0 0
    %312 = vmatprep.subr.bf16.mxu0 0
    %313 = vmatpush1.bf16.msra.mxu0 0
    %314 = vmatprep.subr.bf16.mxu0 0
    %315 = vmatpush1.bf16.msra.mxu0 0
    %316 = vmatprep.subr.bf16.mxu0 0
    %317 = vmatpush1.bf16.msra.mxu0 0
    %318 = vmatprep.subr.bf16.mxu0 0
    %319 = vmatpush1.bf16.msra.mxu0 0
    %320 = vmatprep.subr.bf16.mxu0 0
    %321 = vmatpush1.bf16.msra.mxu0 0
    %322 = vmatprep.subr.bf16.mxu0 0
    %323 = vmatpush1.bf16.msra.mxu0 0
    %324 = vmatprep.subr.bf16.mxu0 0
    %325 = vmatpush1.bf16.msra.mxu0 0
    %326 = vmatprep.subr.bf16.mxu0 0
    %327 = vmatpush1.bf16.msra.mxu0 0
    %328 = vmatprep.subr.bf16.mxu0 0
    %329 = vmatpush1.bf16.msra.mxu0 0
    %330 = vmatprep.subr.bf16.mxu0 0
    %331 = vmatpush1.bf16.msra.mxu0 0
    %332 = vmatprep.subr.bf16.mxu0 0
    %333 = vmatpush1.bf16.msra.mxu0 0
    %334 = vmatprep.subr.bf16.mxu0 0
    %335 = vmatpush1.bf16.msra.mxu0 0
    %336 = vmatprep.mubr.bf16.mxu0 0
    %337 = vmatmul.mubr.bf16.gmra.mrb[0].mxu0 %v298
    %v338 = vpop.f32.mrb[0].mxu0
    %v339 = vadd.f32 0.0, %v338
    %v340 = vpop.f32.mrb[0].mxu0
    %v341 = vpop.f32.mrb[0].mxu0
    %v342 = vpop.f32.mrb[0].mxu0
    %343 = vdwg.mxu0
    %344 = vrot.lane.b32.xlu0 %v159, 64
    %v345 = vpop.permute.xlu0 %344
    %v347 = vsel %vm162, %v294, 0
    %v350 = vsel %vm300, %v345, 0
    %352 = vmatprep.subr.bf16.mxu0 0
    %353 = vmatpush1.bf16.msra.mxu0 %v350
    %354 = vmatprep.subr.bf16.mxu0 0
    %355 = vmatpush1.bf16.msra.mxu0 0
    %356 = vmatprep.subr.bf16.mxu0 0
    %357 = vmatpush1.bf16.msra.mxu0 0
    %358 = vmatprep.subr.bf16.mxu0 0
    %359 = vmatpush1.bf16.msra.mxu0 0
    %360 = vmatprep.subr.bf16.mxu0 0
    %361 = vmatpush1.bf16.msra.mxu0 0
    %362 = vmatprep.subr.bf16.mxu0 0
    %363 = vmatpush1.bf16.msra.mxu0 0
    %364 = vmatprep.subr.bf16.mxu0 0
    %365 = vmatpush1.bf16.msra.mxu0 0
    %366 = vmatprep.subr.bf16.mxu0 0
    %367 = vmatpush1.bf16.msra.mxu0 0
    %368 = vmatprep.subr.bf16.mxu0 0
    %369 = vmatpush1.bf16.msra.mxu0 0
    %370 = vmatprep.subr.bf16.mxu0 0
    %371 = vmatpush1.bf16.msra.mxu0 0
    %372 = vmatprep.subr.bf16.mxu0 0
    %373 = vmatpush1.bf16.msra.mxu0 0
    %374 = vmatprep.subr.bf16.mxu0 0
    %375 = vmatpush1.bf16.msra.mxu0 0
    %376 = vmatprep.subr.bf16.mxu0 0
    %377 = vmatpush1.bf16.msra.mxu0 0
    %378 = vmatprep.subr.bf16.mxu0 0
    %379 = vmatpush1.bf16.msra.mxu0 0
    %380 = vmatprep.subr.bf16.mxu0 0
    %381 = vmatpush1.bf16.msra.mxu0 0
    %382 = vmatprep.subr.bf16.mxu0 0
    %383 = vmatpush1.bf16.msra.mxu0 0
    %384 = vmatprep.mubr.bf16.mxu0 0
    %385 = vmatmul.mubr.bf16.gmra.mrb[0].mxu0 %v347
    %v386 = vpop.f32.mrb[0].mxu0
    %v387 = vadd.f32 0.0, %v386
    %v388 = vpop.f32.mrb[0].mxu0
    %v389 = vpop.f32.mrb[0].mxu0
    %v390 = vpop.f32.mrb[0].mxu0
    %391 = vdwg.mxu0
    %v392 = vmul.f32 %v339, %v291
    %v393 = vmul.f32 %v387, %v292
    %394 = vrot.lane.b32.xlu0 %v158, 120
    %v395 = vpop.permute.xlu0 %394
    %396 = vrot.lane.b32.xlu0 %v158, 88
    %v397 = vpop.permute.xlu0 %396
    %v399 = vsel %vm162, %v395, 0
    %v402 = vsel %vm162, %v397, 0
    %404 = vmatprep.subr.bf16.mxu0 0
    %405 = vmatpush1.bf16.xpose.msra.mxu0 %v402
    %406 = vmatprep.subr.bf16.mxu0 0
    %407 = vmatpush1.bf16.xpose.msra.mxu0 0
    %408 = vmatprep.subr.bf16.mxu0 0
    %409 = vmatpush1.bf16.xpose.msra.mxu0 0
    %410 = vmatprep.subr.bf16.mxu0 0
    %411 = vmatpush1.bf16.xpose.msra.mxu0 0
    %412 = vmatprep.subr.bf16.mxu0 0
    %413 = vmatpush1.bf16.xpose.msra.mxu0 0
    %414 = vmatprep.subr.bf16.mxu0 0
    %415 = vmatpush1.bf16.xpose.msra.mxu0 0
    %416 = vmatprep.subr.bf16.mxu0 0
    %417 = vmatpush1.bf16.xpose.msra.mxu0 0
    %418 = vmatprep.subr.bf16.mxu0 0
    %419 = vmatpush1.bf16.xpose.msra.mxu0 0
    %420 = vmatprep.subr.bf16.mxu0 0
    %421 = vmatpush1.bf16.xpose.msra.mxu0 0
    %422 = vmatprep.subr.bf16.mxu0 0
    %423 = vmatpush1.bf16.xpose.msra.mxu0 0
    %424 = vmatprep.subr.bf16.mxu0 0
    %425 = vmatpush1.bf16.xpose.msra.mxu0 0
    %426 = vmatprep.subr.bf16.mxu0 0
    %427 = vmatpush1.bf16.xpose.msra.mxu0 0
    %428 = vmatprep.subr.bf16.mxu0 0
    %429 = vmatpush1.bf16.xpose.msra.mxu0 0
    %430 = vmatprep.subr.bf16.mxu0 0
    %431 = vmatpush1.bf16.xpose.msra.mxu0 0
    %432 = vmatprep.subr.bf16.mxu0 0
    %433 = vmatpush1.bf16.xpose.msra.mxu0 0
    %434 = vmatprep.subr.bf16.mxu0 0
    %435 = vmatpush1.bf16.xpose.msra.mxu0 0
    %436 = vmatprep.mubr.bf16.mxu0 0
    %437 = vmatmul.mubr.bf16.gmra.mrb[0].mxu0 %v399
    %v438 = vpop.f32.mrb[0].mxu0
    %v439 = vadd.f32 0.0, %v438
    %v440 = vpop.f32.mrb[0].mxu0
    %v441 = vpop.f32.mrb[0].mxu0
    %v442 = vpop.f32.mrb[0].mxu0
    %443 = vdwg.mxu0
    %444 = vrot.lane.b32.xlu0 %v159, 120
    %v445 = vpop.permute.xlu0 %444
    %446 = vrot.lane.b32.xlu0 %v159, 88
    %v447 = vpop.permute.xlu0 %446
    %v449 = vsel %vm162, %v445, 0
    %v452 = vsel %vm162, %v447, 0
    %454 = vmatprep.subr.bf16.mxu0 0
    %455 = vmatpush1.bf16.xpose.msra.mxu0 %v452
    %456 = vmatprep.subr.bf16.mxu0 0
    %457 = vmatpush1.bf16.xpose.msra.mxu0 0
    %458 = vmatprep.subr.bf16.mxu0 0
    %459 = vmatpush1.bf16.xpose.msra.mxu0 0
    %460 = vmatprep.subr.bf16.mxu0 0
    %461 = vmatpush1.bf16.xpose.msra.mxu0 0
    %462 = vmatprep.subr.bf16.mxu0 0
    %463 = vmatpush1.bf16.xpose.msra.mxu0 0
    %464 = vmatprep.subr.bf16.mxu0 0
    %465 = vmatpush1.bf16.xpose.msra.mxu0 0
    %466 = vmatprep.subr.bf16.mxu0 0
    %467 = vmatpush1.bf16.xpose.msra.mxu0 0
    %468 = vmatprep.subr.bf16.mxu0 0
    %469 = vmatpush1.bf16.xpose.msra.mxu0 0
    %470 = vmatprep.subr.bf16.mxu0 0
    %471 = vmatpush1.bf16.xpose.msra.mxu0 0
    %472 = vmatprep.subr.bf16.mxu0 0
    %473 = vmatpush1.bf16.xpose.msra.mxu0 0
    %474 = vmatprep.subr.bf16.mxu0 0
    %475 = vmatpush1.bf16.xpose.msra.mxu0 0
    %476 = vmatprep.subr.bf16.mxu0 0
    %477 = vmatpush1.bf16.xpose.msra.mxu0 0
    %478 = vmatprep.subr.bf16.mxu0 0
    %479 = vmatpush1.bf16.xpose.msra.mxu0 0
    %480 = vmatprep.subr.bf16.mxu0 0
    %481 = vmatpush1.bf16.xpose.msra.mxu0 0
    %482 = vmatprep.subr.bf16.mxu0 0
    %483 = vmatpush1.bf16.xpose.msra.mxu0 0
    %484 = vmatprep.subr.bf16.mxu0 0
    %485 = vmatpush1.bf16.xpose.msra.mxu0 0
    %486 = vmatprep.mubr.bf16.mxu0 0
    %487 = vmatmul.mubr.bf16.gmra.mrb[0].mxu0 %v449
    %v488 = vpop.f32.mrb[0].mxu0
    %v489 = vadd.f32 0.0, %v488
    %v490 = vpop.f32.mrb[0].mxu0
    %v491 = vpop.f32.mrb[0].mxu0
    %v492 = vpop.f32.mrb[0].mxu0
    %493 = vdwg.mxu0
    %v494 = vmul.f32 %v439, 0.35355338
    %v495 = vmul.f32 %v489, 0.35355338
    %v496 = vadd.f32 %v494, %v264
    %v497 = vadd.f32 %v495, %v268
    %v498 = vsel %vm162, %v496, -inf
    %499 = vmax.xlane.f32.xlu0 %v498
    %v500 = vpop.xlane.xlu0 %499
    %v501 = vsel %vm162, %v497, -inf
    %502 = vmax.xlane.f32.xlu0 %v501
    %v503 = vpop.xlane.xlu0 %502
    %v504 = vsub.f32 %v496, %v500
    %v505 = vsub.f32 %v497, %v503
    %v506 = vmul.f32 %v504, 1.442695
    %v507 = vpow.pop %v506
    %v508 = vmul.f32 %v505, 1.442695
    %v509 = vpow.pop %v508
    %v510 = vsel %vm162, %v507, 0.0
    %511 = vadd.xlane.f32.xlu0 %v510
    %v512 = vpop.xlane.xlu0 %511
    %v513 = vsel %vm162, %v509, 0.0
    %514 = vadd.xlane.f32.xlu0 %v513
    %v515 = vpop.xlane.xlu0 %514
    %v516 = vrcp.pop %v512
    %v517 = vrcp.pop %v515
    %v518 = vpack.c.bf16 %v507, %v507
    %v519 = vpack.c.bf16 %v509, %v509
    %520 = vrot.lane.b32.xlu0 %v158, 56
    %v521 = vpop.permute.xlu0 %520
    %v523 = vsel %vm162, %v518, 0
    %v526 = vsel %vm300, %v521, 0
    %528 = vmatprep.subr.bf16.mxu0 0
    %529 = vmatpush1.bf16.msra.mxu0 %v526
    %530 = vmatprep.subr.bf16.mxu0 0
    %531 = vmatpush1.bf16.msra.mxu0 0
    %532 = vmatprep.subr.bf16.mxu0 0
    %533 = vmatpush1.bf16.msra.mxu0 0
    %534 = vmatprep.subr.bf16.mxu0 0
    %535 = vmatpush1.bf16.msra.mxu0 0
    %536 = vmatprep.subr.bf16.mxu0 0
    %537 = vmatpush1.bf16.msra.mxu0 0
    %538 = vmatprep.subr.bf16.mxu0 0
    %539 = vmatpush1.bf16.msra.mxu0 0
    %540 = vmatprep.subr.bf16.mxu0 0
    %541 = vmatpush1.bf16.msra.mxu0 0
    %542 = vmatprep.subr.bf16.mxu0 0
    %543 = vmatpush1.bf16.msra.mxu0 0
    %544 = vmatprep.subr.bf16.mxu0 0
    %545 = vmatpush1.bf16.msra.mxu0 0
    %546 = vmatprep.subr.bf16.mxu0 0
    %547 = vmatpush1.bf16.msra.mxu0 0
    %548 = vmatprep.subr.bf16.mxu0 0
    %549 = vmatpush1.bf16.msra.mxu0 0
    %550 = vmatprep.subr.bf16.mxu0 0
    %551 = vmatpush1.bf16.msra.mxu0 0
    %552 = vmatprep.subr.bf16.mxu0 0
    %553 = vmatpush1.bf16.msra.mxu0 0
    %554 = vmatprep.subr.bf16.mxu0 0
    %555 = vmatpush1.bf16.msra.mxu0 0
    %556 = vmatprep.subr.bf16.mxu0 0
    %557 = vmatpush1.bf16.msra.mxu0 0
    %558 = vmatprep.subr.bf16.mxu0 0
    %559 = vmatpush1.bf16.msra.mxu0 0
    %560 = vmatprep.mubr.bf16.mxu0 0
    %561 = vmatmul.mubr.bf16.gmra.mrb[0].mxu0 %v523
    %v562 = vpop.f32.mrb[0].mxu0
    %v563 = vadd.f32 0.0, %v562
    %v564 = vpop.f32.mrb[0].mxu0
    %v565 = vpop.f32.mrb[0].mxu0
    %v566 = vpop.f32.mrb[0].mxu0
    %567 = vdwg.mxu0
    %568 = vrot.lane.b32.xlu0 %v159, 56
    %v569 = vpop.permute.xlu0 %568
    %v571 = vsel %vm162, %v519, 0
    %v574 = vsel %vm300, %v569, 0
    %576 = vmatprep.subr.bf16.mxu0 0
    %577 = vmatpush1.bf16.msra.mxu0 %v574
    %578 = vmatprep.subr.bf16.mxu0 0
    %579 = vmatpush1.bf16.msra.mxu0 0
    %580 = vmatprep.subr.bf16.mxu0 0
    %581 = vmatpush1.bf16.msra.mxu0 0
    %582 = vmatprep.subr.bf16.mxu0 0
    %583 = vmatpush1.bf16.msra.mxu0 0
    %584 = vmatprep.subr.bf16.mxu0 0
    %585 = vmatpush1.bf16.msra.mxu0 0
    %586 = vmatprep.subr.bf16.mxu0 0
    %587 = vmatpush1.bf16.msra.mxu0 0
    %588 = vmatprep.subr.bf16.mxu0 0
    %589 = vmatpush1.bf16.msra.mxu0 0
    %590 = vmatprep.subr.bf16.mxu0 0
    %591 = vmatpush1.bf16.msra.mxu0 0
    %592 = vmatprep.subr.bf16.mxu0 0
    %593 = vmatpush1.bf16.msra.mxu0 0
    %594 = vmatprep.subr.bf16.mxu0 0
    %595 = vmatpush1.bf16.msra.mxu0 0
    %596 = vmatprep.subr.bf16.mxu0 0
    %597 = vmatpush1.bf16.msra.mxu0 0
    %598 = vmatprep.subr.bf16.mxu0 0
    %599 = vmatpush1.bf16.msra.mxu0 0
    %600 = vmatprep.subr.bf16.mxu0 0
    %601 = vmatpush1.bf16.msra.mxu0 0
    %602 = vmatprep.subr.bf16.mxu0 0
    %603 = vmatpush1.bf16.msra.mxu0 0
    %604 = vmatprep.subr.bf16.mxu0 0
    %605 = vmatpush1.bf16.msra.mxu0 0
    %606 = vmatprep.subr.bf16.mxu0 0
    %607 = vmatpush1.bf16.msra.mxu0 0
    %608 = vmatprep.mubr.bf16.mxu0 0
    %609 = vmatmul.mubr.bf16.gmra.mrb[0].mxu0 %v571
    %v610 = vpop.f32.mrb[0].mxu0
    %v611 = vadd.f32 0.0, %v610
    %v612 = vpop.f32.mrb[0].mxu0
    %v613 = vpop.f32.mrb[0].mxu0
    %v614 = vpop.f32.mrb[0].mxu0
    %615 = vdwg.mxu0
    %v616 = vmul.f32 %v563, %v516
    %v617 = vmul.f32 %v611, %v517
    %618 = vrot.lane.b32.xlu0 %v158, 112
    %v619 = vpop.permute.xlu0 %618
    %620 = vrot.lane.b32.xlu0 %v158, 80
    %v621 = vpop.permute.xlu0 %620
    %v623 = vsel %vm162, %v619, 0
    %v626 = vsel %vm162, %v621, 0
    %628 = vmatprep.subr.bf16.mxu0 0
    %629 = vmatpush1.bf16.xpose.msra.mxu0 %v626
    %630 = vmatprep.subr.bf16.mxu0 0
    %631 = vmatpush1.bf16.xpose.msra.mxu0 0
    %632 = vmatprep.subr.bf16.mxu0 0
    %633 = vmatpush1.bf16.xpose.msra.mxu0 0
    %634 = vmatprep.subr.bf16.mxu0 0
    %635 = vmatpush1.bf16.xpose.msra.mxu0 0
    %636 = vmatprep.subr.bf16.mxu0 0
    %637 = vmatpush1.bf16.xpose.msra.mxu0 0
    %638 = vmatprep.subr.bf16.mxu0 0
    %639 = vmatpush1.bf16.xpose.msra.mxu0 0
    %640 = vmatprep.subr.bf16.mxu0 0
    %641 = vmatpush1.bf16.xpose.msra.mxu0 0
    %642 = vmatprep.subr.bf16.mxu0 0
    %643 = vmatpush1.bf16.xpose.msra.mxu0 0
    %644 = vmatprep.subr.bf16.mxu0 0
    %645 = vmatpush1.bf16.xpose.msra.mxu0 0
    %646 = vmatprep.subr.bf16.mxu0 0
    %647 = vmatpush1.bf16.xpose.msra.mxu0 0
    %648 = vmatprep.subr.bf16.mxu0 0
    %649 = vmatpush1.bf16.xpose.msra.mxu0 0
    %650 = vmatprep.subr.bf16.mxu0 0
    %651 = vmatpush1.bf16.xpose.msra.mxu0 0
    %652 = vmatprep.subr.bf16.mxu0 0
    %653 = vmatpush1.bf16.xpose.msra.mxu0 0
    %654 = vmatprep.subr.bf16.mxu0 0
    %655 = vmatpush1.bf16.xpose.msra.mxu0 0
    %656 = vmatprep.subr.bf16.mxu0 0
    %657 = vmatpush1.bf16.xpose.msra.mxu0 0
    %658 = vmatprep.subr.bf16.mxu0 0
    %659 = vmatpush1.bf16.xpose.msra.mxu0 0
    %660 = vmatprep.mubr.bf16.mxu0 0
    %661 = vmatmul.mubr.bf16.gmra.mrb[0].mxu0 %v623
    %v662 = vpop.f32.mrb[0].mxu0
    %v663 = vadd.f32 0.0, %v662
    %v664 = vpop.f32.mrb[0].mxu0
    %v665 = vpop.f32.mrb[0].mxu0
    %v666 = vpop.f32.mrb[0].mxu0
    %667 = vdwg.mxu0
    %668 = vrot.lane.b32.xlu0 %v159, 112
    %v669 = vpop.permute.xlu0 %668
    %670 = vrot.lane.b32.xlu0 %v159, 80
    %v671 = vpop.permute.xlu0 %670
    %v673 = vsel %vm162, %v669, 0
    %v676 = vsel %vm162, %v671, 0
    %678 = vmatprep.subr.bf16.mxu0 0
    %679 = vmatpush1.bf16.xpose.msra.mxu0 %v676
    %680 = vmatprep.subr.bf16.mxu0 0
    %681 = vmatpush1.bf16.xpose.msra.mxu0 0
    %682 = vmatprep.subr.bf16.mxu0 0
    %683 = vmatpush1.bf16.xpose.msra.mxu0 0
    %684 = vmatprep.subr.bf16.mxu0 0
    %685 = vmatpush1.bf16.xpose.msra.mxu0 0
    %686 = vmatprep.subr.bf16.mxu0 0
    %687 = vmatpush1.bf16.xpose.msra.mxu0 0
    %688 = vmatprep.subr.bf16.mxu0 0
    %689 = vmatpush1.bf16.xpose.msra.mxu0 0
    %690 = vmatprep.subr.bf16.mxu0 0
    %691 = vmatpush1.bf16.xpose.msra.mxu0 0
    %692 = vmatprep.subr.bf16.mxu0 0
    %693 = vmatpush1.bf16.xpose.msra.mxu0 0
    %694 = vmatprep.subr.bf16.mxu0 0
    %695 = vmatpush1.bf16.xpose.msra.mxu0 0
    %696 = vmatprep.subr.bf16.mxu0 0
    %697 = vmatpush1.bf16.xpose.msra.mxu0 0
    %698 = vmatprep.subr.bf16.mxu0 0
    %699 = vmatpush1.bf16.xpose.msra.mxu0 0
    %700 = vmatprep.subr.bf16.mxu0 0
    %701 = vmatpush1.bf16.xpose.msra.mxu0 0
    %702 = vmatprep.subr.bf16.mxu0 0
    %703 = vmatpush1.bf16.xpose.msra.mxu0 0
    %704 = vmatprep.subr.bf16.mxu0 0
    %705 = vmatpush1.bf16.xpose.msra.mxu0 0
    %706 = vmatprep.subr.bf16.mxu0 0
    %707 = vmatpush1.bf16.xpose.msra.mxu0 0
    %708 = vmatprep.subr.bf16.mxu0 0
    %709 = vmatpush1.bf16.xpose.msra.mxu0 0
    %710 = vmatprep.mubr.bf16.mxu0 0
    %711 = vmatmul.mubr.bf16.gmra.mrb[0].mxu0 %v673
    %v712 = vpop.f32.mrb[0].mxu0
    %v713 = vadd.f32 0.0, %v712
    %v714 = vpop.f32.mrb[0].mxu0
    %v715 = vpop.f32.mrb[0].mxu0
    %v716 = vpop.f32.mrb[0].mxu0
    %717 = vdwg.mxu0
    %v718 = vmul.f32 %v663, 0.35355338
    %v719 = vmul.f32 %v713, 0.35355338
    %v720 = vadd.f32 %v718, %v264
    %v721 = vadd.f32 %v719, %v268
    %v722 = vsel %vm162, %v720, -inf
    %723 = vmax.xlane.f32.xlu0 %v722
    %v724 = vpop.xlane.xlu0 %723
    %v725 = vsel %vm162, %v721, -inf
    %726 = vmax.xlane.f32.xlu0 %v725
    %v727 = vpop.xlane.xlu0 %726
    %v728 = vsub.f32 %v720, %v724
    %v729 = vsub.f32 %v721, %v727
    %v730 = vmul.f32 %v728, 1.442695
    %v731 = vpow.pop %v730
    %v732 = vmul.f32 %v729, 1.442695
    %v733 = vpow.pop %v732
    %v734 = vsel %vm162, %v731, 0.0
    %735 = vadd.xlane.f32.xlu0 %v734
    %v736 = vpop.xlane.xlu0 %735
    %v737 = vsel %vm162, %v733, 0.0
    %738 = vadd.xlane.f32.xlu0 %v737
    %v739 = vpop.xlane.xlu0 %738
    %v740 = vrcp.pop %v736
    %v741 = vrcp.pop %v739
    %v742 = vpack.c.bf16 %v731, %v731
    %v743 = vpack.c.bf16 %v733, %v733
    %744 = vrot.lane.b32.xlu0 %v158, 48
    %v745 = vpop.permute.xlu0 %744
    %v747 = vsel %vm162, %v742, 0
    %v750 = vsel %vm300, %v745, 0
    %752 = vmatprep.subr.bf16.mxu0 0
    %753 = vmatpush1.bf16.msra.mxu0 %v750
    %754 = vmatprep.subr.bf16.mxu0 0
    %755 = vmatpush1.bf16.msra.mxu0 0
    %756 = vmatprep.subr.bf16.mxu0 0
    %757 = vmatpush1.bf16.msra.mxu0 0
    %758 = vmatprep.subr.bf16.mxu0 0
    %759 = vmatpush1.bf16.msra.mxu0 0
    %760 = vmatprep.subr.bf16.mxu0 0
    %761 = vmatpush1.bf16.msra.mxu0 0
    %762 = vmatprep.subr.bf16.mxu0 0
    %763 = vmatpush1.bf16.msra.mxu0 0
    %764 = vmatprep.subr.bf16.mxu0 0
    %765 = vmatpush1.bf16.msra.mxu0 0
    %766 = vmatprep.subr.bf16.mxu0 0
    %767 = vmatpush1.bf16.msra.mxu0 0
    %768 = vmatprep.subr.bf16.mxu0 0
    %769 = vmatpush1.bf16.msra.mxu0 0
    %770 = vmatprep.subr.bf16.mxu0 0
    %771 = vmatpush1.bf16.msra.mxu0 0
    %772 = vmatprep.subr.bf16.mxu0 0
    %773 = vmatpush1.bf16.msra.mxu0 0
    %774 = vmatprep.subr.bf16.mxu0 0
    %775 = vmatpush1.bf16.msra.mxu0 0
    %776 = vmatprep.subr.bf16.mxu0 0
    %777 = vmatpush1.bf16.msra.mxu0 0
    %778 = vmatprep.subr.bf16.mxu0 0
    %779 = vmatpush1.bf16.msra.mxu0 0
    %780 = vmatprep.subr.bf16.mxu0 0
    %781 = vmatpush1.bf16.msra.mxu0 0
    %782 = vmatprep.subr.bf16.mxu0 0
    %783 = vmatpush1.bf16.msra.mxu0 0
    %784 = vmatprep.mubr.bf16.mxu0 0
    %785 = vmatmul.mubr.bf16.gmra.mrb[0].mxu0 %v747
    %v786 = vpop.f32.mrb[0].mxu0
    %v787 = vadd.f32 0.0, %v786
    %v788 = vpop.f32.mrb[0].mxu0
    %v789 = vpop.f32.mrb[0].mxu0
    %v790 = vpop.f32.mrb[0].mxu0
    %791 = vdwg.mxu0
    %792 = vrot.lane.b32.xlu0 %v159, 48
    %v793 = vpop.permute.xlu0 %792
    %v795 = vsel %vm162, %v743, 0
    %v798 = vsel %vm300, %v793, 0
    %800 = vmatprep.subr.bf16.mxu0 0
    %801 = vmatpush1.bf16.msra.mxu0 %v798
    %802 = vmatprep.subr.bf16.mxu0 0
    %803 = vmatpush1.bf16.msra.mxu0 0
    %804 = vmatprep.subr.bf16.mxu0 0
    %805 = vmatpush1.bf16.msra.mxu0 0
    %806 = vmatprep.subr.bf16.mxu0 0
    %807 = vmatpush1.bf16.msra.mxu0 0
    %808 = vmatprep.subr.bf16.mxu0 0
    %809 = vmatpush1.bf16.msra.mxu0 0
    %810 = vmatprep.subr.bf16.mxu0 0
    %811 = vmatpush1.bf16.msra.mxu0 0
    %812 = vmatprep.subr.bf16.mxu0 0
    %813 = vmatpush1.bf16.msra.mxu0 0
    %814 = vmatprep.subr.bf16.mxu0 0
    %815 = vmatpush1.bf16.msra.mxu0 0
    %816 = vmatprep.subr.bf16.mxu0 0
    %817 = vmatpush1.bf16.msra.mxu0 0
    %818 = vmatprep.subr.bf16.mxu0 0
    %819 = vmatpush1.bf16.msra.mxu0 0
    %820 = vmatprep.subr.bf16.mxu0 0
    %821 = vmatpush1.bf16.msra.mxu0 0
    %822 = vmatprep.subr.bf16.mxu0 0
    %823 = vmatpush1.bf16.msra.mxu0 0
    %824 = vmatprep.subr.bf16.mxu0 0
    %825 = vmatpush1.bf16.msra.mxu0 0
    %826 = vmatprep.subr.bf16.mxu0 0
    %827 = vmatpush1.bf16.msra.mxu0 0
    %828 = vmatprep.subr.bf16.mxu0 0
    %829 = vmatpush1.bf16.msra.mxu0 0
    %830 = vmatprep.subr.bf16.mxu0 0
    %831 = vmatpush1.bf16.msra.mxu0 0
    %832 = vmatprep.mubr.bf16.mxu0 0
    %833 = vmatmul.mubr.bf16.gmra.mrb[0].mxu0 %v795
    %v834 = vpop.f32.mrb[0].mxu0
    %v835 = vadd.f32 0.0, %v834
    %v836 = vpop.f32.mrb[0].mxu0
    %v837 = vpop.f32.mrb[0].mxu0
    %v838 = vpop.f32.mrb[0].mxu0
    %839 = vdwg.mxu0
    %v840 = vmul.f32 %v787, %v740
    %v841 = vmul.f32 %v835, %v741
    %842 = vrot.lane.b32.xlu0 %v158, 104
    %v843 = vpop.permute.xlu0 %842
    %844 = vrot.lane.b32.xlu0 %v158, 72
    %v845 = vpop.permute.xlu0 %844
    %v847 = vsel %vm162, %v843, 0
    %v850 = vsel %vm162, %v845, 0
    %852 = vmatprep.subr.bf16.mxu0 0
    %853 = vmatpush1.bf16.xpose.msra.mxu0 %v850
    %854 = vmatprep.subr.bf16.mxu0 0
    %855 = vmatpush1.bf16.xpose.msra.mxu0 0
    %856 = vmatprep.subr.bf16.mxu0 0
    %857 = vmatpush1.bf16.xpose.msra.mxu0 0
    %858 = vmatprep.subr.bf16.mxu0 0
    %859 = vmatpush1.bf16.xpose.msra.mxu0 0
    %860 = vmatprep.subr.bf16.mxu0 0
    %861 = vmatpush1.bf16.xpose.msra.mxu0 0
    %862 = vmatprep.subr.bf16.mxu0 0
    %863 = vmatpush1.bf16.xpose.msra.mxu0 0
    %864 = vmatprep.subr.bf16.mxu0 0
    %865 = vmatpush1.bf16.xpose.msra.mxu0 0
    %866 = vmatprep.subr.bf16.mxu0 0
    %867 = vmatpush1.bf16.xpose.msra.mxu0 0
    %868 = vmatprep.subr.bf16.mxu0 0
    %869 = vmatpush1.bf16.xpose.msra.mxu0 0
    %870 = vmatprep.subr.bf16.mxu0 0
    %871 = vmatpush1.bf16.xpose.msra.mxu0 0
    %872 = vmatprep.subr.bf16.mxu0 0
    %873 = vmatpush1.bf16.xpose.msra.mxu0 0
    %874 = vmatprep.subr.bf16.mxu0 0
    %875 = vmatpush1.bf16.xpose.msra.mxu0 0
    %876 = vmatprep.subr.bf16.mxu0 0
    %877 = vmatpush1.bf16.xpose.msra.mxu0 0
    %878 = vmatprep.subr.bf16.mxu0 0
    %879 = vmatpush1.bf16.xpose.msra.mxu0 0
    %880 = vmatprep.subr.bf16.mxu0 0
    %881 = vmatpush1.bf16.xpose.msra.mxu0 0
    %882 = vmatprep.subr.bf16.mxu0 0
    %883 = vmatpush1.bf16.xpose.msra.mxu0 0
    %884 = vmatprep.mubr.bf16.mxu0 0
    %885 = vmatmul.mubr.bf16.gmra.mrb[0].mxu0 %v847
    %v886 = vpop.f32.mrb[0].mxu0
    %v887 = vadd.f32 0.0, %v886
    %v888 = vpop.f32.mrb[0].mxu0
    %v889 = vpop.f32.mrb[0].mxu0
    %v890 = vpop.f32.mrb[0].mxu0
    %891 = vdwg.mxu0
    %892 = vrot.lane.b32.xlu0 %v159, 104
    %v893 = vpop.permute.xlu0 %892
    %894 = vrot.lane.b32.xlu0 %v159, 72
    %v895 = vpop.permute.xlu0 %894
    %v897 = vsel %vm162, %v893, 0
    %v900 = vsel %vm162, %v895, 0
    %902 = vmatprep.subr.bf16.mxu0 0
    %903 = vmatpush1.bf16.xpose.msra.mxu0 %v900
    %904 = vmatprep.subr.bf16.mxu0 0
    %905 = vmatpush1.bf16.xpose.msra.mxu0 0
    %906 = vmatprep.subr.bf16.mxu0 0
    %907 = vmatpush1.bf16.xpose.msra.mxu0 0
    %908 = vmatprep.subr.bf16.mxu0 0
    %909 = vmatpush1.bf16.xpose.msra.mxu0 0
    %910 = vmatprep.subr.bf16.mxu0 0
    %911 = vmatpush1.bf16.xpose.msra.mxu0 0
    %912 = vmatprep.subr.bf16.mxu0 0
    %913 = vmatpush1.bf16.xpose.msra.mxu0 0
    %914 = vmatprep.subr.bf16.mxu0 0
    %915 = vmatpush1.bf16.xpose.msra.mxu0 0
    %916 = vmatprep.subr.bf16.mxu0 0
    %917 = vmatpush1.bf16.xpose.msra.mxu0 0
    %918 = vmatprep.subr.bf16.mxu0 0
    %919 = vmatpush1.bf16.xpose.msra.mxu0 0
    %920 = vmatprep.subr.bf16.mxu0 0
    %921 = vmatpush1.bf16.xpose.msra.mxu0 0
    %922 = vmatprep.subr.bf16.mxu0 0
    %923 = vmatpush1.bf16.xpose.msra.mxu0 0
    %924 = vmatprep.subr.bf16.mxu0 0
    %925 = vmatpush1.bf16.xpose.msra.mxu0 0
    %926 = vmatprep.subr.bf16.mxu0 0
    %927 = vmatpush1.bf16.xpose.msra.mxu0 0
    %928 = vmatprep.subr.bf16.mxu0 0
    %929 = vmatpush1.bf16.xpose.msra.mxu0 0
    %930 = vmatprep.subr.bf16.mxu0 0
    %931 = vmatpush1.bf16.xpose.msra.mxu0 0
    %932 = vmatprep.subr.bf16.mxu0 0
    %933 = vmatpush1.bf16.xpose.msra.mxu0 0
    %934 = vmatprep.mubr.bf16.mxu0 0
    %935 = vmatmul.mubr.bf16.gmra.mrb[0].mxu0 %v897
    %v936 = vpop.f32.mrb[0].mxu0
    %v937 = vadd.f32 0.0, %v936
    %v938 = vpop.f32.mrb[0].mxu0
    %v939 = vpop.f32.mrb[0].mxu0
    %v940 = vpop.f32.mrb[0].mxu0
    %941 = vdwg.mxu0
    %v942 = vmul.f32 %v887, 0.35355338
    %v943 = vmul.f32 %v937, 0.35355338
    %v944 = vadd.f32 %v942, %v264
    %v945 = vadd.f32 %v943, %v268
    %v946 = vsel %vm162, %v944, -inf
    %947 = vmax.xlane.f32.xlu0 %v946
    %v948 = vpop.xlane.xlu0 %947
    %v949 = vsel %vm162, %v945, -inf
    %950 = vmax.xlane.f32.xlu0 %v949
    %v951 = vpop.xlane.xlu0 %950
    %v952 = vsub.f32 %v944, %v948
    %v953 = vsub.f32 %v945, %v951
    %v954 = vmul.f32 %v952, 1.442695
    %v955 = vpow.pop %v954
    %v956 = vmul.f32 %v953, 1.442695
    %v957 = vpow.pop %v956
    %v958 = vsel %vm162, %v955, 0.0
    %959 = vadd.xlane.f32.xlu0 %v958
    %v960 = vpop.xlane.xlu0 %959
    %v961 = vsel %vm162, %v957, 0.0
    %962 = vadd.xlane.f32.xlu0 %v961
    %v963 = vpop.xlane.xlu0 %962
    %v964 = vrcp.pop %v960
    %v965 = vrcp.pop %v963
    %v966 = vpack.c.bf16 %v955, %v955
    %v967 = vpack.c.bf16 %v957, %v957
    %968 = vrot.lane.b32.xlu0 %v158, 40
    %v969 = vpop.permute.xlu0 %968
    %v971 = vsel %vm162, %v966, 0
    %v974 = vsel %vm300, %v969, 0
    %976 = vmatprep.subr.bf16.mxu0 0
    %977 = vmatpush1.bf16.msra.mxu0 %v974
    %978 = vmatprep.subr.bf16.mxu0 0
    %979 = vmatpush1.bf16.msra.mxu0 0
    %980 = vmatprep.subr.bf16.mxu0 0
    %981 = vmatpush1.bf16.msra.mxu0 0
    %982 = vmatprep.subr.bf16.mxu0 0
    %983 = vmatpush1.bf16.msra.mxu0 0
    %984 = vmatprep.subr.bf16.mxu0 0
    %985 = vmatpush1.bf16.msra.mxu0 0
    %986 = vmatprep.subr.bf16.mxu0 0
    %987 = vmatpush1.bf16.msra.mxu0 0
    %988 = vmatprep.subr.bf16.mxu0 0
    %989 = vmatpush1.bf16.msra.mxu0 0
    %990 = vmatprep.subr.bf16.mxu0 0
    %991 = vmatpush1.bf16.msra.mxu0 0
    %992 = vmatprep.subr.bf16.mxu0 0
    %993 = vmatpush1.bf16.msra.mxu0 0
    %994 = vmatprep.subr.bf16.mxu0 0
    %995 = vmatpush1.bf16.msra.mxu0 0
    %996 = vmatprep.subr.bf16.mxu0 0
    %997 = vmatpush1.bf16.msra.mxu0 0
    %998 = vmatprep.subr.bf16.mxu0 0
    %999 = vmatpush1.bf16.msra.mxu0 0
    %1000 = vmatprep.subr.bf16.mxu0 0
    %1001 = vmatpush1.bf16.msra.mxu0 0
    %1002 = vmatprep.subr.bf16.mxu0 0
    %1003 = vmatpush1.bf16.msra.mxu0 0
    %1004 = vmatprep.subr.bf16.mxu0 0
    %1005 = vmatpush1.bf16.msra.mxu0 0
    %1006 = vmatprep.subr.bf16.mxu0 0
    %1007 = vmatpush1.bf16.msra.mxu0 0
    %1008 = vmatprep.mubr.bf16.mxu0 0
    %1009 = vmatmul.mubr.bf16.gmra.mrb[0].mxu0 %v971
    %v1010 = vpop.f32.mrb[0].mxu0
    %v1011 = vadd.f32 0.0, %v1010
    %v1012 = vpop.f32.mrb[0].mxu0
    %v1013 = vpop.f32.mrb[0].mxu0
    %v1014 = vpop.f32.mrb[0].mxu0
    %1015 = vdwg.mxu0
    %1016 = vrot.lane.b32.xlu0 %v159, 40
    %v1017 = vpop.permute.xlu0 %1016
    %v1019 = vsel %vm162, %v967, 0
    %v1022 = vsel %vm300, %v1017, 0
    %1024 = vmatprep.subr.bf16.mxu0 0
    %1025 = vmatpush1.bf16.msra.mxu0 %v1022
    %1026 = vmatprep.subr.bf16.mxu0 0
    %1027 = vmatpush1.bf16.msra.mxu0 0
    %1028 = vmatprep.subr.bf16.mxu0 0
    %1029 = vmatpush1.bf16.msra.mxu0 0
    %1030 = vmatprep.subr.bf16.mxu0 0
    %1031 = vmatpush1.bf16.msra.mxu0 0
    %1032 = vmatprep.subr.bf16.mxu0 0
    %1033 = vmatpush1.bf16.msra.mxu0 0
    %1034 = vmatprep.subr.bf16.mxu0 0
    %1035 = vmatpush1.bf16.msra.mxu0 0
    %1036 = vmatprep.subr.bf16.mxu0 0
    %1037 = vmatpush1.bf16.msra.mxu0 0
    %1038 = vmatprep.subr.bf16.mxu0 0
    %1039 = vmatpush1.bf16.msra.mxu0 0
    %1040 = vmatprep.subr.bf16.mxu0 0
    %1041 = vmatpush1.bf16.msra.mxu0 0
    %1042 = vmatprep.subr.bf16.mxu0 0
    %1043 = vmatpush1.bf16.msra.mxu0 0
    %1044 = vmatprep.subr.bf16.mxu0 0
    %1045 = vmatpush1.bf16.msra.mxu0 0
    %1046 = vmatprep.subr.bf16.mxu0 0
    %1047 = vmatpush1.bf16.msra.mxu0 0
    %1048 = vmatprep.subr.bf16.mxu0 0
    %1049 = vmatpush1.bf16.msra.mxu0 0
    %1050 = vmatprep.subr.bf16.mxu0 0
    %1051 = vmatpush1.bf16.msra.mxu0 0
    %1052 = vmatprep.subr.bf16.mxu0 0
    %1053 = vmatpush1.bf16.msra.mxu0 0
    %1054 = vmatprep.subr.bf16.mxu0 0
    %1055 = vmatpush1.bf16.msra.mxu0 0
    %1056 = vmatprep.mubr.bf16.mxu0 0
    %1057 = vmatmul.mubr.bf16.gmra.mrb[0].mxu0 %v1019
    %v1058 = vpop.f32.mrb[0].mxu0
    %v1059 = vadd.f32 0.0, %v1058
    %v1060 = vpop.f32.mrb[0].mxu0
    %v1061 = vpop.f32.mrb[0].mxu0
    %v1062 = vpop.f32.mrb[0].mxu0
    %1063 = vdwg.mxu0
    %v1064 = vmul.f32 %v1011, %v964
    %v1065 = vmul.f32 %v1059, %v965
    %1068 = vrot.lane.b32.xlu0 %v616, 8
    %v1069 = vpop.permute.xlu0 %1068
    %1070 = vrot.lane.b32.xlu0 %v617, 8
    %v1071 = vpop.permute.xlu0 %1070
    %1076 = vrot.lane.b32.xlu0 %v840, 16
    %v1077 = vpop.permute.xlu0 %1076
    %1078 = vrot.lane.b32.xlu0 %v841, 16
    %v1079 = vpop.permute.xlu0 %1078
    %1084 = vrot.lane.b32.xlu0 %v1064, 24
    %v1085 = vpop.permute.xlu0 %1084
    %1086 = vrot.lane.b32.xlu0 %v1065, 24
    %v1087 = vpop.permute.xlu0 %1086
    %v1090 = vsel %vm162, %v392, %v1069
    %v1091 = vsel %vm162, %v393, %v1071
    %vm1092 = vcmask 130048
    %v1093 = vsel %vm1092, %v1090, %v1077
    %v1094 = vsel %vm1092, %v1091, %v1079
    %vm1095 = vcmask 195584
    %v1096 = vsel %vm1095, %v1093, %v1085
    %v1097 = vsel %vm1095, %v1094, %v1087
    %v1098 = vld [vmem:[%s4] sm:$0xf]
    %v1099 = vld [vmem:[%s4 + $0x4] sm:$0xf]
    %v1100 = vld [vmem:[%s4 + $0x8] sm:$0xf]
    %v1101 = vld [vmem:[%s4 + $0xc] sm:$0xf]
    %v1102 = vpack.c.bf16 %v1097, %v1096
    %v1103 = vld [vmem:[%s5] sm:$0x1]
    %v1105 = vlaneseq
    %v1106 = vshrl.u32 %v1105, 7
    %v1107 = vsub.s32 0, %v1106
    %v1108 = vrot.slane %v1103, %v1107
    %v1114 = vunpack.c.l.b16 %v1098
    %v1115 = vunpack.c.l.b16 %v1099
    %v1116 = vunpack.c.l.b16 %v1100
    %v1117 = vunpack.c.l.b16 %v1101
    %v1118 = vpack.c.b16 %v1115, %v1114
    %v1119 = vpack.c.b16 %v1117, %v1116
    %v1123 = vsel %vm109, %v1102, 0
    %1125 = vmatprep.subr.bf16.mxu0 0
    %1126 = vmatpush1.bf16.msra.mxu0 %v1118
    %1127 = vmatprep.subr.bf16.mxu0 0
    %1128 = vmatpush1.bf16.msra.mxu0 %v1119
    %1129 = vmatprep.subr.bf16.mxu0 0
    %1130 = vmatpush1.bf16.msra.mxu0 0
    %1131 = vmatprep.subr.bf16.mxu0 0
    %1132 = vmatpush1.bf16.msra.mxu0 0
    %1133 = vmatprep.subr.bf16.mxu0 0
    %1134 = vmatpush1.bf16.msra.mxu0 0
    %1135 = vmatprep.subr.bf16.mxu0 0
    %1136 = vmatpush1.bf16.msra.mxu0 0
    %1137 = vmatprep.subr.bf16.mxu0 0
    %1138 = vmatpush1.bf16.msra.mxu0 0
    %1139 = vmatprep.subr.bf16.mxu0 0
    %1140 = vmatpush1.bf16.msra.mxu0 0
    %1141 = vmatprep.subr.bf16.mxu0 0
    %1142 = vmatpush1.bf16.msra.mxu0 0
    %1143 = vmatprep.subr.bf16.mxu0 0
    %1144 = vmatpush1.bf16.msra.mxu0 0
    %1145 = vmatprep.subr.bf16.mxu0 0
    %1146 = vmatpush1.bf16.msra.mxu0 0
    %1147 = vmatprep.subr.bf16.mxu0 0
    %1148 = vmatpush1.bf16.msra.mxu0 0
    %1149 = vmatprep.subr.bf16.mxu0 0
    %1150 = vmatpush1.bf16.msra.mxu0 0
    %1151 = vmatprep.subr.bf16.mxu0 0
    %1152 = vmatpush1.bf16.msra.mxu0 0
    %1153 = vmatprep.subr.bf16.mxu0 0
    %1154 = vmatpush1.bf16.msra.mxu0 0
    %1155 = vmatprep.subr.bf16.mxu0 0
    %1156 = vmatpush1.bf16.msra.mxu0 0
    %1157 = vmatprep.mubr.bf16.mxu0 0
    %1158 = vmatmul.mubr.bf16.gmra.mrb[0].mxu0 %v1123
    %v1159 = vpop.f32.mrb[0].mxu0
    %v1160 = vadd.f32 %v1108, %v1159
    %v1161 = vpop.f32.mrb[0].mxu0
    %v1162 = vpop.f32.mrb[0].mxu0
    %v1163 = vadd.f32 %v1108, %v1162
    %v1164 = vpop.f32.mrb[0].mxu0
    %1165 = vdwg.mxu0
    %v1166 = vadd.f32 %v1160, %v77
    %v1167 = vadd.f32 %v1163, %v78
    %v1168 = vld [vmem:[%s10] sm:$0x1]
    %v1169 = vld [vmem:[%s11] sm:$0x1]
    %v1170 = vsel %vm109, %v1166, 0.0
    %1171 = vadd.xlane.f32.xlu0 %v1170
    %v1172 = vpop.xlane.xlu0 %1171
    %v1173 = vsel %vm109, %v1167, 0.0
    %1174 = vadd.xlane.f32.xlu0 %v1173
    %v1175 = vpop.xlane.xlu0 %1174
    %v1176 = vrcp.pop 32.0
    %v1177 = vmul.f32 %v1172, %v1176
    %v1178 = vmul.f32 %v1175, %v1176
    %v1179 = vsub.f32 %v1166, %v1177
    %v1180 = vsub.f32 %v1167, %v1178
    %v1181 = vmul.f32 %v1179, %v1179
    %v1182 = vmul.f32 %v1180, %v1180
    %v1183 = vsel %vm109, %v1181, 0.0
    %1184 = vadd.xlane.f32.xlu0 %v1183
    %v1185 = vpop.xlane.xlu0 %1184
    %v1186 = vsel %vm109, %v1182, 0.0
    %1187 = vadd.xlane.f32.xlu0 %v1186
    %v1188 = vpop.xlane.xlu0 %1187
    %v1189 = vmul.f32 %v1185, %v1176
    %v1190 = vmul.f32 %v1188, %v1176
    %v1191 = vadd.f32 %v1189, 1e-05
    %v1192 = vadd.f32 %v1190, 1e-05
    %v1193 = vrsqrt.pop %v1191
    %v1194 = vrsqrt.pop %v1192
    %v1195 = vmul.f32 %v1179, %v1193
    %v1196 = vmul.f32 %v1180, %v1194
    %v1198 = vlaneseq
    %v1199 = vshrl.u32 %v1198, 7
    %v1200 = vsub.s32 0, %v1199
    %v1201 = vrot.slane %v1168, %v1200
    %v1203 = vmul.f32 %v1195, %v1201
    %v1204 = vmul.f32 %v1196, %v1201
    %v1206 = vlaneseq
    %v1207 = vshrl.u32 %v1206, 7
    %v1208 = vsub.s32 0, %v1207
    %v1209 = vrot.slane %v1169, %v1208
    %v1211 = vadd.f32 %v1203, %v1209
    %v1212 = vadd.f32 %v1204, %v1209
    %v1213 = vld [vmem:[%s6] sm:$0xf]
    %v1214 = vld [vmem:[%s6 + $0x4] sm:$0xf]
    %v1215 = vld [vmem:[%s6 + $0x8] sm:$0xf]
    %v1216 = vld [vmem:[%s6 + $0xc] sm:$0xf]
    %v1217 = vpack.c.bf16 %v1212, %v1211
    %v1218 = vld [vmem:[%s7] sm:$0x1]
    %v1220 = vlaneseq
    %v1221 = vshrl.u32 %v1220, 7
    %v1222 = vsub.s32 0, %v1221
    %v1223 = vrot.slane %v1218, %v1222
    %v1229 = vunpack.c.l.b16 %v1213
    %v1230 = vunpack.c.l.b16 %v1214
    %v1231 = vunpack.c.l.b16 %v1215
    %v1232 = vunpack.c.l.b16 %v1216
    %v1233 = vpack.c.b16 %v1230, %v1229
    %v1234 = vpack.c.b16 %v1232, %v1231
    %v1238 = vsel %vm109, %v1217, 0
    %1240 = vmatprep.subr.bf16.mxu0 0
    %1241 = vmatpush1.bf16.msra.mxu0 %v1233
    %1242 = vmatprep.subr.bf16.mxu0 0
    %1243 = vmatpush1.bf16.msra.mxu0 %v1234
    %1244 = vmatprep.subr.bf16.mxu0 0
    %1245 = vmatpush1.bf16.msra.mxu0 0
    %1246 = vmatprep.subr.bf16.mxu0 0
    %1247 = vmatpush1.bf16.msra.mxu0 0
    %1248 = vmatprep.subr.bf16.mxu0 0
    %1249 = vmatpush1.bf16.msra.mxu0 0
    %1250 = vmatprep.subr.bf16.mxu0 0
    %1251 = vmatpush1.bf16.msra.mxu0 0
    %1252 = vmatprep.subr.bf16.mxu0 0
    %1253 = vmatpush1.bf16.msra.mxu0 0
    %1254 = vmatprep.subr.bf16.mxu0 0
    %1255 = vmatpush1.bf16.msra.mxu0 0
    %1256 = vmatprep.subr.bf16.mxu0 0
    %1257 = vmatpush1.bf16.msra.mxu0 0
    %1258 = vmatprep.subr.bf16.mxu0 0
    %1259 = vmatpush1.bf16.msra.mxu0 0
    %1260 = vmatprep.subr.bf16.mxu0 0
    %1261 = vmatpush1.bf16.msra.mxu0 0
    %1262 = vmatprep.subr.bf16.mxu0 0
    %1263 = vmatpush1.bf16.msra.mxu0 0
    %1264 = vmatprep.subr.bf16.mxu0 0
    %1265 = vmatpush1.bf16.msra.mxu0 0
    %1266 = vmatprep.subr.bf16.mxu0 0
    %1267 = vmatpush1.bf16.msra.mxu0 0
    %1268 = vmatprep.subr.bf16.mxu0 0
    %1269 = vmatpush1.bf16.msra.mxu0 0
    %1270 = vmatprep.subr.bf16.mxu0 0
    %1271 = vmatpush1.bf16.msra.mxu0 0
    %1272 = vmatprep.mubr.bf16.mxu0 0
    %1273 = vmatmul.mubr.bf16.gmra.mrb[0].mxu0 %v1238
    %v1274 = vpop.f32.mrb[0].mxu0
    %v1275 = vadd.f32 %v1223, %v1274
    %v1276 = vpop.f32.mrb[0].mxu0
    %v1277 = vpop.f32.mrb[0].mxu0
    %v1278 = vadd.f32 %v1223, %v1277
    %v1279 = vpop.f32.mrb[0].mxu0
    %1280 = vdwg.mxu0
    %v1281 = vmax.f32 %v1275, 0.0
    %v1282 = vmax.f32 %v1278, 0.0
    %v1283 = vld [vmem:[%s8] sm:$0xf]
    %v1284 = vld [vmem:[%s8 + $0x4] sm:$0xf]
    %v1285 = vld [vmem:[%s8 + $0x8] sm:$0xf]
    %v1286 = vld [vmem:[%s8 + $0xc] sm:$0xf]
    %v1287 = vld [vmem:[%s8 + $0x10] sm:$0xf]
    %v1288 = vld [vmem:[%s8 + $0x14] sm:$0xf]
    %v1289 = vld [vmem:[%s8 + $0x18] sm:$0xf]
    %v1290 = vld [vmem:[%s8 + $0x1c] sm:$0xf]
    %v1291 = vpack.c.bf16 %v1282, %v1281
    %v1292 = vld [vmem:[%s9] sm:$0x1]
    %v1294 = vlaneseq
    %v1295 = vshrl.u32 %v1294, 7
    %v1296 = vsub.s32 0, %v1295
    %v1297 = vrot.slane %v1292, %v1296
    %v1307 = vunpack.c.l.b16 %v1283
    %v1308 = vunpack.c.l.b16 %v1284
    %v1309 = vunpack.c.l.b16 %v1285
    %v1310 = vunpack.c.l.b16 %v1286
    %v1311 = vunpack.c.l.b16 %v1287
    %v1312 = vunpack.c.l.b16 %v1288
    %v1313 = vunpack.c.l.b16 %v1289
    %v1314 = vunpack.c.l.b16 %v1290
    %v1315 = vpack.c.b16 %v1308, %v1307
    %v1316 = vpack.c.b16 %v1310, %v1309
    %v1317 = vpack.c.b16 %v1312, %v1311
    %v1318 = vpack.c.b16 %v1314, %v1313
    %vm1323 = vcmask 523264
    %v1325 = vsel %vm1323, %v1291, 0
    %1327 = vmatprep.subr.bf16.mxu0 0
    %1328 = vmatpush1.bf16.msra.mxu0 %v1315
    %1329 = vmatprep.subr.bf16.mxu0 0
    %1330 = vmatpush1.bf16.msra.mxu0 %v1316
    %1331 = vmatprep.subr.bf16.mxu0 0
    %1332 = vmatpush1.bf16.msra.mxu0 %v1317
    %1333 = vmatprep.subr.bf16.mxu0 0
    %1334 = vmatpush1.bf16.msra.mxu0 %v1318
    %1335 = vmatprep.subr.bf16.mxu0 0
    %1336 = vmatpush1.bf16.msra.mxu0 0
    %1337 = vmatprep.subr.bf16.mxu0 0
    %1338 = vmatpush1.bf16.msra.mxu0 0
    %1339 = vmatprep.subr.bf16.mxu0 0
    %1340 = vmatpush1.bf16.msra.mxu0 0
    %1341 = vmatprep.subr.bf16.mxu0 0
    %1342 = vmatpush1.bf16.msra.mxu0 0
    %1343 = vmatprep.subr.bf16.mxu0 0
    %1344 = vmatpush1.bf16.msra.mxu0 0
    %1345 = vmatprep.subr.bf16.mxu0 0
    %1346 = vmatpush1.bf16.msra.mxu0 0
    %1347 = vmatprep.subr.bf16.mxu0 0
    %1348 = vmatpush1.bf16.msra.mxu0 0
    %1349 = vmatprep.subr.bf16.mxu0 0
    %1350 = vmatpush1.bf16.msra.mxu0 0
    %1351 = vmatprep.subr.bf16.mxu0 0
    %1352 = vmatpush1.bf16.msra.mxu0 0
    %1353 = vmatprep.subr.bf16.mxu0 0
    %1354 = vmatpush1.bf16.msra.mxu0 0
    %1355 = vmatprep.subr.bf16.mxu0 0
    %1356 = vmatpush1.bf16.msra.mxu0 0
    %1357 = vmatprep.subr.bf16.mxu0 0
    %1358 = vmatpush1.bf16.msra.mxu0 0
    %1359 = vmatprep.mubr.bf16.mxu0 0
    %1360 = vmatmul.mubr.bf16.gmra.mrb[0].mxu0 %v1325
    %v1361 = vpop.f32.mrb[0].mxu0
    %v1362 = vadd.f32 %v1297, %v1361
    %v1363 = vpop.f32.mrb[0].mxu0
    %v1364 = vpop.f32.mrb[0].mxu0
    %v1365 = vadd.f32 %v1297, %v1364
    %v1366 = vpop.f32.mrb[0].mxu0
    %1367 = vdwg.mxu0
    %v1368 = vadd.f32 %v1362, %v1211
    %v1369 = vadd.f32 %v1365, %v1212
    %v1370 = vld [vmem:[%s12] sm:$0x1]
    %v1371 = vld [vmem:[%s13] sm:$0x1]
    %v1372 = vsel %vm109, %v1368, 0.0
    %1373 = vadd.xlane.f32.xlu0 %v1372
    %v1374 = vpop.xlane.xlu0 %1373
    %v1375 = vsel %vm109, %v1369, 0.0
    %1376 = vadd.xlane.f32.xlu0 %v1375
    %v1377 = vpop.xlane.xlu0 %1376
    %v1378 = vmul.f32 %v1374, %v1176
    %v1379 = vmul.f32 %v1377, %v1176
    %v1380 = vsub.f32 %v1368, %v1378
    %v1381 = vsub.f32 %v1369, %v1379
    %v1382 = vmul.f32 %v1380, %v1380
    %v1383 = vmul.f32 %v1381, %v1381
    %v1384 = vsel %vm109, %v1382, 0.0
    %1385 = vadd.xlane.f32.xlu0 %v1384
    %v1386 = vpop.xlane.xlu0 %1385
    %v1387 = vsel %vm109, %v1383, 0.0
    %1388 = vadd.xlane.f32.xlu0 %v1387
    %v1389 = vpop.xlane.xlu0 %1388
    %v1390 = vmul.f32 %v1386, %v1176
    %v1391 = vmul.f32 %v1389, %v1176
    %v1392 = vadd.f32 %v1390, 1e-05
    %v1393 = vadd.f32 %v1391, 1e-05
    %v1394 = vrsqrt.pop %v1392
    %v1395 = vrsqrt.pop %v1393
    %v1396 = vmul.f32 %v1380, %v1394
    %v1397 = vmul.f32 %v1381, %v1395
    %v1399 = vlaneseq
    %v1400 = vshrl.u32 %v1399, 7
    %v1401 = vsub.s32 0, %v1400
    %v1402 = vrot.slane %v1370, %v1401
    %v1404 = vmul.f32 %v1396, %v1402
    %v1405 = vmul.f32 %v1397, %v1402
    %v1407 = vlaneseq
    %v1408 = vshrl.u32 %v1407, 7
    %v1409 = vsub.s32 0, %v1408
    %v1410 = vrot.slane %v1371, %v1409
    %v1412 = vadd.f32 %v1404, %v1410
    %v1413 = vadd.f32 %v1405, %v1410
    %s1414 = scalar_lea.vmem %s2, 16
    %v1415 = vld [vmem:[%s1414] sm:$0xf]
    %v1416 = vld [vmem:[%s1414 + $0x4] sm:$0xf]
    %v1417 = vld [vmem:[%s1414 + $0x8] sm:$0xf]
    %v1418 = vld [vmem:[%s1414 + $0xc] sm:$0xf]
    %v1419 = vpack.c.bf16 %v1413, %v1412
    %s1420 = scalar_lea.vmem %s3, 1
    %v1421 = vld [vmem:[%s1420] sm:$0x1]
    %v1423 = vlaneseq
    %v1424 = vshrl.u32 %v1423, 7
    %v1425 = vsub.s32 0, %v1424
    %v1426 = vrot.slane %v1421, %v1425
    %v1432 = vunpack.c.l.b16 %v1415
    %v1433 = vunpack.c.l.b16 %v1416
    %v1434 = vunpack.c.l.b16 %v1417
    %v1435 = vunpack.c.l.b16 %v1418
    %v1436 = vpack.c.b16 %v1433, %v1432
    %v1437 = vpack.c.b16 %v1435, %v1434
    %v1441 = vsel %vm109, %v1419, 0
    %1443 = vmatprep.subr.bf16.mxu0 0
    %1444 = vmatpush1.bf16.msra.mxu0 %v1436
    %1445 = vmatprep.subr.bf16.mxu0 0
    %1446 = vmatpush1.bf16.msra.mxu0 %v1437
    %1447 = vmatprep.subr.bf16.mxu0 0
    %1448 = vmatpush1.bf16.msra.mxu0 0
    %1449 = vmatprep.subr.bf16.mxu0 0
    %1450 = vmatpush1.bf16.msra.mxu0 0
    %1451 = vmatprep.subr.bf16.mxu0 0
    %1452 = vmatpush1.bf16.msra.mxu0 0
    %1453 = vmatprep.subr.bf16.mxu0 0
    %1454 = vmatpush1.bf16.msra.mxu0 0
    %1455 = vmatprep.subr.bf16.mxu0 0
    %1456 = vmatpush1.bf16.msra.mxu0 0
    %1457 = vmatprep.subr.bf16.mxu0 0
    %1458 = vmatpush1.bf16.msra.mxu0 0
    %1459 = vmatprep.subr.bf16.mxu0 0
    %1460 = vmatpush1.bf16.msra.mxu0 0
    %1461 = vmatprep.subr.bf16.mxu0 0
    %1462 = vmatpush1.bf16.msra.mxu0 0
    %1463 = vmatprep.subr.bf16.mxu0 0
    %1464 = vmatpush1.bf16.msra.mxu0 0
    %1465 = vmatprep.subr.bf16.mxu0 0
    %1466 = vmatpush1.bf16.msra.mxu0 0
    %1467 = vmatprep.subr.bf16.mxu0 0
    %1468 = vmatpush1.bf16.msra.mxu0 0
    %1469 = vmatprep.subr.bf16.mxu0 0
    %1470 = vmatpush1.bf16.msra.mxu0 0
    %1471 = vmatprep.subr.bf16.mxu0 0
    %1472 = vmatpush1.bf16.msra.mxu0 0
    %1473 = vmatprep.subr.bf16.mxu0 0
    %1474 = vmatpush1.bf16.msra.mxu0 0
    %1475 = vmatprep.mubr.bf16.mxu0 0
    %1476 = vmatmul.mubr.bf16.gmra.mrb[0].mxu0 %v1441
    %v1477 = vpop.f32.mrb[0].mxu0
    %v1478 = vadd.f32 %v1426, %v1477
    %v1479 = vpop.f32.mrb[0].mxu0
    %v1480 = vpop.f32.mrb[0].mxu0
    %v1481 = vadd.f32 %v1426, %v1480
    %v1482 = vpop.f32.mrb[0].mxu0
    %1483 = vdwg.mxu0
    %v1484 = vpack.c.bf16 %v1481, %v1478
    %v1486 = vunpack.c.l.b16 %v1484
    %v1487 = vunpack.c.h.b16 %v1484
    %v1488 = vpack.c.b16 %v1486, %v1486
    %v1489 = vpack.c.b16 %v1487, %v1487
    %1490 = vrot.lane.b32.xlu0 %v1488, 96
    %v1491 = vpop.permute.xlu0 %1490
    %v1493 = vsel %vm162, %v1488, 0
    %v1496 = vsel %vm162, %v1491, 0
    %1498 = vmatprep.subr.bf16.mxu0 0
    %1499 = vmatpush1.bf16.xpose.msra.mxu0 %v1496
    %1500 = vmatprep.subr.bf16.mxu0 0
    %1501 = vmatpush1.bf16.xpose.msra.mxu0 0
    %1502 = vmatprep.subr.bf16.mxu0 0
    %1503 = vmatpush1.bf16.xpose.msra.mxu0 0
    %1504 = vmatprep.subr.bf16.mxu0 0
    %1505 = vmatpush1.bf16.xpose.msra.mxu0 0
    %1506 = vmatprep.subr.bf16.mxu0 0
    %1507 = vmatpush1.bf16.xpose.msra.mxu0 0
    %1508 = vmatprep.subr.bf16.mxu0 0
    %1509 = vmatpush1.bf16.xpose.msra.mxu0 0
    %1510 = vmatprep.subr.bf16.mxu0 0
    %1511 = vmatpush1.bf16.xpose.msra.mxu0 0
    %1512 = vmatprep.subr.bf16.mxu0 0
    %1513 = vmatpush1.bf16.xpose.msra.mxu0 0
    %1514 = vmatprep.subr.bf16.mxu0 0
    %1515 = vmatpush1.bf16.xpose.msra.mxu0 0
    %1516 = vmatprep.subr.bf16.mxu0 0
    %1517 = vmatpush1.bf16.xpose.msra.mxu0 0
    %1518 = vmatprep.subr.bf16.mxu0 0
    %1519 = vmatpush1.bf16.xpose.msra.mxu0 0
    %1520 = vmatprep.subr.bf16.mxu0 0
    %1521 = vmatpush1.bf16.xpose.msra.mxu0 0
    %1522 = vmatprep.subr.bf16.mxu0 0
    %1523 = vmatpush1.bf16.xpose.msra.mxu0 0
    %1524 = vmatprep.subr.bf16.mxu0 0
    %1525 = vmatpush1.bf16.xpose.msra.mxu0 0
    %1526 = vmatprep.subr.bf16.mxu0 0
    %1527 = vmatpush1.bf16.xpose.msra.mxu0 0
    %1528 = vmatprep.subr.bf16.mxu0 0
    %1529 = vmatpush1.bf16.xpose.msra.mxu0 0
    %1530 = vmatprep.mubr.bf16.mxu0 0
    %1531 = vmatmul.mubr.bf16.gmra.mrb[0].mxu0 %v1493
    %v1532 = vpop.f32.mrb[0].mxu0
    %v1533 = vadd.f32 0.0, %v1532
    %v1534 = vpop.f32.mrb[0].mxu0
    %v1535 = vpop.f32.mrb[0].mxu0
    %v1536 = vpop.f32.mrb[0].mxu0
    %1537 = vdwg.mxu0
    %1538 = vrot.lane.b32.xlu0 %v1489, 96
    %v1539 = vpop.permute.xlu0 %1538
    %v1541 = vsel %vm162, %v1489, 0
    %v1544 = vsel %vm162, %v1539, 0
    %1546 = vmatprep.subr.bf16.mxu0 0
    %1547 = vmatpush1.bf16.xpose.msra.mxu0 %v1544
    %1548 = vmatprep.subr.bf16.mxu0 0
    %1549 = vmatpush1.bf16.xpose.msra.mxu0 0
    %1550 = vmatprep.subr.bf16.mxu0 0
    %1551 = vmatpush1.bf16.xpose.msra.mxu0 0
    %1552 = vmatprep.subr.bf16.mxu0 0
    %1553 = vmatpush1.bf16.xpose.msra.mxu0 0
    %1554 = vmatprep.subr.bf16.mxu0 0
    %1555 = vmatpush1.bf16.xpose.msra.mxu0 0
    %1556 = vmatprep.subr.bf16.mxu0 0
    %1557 = vmatpush1.bf16.xpose.msra.mxu0 0
    %1558 = vmatprep.subr.bf16.mxu0 0
    %1559 = vmatpush1.bf16.xpose.msra.mxu0 0
    %1560 = vmatprep.subr.bf16.mxu0 0
    %1561 = vmatpush1.bf16.xpose.msra.mxu0 0
    %1562 = vmatprep.subr.bf16.mxu0 0
    %1563 = vmatpush1.bf16.xpose.msra.mxu0 0
    %1564 = vmatprep.subr.bf16.mxu0 0
    %1565 = vmatpush1.bf16.xpose.msra.mxu0 0
    %1566 = vmatprep.subr.bf16.mxu0 0
    %1567 = vmatpush1.bf16.xpose.msra.mxu0 0
    %1568 = vmatprep.subr.bf16.mxu0 0
    %1569 = vmatpush1.bf16.xpose.msra.mxu0 0
    %1570 = vmatprep.subr.bf16.mxu0 0
    %1571 = vmatpush1.bf16.xpose.msra.mxu0 0
    %1572 = vmatprep.subr.bf16.mxu0 0
    %1573 = vmatpush1.bf16.xpose.msra.mxu0 0
    %1574 = vmatprep.subr.bf16.mxu0 0
    %1575 = vmatpush1.bf16.xpose.msra.mxu0 0
    %1576 = vmatprep.subr.bf16.mxu0 0
    %1577 = vmatpush1.bf16.xpose.msra.mxu0 0
    %1578 = vmatprep.mubr.bf16.mxu0 0
    %1579 = vmatmul.mubr.bf16.gmra.mrb[0].mxu0 %v1541
    %v1580 = vpop.f32.mrb[0].mxu0
    %v1581 = vadd.f32 0.0, %v1580
    %v1582 = vpop.f32.mrb[0].mxu0
    %v1583 = vpop.f32.mrb[0].mxu0
    %v1584 = vpop.f32.mrb[0].mxu0
    %1585 = vdwg.mxu0
    %v1586 = vmul.f32 %v1533, 0.35355338
    %v1587 = vmul.f32 %v1581, 0.35355338
    %v1588 = vadd.f32 %v1586, %v264
    %v1589 = vadd.f32 %v1587, %v268
    %v1590 = vsel %vm162, %v1588, -inf
    %1591 = vmax.xlane.f32.xlu0 %v1590
    %v1592 = vpop.xlane.xlu0 %1591
    %v1593 = vsel %vm162, %v1589, -inf
    %1594 = vmax.xlane.f32.xlu0 %v1593
    %v1595 = vpop.xlane.xlu0 %1594
    %v1596 = vsub.f32 %v1588, %v1592
    %v1597 = vsub.f32 %v1589, %v1595
    %v1598 = vmul.f32 %v1596, 1.442695
    %v1599 = vpow.pop %v1598
    %v1600 = vmul.f32 %v1597, 1.442695
    %v1601 = vpow.pop %v1600
    %v1602 = vsel %vm162, %v1599, 0.0
    %1603 = vadd.xlane.f32.xlu0 %v1602
    %v1604 = vpop.xlane.xlu0 %1603
    %v1605 = vsel %vm162, %v1601, 0.0
    %1606 = vadd.xlane.f32.xlu0 %v1605
    %v1607 = vpop.xlane.xlu0 %1606
    %v1608 = vrcp.pop %v1604
    %v1609 = vrcp.pop %v1607
    %v1610 = vpack.c.bf16 %v1599, %v1599
    %v1611 = vpack.c.bf16 %v1601, %v1601
    %1612 = vrot.lane.b32.xlu0 %v1488, 64
    %v1613 = vpop.permute.xlu0 %1612
    %v1615 = vsel %vm162, %v1610, 0
    %v1618 = vsel %vm300, %v1613, 0
    %1620 = vmatprep.subr.bf16.mxu0 0
    %1621 = vmatpush1.bf16.msra.mxu0 %v1618
    %1622 = vmatprep.subr.bf16.mxu0 0
    %1623 = vmatpush1.bf16.msra.mxu0 0
    %1624 = vmatprep.subr.bf16.mxu0 0
    %1625 = vmatpush1.bf16.msra.mxu0 0
    %1626 = vmatprep.subr.bf16.mxu0 0
    %1627 = vmatpush1.bf16.msra.mxu0 0
    %1628 = vmatprep.subr.bf16.mxu0 0
    %1629 = vmatpush1.bf16.msra.mxu0 0
    %1630 = vmatprep.subr.bf16.mxu0 0
    %1631 = vmatpush1.bf16.msra.mxu0 0
    %1632 = vmatprep.subr.bf16.mxu0 0
    %1633 = vmatpush1.bf16.msra.mxu0 0
    %1634 = vmatprep.subr.bf16.mxu0 0
    %1635 = vmatpush1.bf16.msra.mxu0 0
    %1636 = vmatprep.subr.bf16.mxu0 0
    %1637 = vmatpush1.bf16.msra.mxu0 0
    %1638 = vmatprep.subr.bf16.mxu0 0
    %1639 = vmatpush1.bf16.msra.mxu0 0
    %1640 = vmatprep.subr.bf16.mxu0 0
    %1641 = vmatpush1.bf16.msra.mxu0 0
    %1642 = vmatprep.subr.bf16.mxu0 0
    %1643 = vmatpush1.bf16.msra.mxu0 0
    %1644 = vmatprep.subr.bf16.mxu0 0
    %1645 = vmatpush1.bf16.msra.mxu0 0
    %1646 = vmatprep.subr.bf16.mxu0 0
    %1647 = vmatpush1.bf16.msra.mxu0 0
    %1648 = vmatprep.subr.bf16.mxu0 0
    %1649 = vmatpush1.bf16.msra.mxu0 0
    %1650 = vmatprep.subr.bf16.mxu0 0
    %1651 = vmatpush1.bf16.msra.mxu0 0
    %1652 = vmatprep.mubr.bf16.mxu0 0
    %1653 = vmatmul.mubr.bf16.gmra.mrb[0].mxu0 %v1615
    %v1654 = vpop.f32.mrb[0].mxu0
    %v1655 = vadd.f32 0.0, %v1654
    %v1656 = vpop.f32.mrb[0].mxu0
    %v1657 = vpop.f32.mrb[0].mxu0
    %v1658 = vpop.f32.mrb[0].mxu0
    %1659 = vdwg.mxu0
    %1660 = vrot.lane.b32.xlu0 %v1489, 64
    %v1661 = vpop.permute.xlu0 %1660
    %v1663 = vsel %vm162, %v1611, 0
    %v1666 = vsel %vm300, %v1661, 0
    %1668 = vmatprep.subr.bf16.mxu0 0
    %1669 = vmatpush1.bf16.msra.mxu0 %v1666
    %1670 = vmatprep.subr.bf16.mxu0 0
    %1671 = vmatpush1.bf16.msra.mxu0 0
    %1672 = vmatprep.subr.bf16.mxu0 0
    %1673 = vmatpush1.bf16.msra.mxu0 0
    %1674 = vmatprep.subr.bf16.mxu0 0
    %1675 = vmatpush1.bf16.msra.mxu0 0
    %1676 = vmatprep.subr.bf16.mxu0 0
    %1677 = vmatpush1.bf16.msra.mxu0 0
    %1678 = vmatprep.subr.bf16.mxu0 0
    %1679 = vmatpush1.bf16.msra.mxu0 0
    %1680 = vmatprep.subr.bf16.mxu0 0
    %1681 = vmatpush1.bf16.msra.mxu0 0
    %1682 = vmatprep.subr.bf16.mxu0 0
    %1683 = vmatpush1.bf16.msra.mxu0 0
    %1684 = vmatprep.subr.bf16.mxu0 0
    %1685 = vmatpush1.bf16.msra.mxu0 0
    %1686 = vmatprep.subr.bf16.mxu0 0
    %1687 = vmatpush1.bf16.msra.mxu0 0
    %1688 = vmatprep.subr.bf16.mxu0 0
    %1689 = vmatpush1.bf16.msra.mxu0 0
    %1690 = vmatprep.subr.bf16.mxu0 0
    %1691 = vmatpush1.bf16.msra.mxu0 0
    %1692 = vmatprep.subr.bf16.mxu0 0
    %1693 = vmatpush1.bf16.msra.mxu0 0
    %1694 = vmatprep.subr.bf16.mxu0 0
    %1695 = vmatpush1.bf16.msra.mxu0 0
    %1696 = vmatprep.subr.bf16.mxu0 0
    %1697 = vmatpush1.bf16.msra.mxu0 0
    %1698 = vmatprep.subr.bf16.mxu0 0
    %1699 = vmatpush1.bf16.msra.mxu0 0
    %1700 = vmatprep.mubr.bf16.mxu0 0
    %1701 = vmatmul.mubr.bf16.gmra.mrb[0].mxu0 %v1663
    %v1702 = vpop.f32.mrb[0].mxu0
    %v1703 = vadd.f32 0.0, %v1702
    %v1704 = vpop.f32.mrb[0].mxu0
    %v1705 = vpop.f32.mrb[0].mxu0
    %v1706 = vpop.f32.mrb[0].mxu0
    %1707 = vdwg.mxu0
    %v1708 = vmul.f32 %v1655, %v1608
    %v1709 = vmul.f32 %v1703, %v1609
    %1710 = vrot.lane.b32.xlu0 %v1488, 120
    %v1711 = vpop.permute.xlu0 %1710
    %1712 = vrot.lane.b32.xlu0 %v1488, 88
    %v1713 = vpop.permute.xlu0 %1712
    %v1715 = vsel %vm162, %v1711, 0
    %v1718 = vsel %vm162, %v1713, 0
    %1720 = vmatprep.subr.bf16.mxu0 0
    %1721 = vmatpush1.bf16.xpose.msra.mxu0 %v1718
    %1722 = vmatprep.subr.bf16.mxu0 0
    %1723 = vmatpush1.bf16.xpose.msra.mxu0 0
    %1724 = vmatprep.subr.bf16.mxu0 0
    %1725 = vmatpush1.bf16.xpose.msra.mxu0 0
    %1726 = vmatprep.subr.bf16.mxu0 0
    %1727 = vmatpush1.bf16.xpose.msra.mxu0 0
    %1728 = vmatprep.subr.bf16.mxu0 0
    %1729 = vmatpush1.bf16.xpose.msra.mxu0 0
    %1730 = vmatprep.subr.bf16.mxu0 0
    %1731 = vmatpush1.bf16.xpose.msra.mxu0 0
    %1732 = vmatprep.subr.bf16.mxu0 0
    %1733 = vmatpush1.bf16.xpose.msra.mxu0 0
    %1734 = vmatprep.subr.bf16.mxu0 0
    %1735 = vmatpush1.bf16.xpose.msra.mxu0 0
    %1736 = vmatprep.subr.bf16.mxu0 0
    %1737 = vmatpush1.bf16.xpose.msra.mxu0 0
    %1738 = vmatprep.subr.bf16.mxu0 0
    %1739 = vmatpush1.bf16.xpose.msra.mxu0 0
    %1740 = vmatprep.subr.bf16.mxu0 0
    %1741 = vmatpush1.bf16.xpose.msra.mxu0 0
    %1742 = vmatprep.subr.bf16.mxu0 0
    %1743 = vmatpush1.bf16.xpose.msra.mxu0 0
    %1744 = vmatprep.subr.bf16.mxu0 0
    %1745 = vmatpush1.bf16.xpose.msra.mxu0 0
    %1746 = vmatprep.subr.bf16.mxu0 0
    %1747 = vmatpush1.bf16.xpose.msra.mxu0 0
    %1748 = vmatprep.subr.bf16.mxu0 0
    %1749 = vmatpush1.bf16.xpose.msra.mxu0 0
    %1750 = vmatprep.subr.bf16.mxu0 0
    %1751 = vmatpush1.bf16.xpose.msra.mxu0 0
    %1752 = vmatprep.mubr.bf16.mxu0 0
    %1753 = vmatmul.mubr.bf16.gmra.mrb[0].mxu0 %v1715
    %v1754 = vpop.f32.mrb[0].mxu0
    %v1755 = vadd.f32 0.0, %v1754
    %v1756 = vpop.f32.mrb[0].mxu0
    %v1757 = vpop.f32.mrb[0].mxu0
    %v1758 = vpop.f32.mrb[0].mxu0
    %1759 = vdwg.mxu0
    %1760 = vrot.lane.b32.xlu0 %v1489, 120
    %v1761 = vpop.permute.xlu0 %1760
    %1762 = vrot.lane.b32.xlu0 %v1489, 88
    %v1763 = vpop.permute.xlu0 %1762
    %v1765 = vsel %vm162, %v1761, 0
    %v1768 = vsel %vm162, %v1763, 0
    %1770 = vmatprep.subr.bf16.mxu0 0
    %1771 = vmatpush1.bf16.xpose.msra.mxu0 %v1768
    %1772 = vmatprep.subr.bf16.mxu0 0
    %1773 = vmatpush1.bf16.xpose.msra.mxu0 0
    %1774 = vmatprep.subr.bf16.mxu0 0
    %1775 = vmatpush1.bf16.xpose.msra.mxu0 0
    %1776 = vmatprep.subr.bf16.mxu0 0
    %1777 = vmatpush1.bf16.xpose.msra.mxu0 0
    %1778 = vmatprep.subr.bf16.mxu0 0
    %1779 = vmatpush1.bf16.xpose.msra.mxu0 0
    %1780 = vmatprep.subr.bf16.mxu0 0
    %1781 = vmatpush1.bf16.xpose.msra.mxu0 0
    %1782 = vmatprep.subr.bf16.mxu0 0
    %1783 = vmatpush1.bf16.xpose.msra.mxu0 0
    %1784 = vmatprep.subr.bf16.mxu0 0
    %1785 = vmatpush1.bf16.xpose.msra.mxu0 0
    %1786 = vmatprep.subr.bf16.mxu0 0
    %1787 = vmatpush1.bf16.xpose.msra.mxu0 0
    %1788 = vmatprep.subr.bf16.mxu0 0
    %1789 = vmatpush1.bf16.xpose.msra.mxu0 0
    %1790 = vmatprep.subr.bf16.mxu0 0
    %1791 = vmatpush1.bf16.xpose.msra.mxu0 0
    %1792 = vmatprep.subr.bf16.mxu0 0
    %1793 = vmatpush1.bf16.xpose.msra.mxu0 0
    %1794 = vmatprep.subr.bf16.mxu0 0
    %1795 = vmatpush1.bf16.xpose.msra.mxu0 0
    %1796 = vmatprep.subr.bf16.mxu0 0
    %1797 = vmatpush1.bf16.xpose.msra.mxu0 0
    %1798 = vmatprep.subr.bf16.mxu0 0
    %1799 = vmatpush1.bf16.xpose.msra.mxu0 0
    %1800 = vmatprep.subr.bf16.mxu0 0
    %1801 = vmatpush1.bf16.xpose.msra.mxu0 0
    %1802 = vmatprep.mubr.bf16.mxu0 0
    %1803 = vmatmul.mubr.bf16.gmra.mrb[0].mxu0 %v1765
    %v1804 = vpop.f32.mrb[0].mxu0
    %v1805 = vadd.f32 0.0, %v1804
    %v1806 = vpop.f32.mrb[0].mxu0
    %v1807 = vpop.f32.mrb[0].mxu0
    %v1808 = vpop.f32.mrb[0].mxu0
    %1809 = vdwg.mxu0
    %v1810 = vmul.f32 %v1755, 0.35355338
    %v1811 = vmul.f32 %v1805, 0.35355338
    %v1812 = vadd.f32 %v1810, %v264
    %v1813 = vadd.f32 %v1811, %v268
    %v1814 = vsel %vm162, %v1812, -inf
    %1815 = vmax.xlane.f32.xlu0 %v1814
    %v1816 = vpop.xlane.xlu0 %1815
    %v1817 = vsel %vm162, %v1813, -inf
    %1818 = vmax.xlane.f32.xlu0 %v1817
    %v1819 = vpop.xlane.xlu0 %1818
    %v1820 = vsub.f32 %v1812, %v1816
    %v1821 = vsub.f32 %v1813, %v1819
    %v1822 = vmul.f32 %v1820, 1.442695
    %v1823 = vpow.pop %v1822
    %v1824 = vmul.f32 %v1821, 1.442695
    %v1825 = vpow.pop %v1824
    %v1826 = vsel %vm162, %v1823, 0.0
    %1827 = vadd.xlane.f32.xlu0 %v1826
    %v1828 = vpop.xlane.xlu0 %1827
    %v1829 = vsel %vm162, %v1825, 0.0
    %1830 = vadd.xlane.f32.xlu0 %v1829
    %v1831 = vpop.xlane.xlu0 %1830
    %v1832 = vrcp.pop %v1828
    %v1833 = vrcp.pop %v1831
    %v1834 = vpack.c.bf16 %v1823, %v1823
    %v1835 = vpack.c.bf16 %v1825, %v1825
    %1836 = vrot.lane.b32.xlu0 %v1488, 56
    %v1837 = vpop.permute.xlu0 %1836
    %v1839 = vsel %vm162, %v1834, 0
    %v1842 = vsel %vm300, %v1837, 0
    %1844 = vmatprep.subr.bf16.mxu0 0
    %1845 = vmatpush1.bf16.msra.mxu0 %v1842
    %1846 = vmatprep.subr.bf16.mxu0 0
    %1847 = vmatpush1.bf16.msra.mxu0 0
    %1848 = vmatprep.subr.bf16.mxu0 0
    %1849 = vmatpush1.bf16.msra.mxu0 0
    %1850 = vmatprep.subr.bf16.mxu0 0
    %1851 = vmatpush1.bf16.msra.mxu0 0
    %1852 = vmatprep.subr.bf16.mxu0 0
    %1853 = vmatpush1.bf16.msra.mxu0 0
    %1854 = vmatprep.subr.bf16.mxu0 0
    %1855 = vmatpush1.bf16.msra.mxu0 0
    %1856 = vmatprep.subr.bf16.mxu0 0
    %1857 = vmatpush1.bf16.msra.mxu0 0
    %1858 = vmatprep.subr.bf16.mxu0 0
    %1859 = vmatpush1.bf16.msra.mxu0 0
    %1860 = vmatprep.subr.bf16.mxu0 0
    %1861 = vmatpush1.bf16.msra.mxu0 0
    %1862 = vmatprep.subr.bf16.mxu0 0
    %1863 = vmatpush1.bf16.msra.mxu0 0
    %1864 = vmatprep.subr.bf16.mxu0 0
    %1865 = vmatpush1.bf16.msra.mxu0 0
    %1866 = vmatprep.subr.bf16.mxu0 0
    %1867 = vmatpush1.bf16.msra.mxu0 0
    %1868 = vmatprep.subr.bf16.mxu0 0
    %1869 = vmatpush1.bf16.msra.mxu0 0
    %1870 = vmatprep.subr.bf16.mxu0 0
    %1871 = vmatpush1.bf16.msra.mxu0 0
    %1872 = vmatprep.subr.bf16.mxu0 0
    %1873 = vmatpush1.bf16.msra.mxu0 0
    %1874 = vmatprep.subr.bf16.mxu0 0
    %1875 = vmatpush1.bf16.msra.mxu0 0
    %1876 = vmatprep.mubr.bf16.mxu0 0
    %1877 = vmatmul.mubr.bf16.gmra.mrb[0].mxu0 %v1839
    %v1878 = vpop.f32.mrb[0].mxu0
    %v1879 = vadd.f32 0.0, %v1878
    %v1880 = vpop.f32.mrb[0].mxu0
    %v1881 = vpop.f32.mrb[0].mxu0
    %v1882 = vpop.f32.mrb[0].mxu0
    %1883 = vdwg.mxu0
    %1884 = vrot.lane.b32.xlu0 %v1489, 56
    %v1885 = vpop.permute.xlu0 %1884
    %v1887 = vsel %vm162, %v1835, 0
    %v1890 = vsel %vm300, %v1885, 0
    %1892 = vmatprep.subr.bf16.mxu0 0
    %1893 = vmatpush1.bf16.msra.mxu0 %v1890
    %1894 = vmatprep.subr.bf16.mxu0 0
    %1895 = vmatpush1.bf16.msra.mxu0 0
    %1896 = vmatprep.subr.bf16.mxu0 0
    %1897 = vmatpush1.bf16.msra.mxu0 0
    %1898 = vmatprep.subr.bf16.mxu0 0
    %1899 = vmatpush1.bf16.msra.mxu0 0
    %1900 = vmatprep.subr.bf16.mxu0 0
    %1901 = vmatpush1.bf16.msra.mxu0 0
    %1902 = vmatprep.subr.bf16.mxu0 0
    %1903 = vmatpush1.bf16.msra.mxu0 0
    %1904 = vmatprep.subr.bf16.mxu0 0
    %1905 = vmatpush1.bf16.msra.mxu0 0
    %1906 = vmatprep.subr.bf16.mxu0 0
    %1907 = vmatpush1.bf16.msra.mxu0 0
    %1908 = vmatprep.subr.bf16.mxu0 0
    %1909 = vmatpush1.bf16.msra.mxu0 0
    %1910 = vmatprep.subr.bf16.mxu0 0
    %1911 = vmatpush1.bf16.msra.mxu0 0
    %1912 = vmatprep.subr.bf16.mxu0 0
    %1913 = vmatpush1.bf16.msra.mxu0 0
    %1914 = vmatprep.subr.bf16.mxu0 0
    %1915 = vmatpush1.bf16.msra.mxu0 0
    %1916 = vmatprep.subr.bf16.mxu0 0
    %1917 = vmatpush1.bf16.msra.mxu0 0
    %1918 = vmatprep.subr.bf16.mxu0 0
    %1919 = vmatpush1.bf16.msra.mxu0 0
    %1920 = vmatprep.subr.bf16.mxu0 0
    %1921 = vmatpush1.bf16.msra.mxu0 0
    %1922 = vmatprep.subr.bf16.mxu0 0
    %1923 = vmatpush1.bf16.msra.mxu0 0
    %1924 = vmatprep.mubr.bf16.mxu0 0
    %1925 = vmatmul.mubr.bf16.gmra.mrb[0].mxu0 %v1887
    %v1926 = vpop.f32.mrb[0].mxu0
    %v1927 = vadd.f32 0.0, %v1926
    %v1928 = vpop.f32.mrb[0].mxu0
    %v1929 = vpop.f32.mrb[0].mxu0
    %v1930 = vpop.f32.mrb[0].mxu0
    %1931 = vdwg.mxu0
    %v1932 = vmul.f32 %v1879, %v1832
    %v1933 = vmul.f32 %v1927, %v1833
    %1934 = vrot.lane.b32.xlu0 %v1488, 112
    %v1935 = vpop.permute.xlu0 %1934
    %1936 = vrot.lane.b32.xlu0 %v1488, 80
    %v1937 = vpop.permute.xlu0 %1936
    %v1939 = vsel %vm162, %v1935, 0
    %v1942 = vsel %vm162, %v1937, 0
    %1944 = vmatprep.subr.bf16.mxu0 0
    %1945 = vmatpush1.bf16.xpose.msra.mxu0 %v1942
    %1946 = vmatprep.subr.bf16.mxu0 0
    %1947 = vmatpush1.bf16.xpose.msra.mxu0 0
    %1948 = vmatprep.subr.bf16.mxu0 0
    %1949 = vmatpush1.bf16.xpose.msra.mxu0 0
    %1950 = vmatprep.subr.bf16.mxu0 0
    %1951 = vmatpush1.bf16.xpose.msra.mxu0 0
    %1952 = vmatprep.subr.bf16.mxu0 0
    %1953 = vmatpush1.bf16.xpose.msra.mxu0 0
    %1954 = vmatprep.subr.bf16.mxu0 0
    %1955 = vmatpush1.bf16.xpose.msra.mxu0 0
    %1956 = vmatprep.subr.bf16.mxu0 0
    %1957 = vmatpush1.bf16.xpose.msra.mxu0 0
    %1958 = vmatprep.subr.bf16.mxu0 0
    %1959 = vmatpush1.bf16.xpose.msra.mxu0 0
    %1960 = vmatprep.subr.bf16.mxu0 0
    %1961 = vmatpush1.bf16.xpose.msra.mxu0 0
    %1962 = vmatprep.subr.bf16.mxu0 0
    %1963 = vmatpush1.bf16.xpose.msra.mxu0 0
    %1964 = vmatprep.subr.bf16.mxu0 0
    %1965 = vmatpush1.bf16.xpose.msra.mxu0 0
    %1966 = vmatprep.subr.bf16.mxu0 0
    %1967 = vmatpush1.bf16.xpose.msra.mxu0 0
    %1968 = vmatprep.subr.bf16.mxu0 0
    %1969 = vmatpush1.bf16.xpose.msra.mxu0 0
    %1970 = vmatprep.subr.bf16.mxu0 0
    %1971 = vmatpush1.bf16.xpose.msra.mxu0 0
    %1972 = vmatprep.subr.bf16.mxu0 0
    %1973 = vmatpush1.bf16.xpose.msra.mxu0 0
    %1974 = vmatprep.subr.bf16.mxu0 0
    %1975 = vmatpush1.bf16.xpose.msra.mxu0 0
    %1976 = vmatprep.mubr.bf16.mxu0 0
    %1977 = vmatmul.mubr.bf16.gmra.mrb[0].mxu0 %v1939
    %v1978 = vpop.f32.mrb[0].mxu0
    %v1979 = vadd.f32 0.0, %v1978
    %v1980 = vpop.f32.mrb[0].mxu0
    %v1981 = vpop.f32.mrb[0].mxu0
    %v1982 = vpop.f32.mrb[0].mxu0
    %1983 = vdwg.mxu0
    %1984 = vrot.lane.b32.xlu0 %v1489, 112
    %v1985 = vpop.permute.xlu0 %1984
    %1986 = vrot.lane.b32.xlu0 %v1489, 80
    %v1987 = vpop.permute.xlu0 %1986
    %v1989 = vsel %vm162, %v1985, 0
    %v1992 = vsel %vm162, %v1987, 0
    %1994 = vmatprep.subr.bf16.mxu0 0
    %1995 = vmatpush1.bf16.xpose.msra.mxu0 %v1992
    %1996 = vmatprep.subr.bf16.mxu0 0
    %1997 = vmatpush1.bf16.xpose.msra.mxu0 0
    %1998 = vmatprep.subr.bf16.mxu0 0
    %1999 = vmatpush1.bf16.xpose.msra.mxu0 0
    %2000 = vmatprep.subr.bf16.mxu0 0
    %2001 = vmatpush1.bf16.xpose.msra.mxu0 0
    %2002 = vmatprep.subr.bf16.mxu0 0
    %2003 = vmatpush1.bf16.xpose.msra.mxu0 0
    %2004 = vmatprep.subr.bf16.mxu0 0
    %2005 = vmatpush1.bf16.xpose.msra.mxu0 0
    %2006 = vmatprep.subr.bf16.mxu0 0
    %2007 = vmatpush1.bf16.xpose.msra.mxu0 0
    %2008 = vmatprep.subr.bf16.mxu0 0
    %2009 = vmatpush1.bf16.xpose.msra.mxu0 0
    %2010 = vmatprep.subr.bf16.mxu0 0
    %2011 = vmatpush1.bf16.xpose.msra.mxu0 0
    %2012 = vmatprep.subr.bf16.mxu0 0
    %2013 = vmatpush1.bf16.xpose.msra.mxu0 0
    %2014 = vmatprep.subr.bf16.mxu0 0
    %2015 = vmatpush1.bf16.xpose.msra.mxu0 0
    %2016 = vmatprep.subr.bf16.mxu0 0
    %2017 = vmatpush1.bf16.xpose.msra.mxu0 0
    %2018 = vmatprep.subr.bf16.mxu0 0
    %2019 = vmatpush1.bf16.xpose.msra.mxu0 0
    %2020 = vmatprep.subr.bf16.mxu0 0
    %2021 = vmatpush1.bf16.xpose.msra.mxu0 0
    %2022 = vmatprep.subr.bf16.mxu0 0
    %2023 = vmatpush1.bf16.xpose.msra.mxu0 0
    %2024 = vmatprep.subr.bf16.mxu0 0
    %2025 = vmatpush1.bf16.xpose.msra.mxu0 0
    %2026 = vmatprep.mubr.bf16.mxu0 0
    %2027 = vmatmul.mubr.bf16.gmra.mrb[0].mxu0 %v1989
    %v2028 = vpop.f32.mrb[0].mxu0
    %v2029 = vadd.f32 0.0, %v2028
    %v2030 = vpop.f32.mrb[0].mxu0
    %v2031 = vpop.f32.mrb[0].mxu0
    %v2032 = vpop.f32.mrb[0].mxu0
    %2033 = vdwg.mxu0
    %v2034 = vmul.f32 %v1979, 0.35355338
    %v2035 = vmul.f32 %v2029, 0.35355338
    %v2036 = vadd.f32 %v2034, %v264
    %v2037 = vadd.f32 %v2035, %v268
    %v2038 = vsel %vm162, %v2036, -inf
    %2039 = vmax.xlane.f32.xlu0 %v2038
    %v2040 = vpop.xlane.xlu0 %2039
    %v2041 = vsel %vm162, %v2037, -inf
    %2042 = vmax.xlane.f32.xlu0 %v2041
    %v2043 = vpop.xlane.xlu0 %2042
    %v2044 = vsub.f32 %v2036, %v2040
    %v2045 = vsub.f32 %v2037, %v2043
    %v2046 = vmul.f32 %v2044, 1.442695
    %v2047 = vpow.pop %v2046
    %v2048 = vmul.f32 %v2045, 1.442695
    %v2049 = vpow.pop %v2048
    %v2050 = vsel %vm162, %v2047, 0.0
    %2051 = vadd.xlane.f32.xlu0 %v2050
    %v2052 = vpop.xlane.xlu0 %2051
    %v2053 = vsel %vm162, %v2049, 0.0
    %2054 = vadd.xlane.f32.xlu0 %v2053
    %v2055 = vpop.xlane.xlu0 %2054
    %v2056 = vrcp.pop %v2052
    %v2057 = vrcp.pop %v2055
    %v2058 = vpack.c.bf16 %v2047, %v2047
    %v2059 = vpack.c.bf16 %v2049, %v2049
    %2060 = vrot.lane.b32.xlu0 %v1488, 48
    %v2061 = vpop.permute.xlu0 %2060
    %v2063 = vsel %vm162, %v2058, 0
    %v2066 = vsel %vm300, %v2061, 0
    %2068 = vmatprep.subr.bf16.mxu0 0
    %2069 = vmatpush1.bf16.msra.mxu0 %v2066
    %2070 = vmatprep.subr.bf16.mxu0 0
    %2071 = vmatpush1.bf16.msra.mxu0 0
    %2072 = vmatprep.subr.bf16.mxu0 0
    %2073 = vmatpush1.bf16.msra.mxu0 0
    %2074 = vmatprep.subr.bf16.mxu0 0
    %2075 = vmatpush1.bf16.msra.mxu0 0
    %2076 = vmatprep.subr.bf16.mxu0 0
    %2077 = vmatpush1.bf16.msra.mxu0 0
    %2078 = vmatprep.subr.bf16.mxu0 0
    %2079 = vmatpush1.bf16.msra.mxu0 0
    %2080 = vmatprep.subr.bf16.mxu0 0
    %2081 = vmatpush1.bf16.msra.mxu0 0
    %2082 = vmatprep.subr.bf16.mxu0 0
    %2083 = vmatpush1.bf16.msra.mxu0 0
    %2084 = vmatprep.subr.bf16.mxu0 0
    %2085 = vmatpush1.bf16.msra.mxu0 0
    %2086 = vmatprep.subr.bf16.mxu0 0
    %2087 = vmatpush1.bf16.msra.mxu0 0
    %2088 = vmatprep.subr.bf16.mxu0 0
    %2089 = vmatpush1.bf16.msra.mxu0 0
    %2090 = vmatprep.subr.bf16.mxu0 0
    %2091 = vmatpush1.bf16.msra.mxu0 0
    %2092 = vmatprep.subr.bf16.mxu0 0
    %2093 = vmatpush1.bf16.msra.mxu0 0
    %2094 = vmatprep.subr.bf16.mxu0 0
    %2095 = vmatpush1.bf16.msra.mxu0 0
    %2096 = vmatprep.subr.bf16.mxu0 0
    %2097 = vmatpush1.bf16.msra.mxu0 0
    %2098 = vmatprep.subr.bf16.mxu0 0
    %2099 = vmatpush1.bf16.msra.mxu0 0
    %2100 = vmatprep.mubr.bf16.mxu0 0
    %2101 = vmatmul.mubr.bf16.gmra.mrb[0].mxu0 %v2063
    %v2102 = vpop.f32.mrb[0].mxu0
    %v2103 = vadd.f32 0.0, %v2102
    %v2104 = vpop.f32.mrb[0].mxu0
    %v2105 = vpop.f32.mrb[0].mxu0
    %v2106 = vpop.f32.mrb[0].mxu0
    %2107 = vdwg.mxu0
    %2108 = vrot.lane.b32.xlu0 %v1489, 48
    %v2109 = vpop.permute.xlu0 %2108
    %v2111 = vsel %vm162, %v2059, 0
    %v2114 = vsel %vm300, %v2109, 0
    %2116 = vmatprep.subr.bf16.mxu0 0
    %2117 = vmatpush1.bf16.msra.mxu0 %v2114
    %2118 = vmatprep.subr.bf16.mxu0 0
    %2119 = vmatpush1.bf16.msra.mxu0 0
    %2120 = vmatprep.subr.bf16.mxu0 0
    %2121 = vmatpush1.bf16.msra.mxu0 0
    %2122 = vmatprep.subr.bf16.mxu0 0
    %2123 = vmatpush1.bf16.msra.mxu0 0
    %2124 = vmatprep.subr.bf16.mxu0 0
    %2125 = vmatpush1.bf16.msra.mxu0 0
    %2126 = vmatprep.subr.bf16.mxu0 0
    %2127 = vmatpush1.bf16.msra.mxu0 0
    %2128 = vmatprep.subr.bf16.mxu0 0
    %2129 = vmatpush1.bf16.msra.mxu0 0
    %2130 = vmatprep.subr.bf16.mxu0 0
    %2131 = vmatpush1.bf16.msra.mxu0 0
    %2132 = vmatprep.subr.bf16.mxu0 0
    %2133 = vmatpush1.bf16.msra.mxu0 0
    %2134 = vmatprep.subr.bf16.mxu0 0
    %2135 = vmatpush1.bf16.msra.mxu0 0
    %2136 = vmatprep.subr.bf16.mxu0 0
    %2137 = vmatpush1.bf16.msra.mxu0 0
    %2138 = vmatprep.subr.bf16.mxu0 0
    %2139 = vmatpush1.bf16.msra.mxu0 0
    %2140 = vmatprep.subr.bf16.mxu0 0
    %2141 = vmatpush1.bf16.msra.mxu0 0
    %2142 = vmatprep.subr.bf16.mxu0 0
    %2143 = vmatpush1.bf16.msra.mxu0 0
    %2144 = vmatprep.subr.bf16.mxu0 0
    %2145 = vmatpush1.bf16.msra.mxu0 0
    %2146 = vmatprep.subr.bf16.mxu0 0
    %2147 = vmatpush1.bf16.msra.mxu0 0
    %2148 = vmatprep.mubr.bf16.mxu0 0
    %2149 = vmatmul.mubr.bf16.gmra.mrb[0].mxu0 %v2111
    %v2150 = vpop.f32.mrb[0].mxu0
    %v2151 = vadd.f32 0.0, %v2150
    %v2152 = vpop.f32.mrb[0].mxu0
    %v2153 = vpop.f32.mrb[0].mxu0
    %v2154 = vpop.f32.mrb[0].mxu0
    %2155 = vdwg.mxu0
    %v2156 = vmul.f32 %v2103, %v2056
    %v2157 = vmul.f32 %v2151, %v2057
    %2158 = vrot.lane.b32.xlu0 %v1488, 104
    %v2159 = vpop.permute.xlu0 %2158
    %2160 = vrot.lane.b32.xlu0 %v1488, 72
    %v2161 = vpop.permute.xlu0 %2160
    %v2163 = vsel %vm162, %v2159, 0
    %v2166 = vsel %vm162, %v2161, 0
    %2168 = vmatprep.subr.bf16.mxu0 0
    %2169 = vmatpush1.bf16.xpose.msra.mxu0 %v2166
    %2170 = vmatprep.subr.bf16.mxu0 0
    %2171 = vmatpush1.bf16.xpose.msra.mxu0 0
    %2172 = vmatprep.subr.bf16.mxu0 0
    %2173 = vmatpush1.bf16.xpose.msra.mxu0 0
    %2174 = vmatprep.subr.bf16.mxu0 0
    %2175 = vmatpush1.bf16.xpose.msra.mxu0 0
    %2176 = vmatprep.subr.bf16.mxu0 0
    %2177 = vmatpush1.bf16.xpose.msra.mxu0 0
    %2178 = vmatprep.subr.bf16.mxu0 0
    %2179 = vmatpush1.bf16.xpose.msra.mxu0 0
    %2180 = vmatprep.subr.bf16.mxu0 0
    %2181 = vmatpush1.bf16.xpose.msra.mxu0 0
    %2182 = vmatprep.subr.bf16.mxu0 0
    %2183 = vmatpush1.bf16.xpose.msra.mxu0 0
    %2184 = vmatprep.subr.bf16.mxu0 0
    %2185 = vmatpush1.bf16.xpose.msra.mxu0 0
    %2186 = vmatprep.subr.bf16.mxu0 0
    %2187 = vmatpush1.bf16.xpose.msra.mxu0 0
    %2188 = vmatprep.subr.bf16.mxu0 0
    %2189 = vmatpush1.bf16.xpose.msra.mxu0 0
    %2190 = vmatprep.subr.bf16.mxu0 0
    %2191 = vmatpush1.bf16.xpose.msra.mxu0 0
    %2192 = vmatprep.subr.bf16.mxu0 0
    %2193 = vmatpush1.bf16.xpose.msra.mxu0 0
    %2194 = vmatprep.subr.bf16.mxu0 0
    %2195 = vmatpush1.bf16.xpose.msra.mxu0 0
    %2196 = vmatprep.subr.bf16.mxu0 0
    %2197 = vmatpush1.bf16.xpose.msra.mxu0 0
    %2198 = vmatprep.subr.bf16.mxu0 0
    %2199 = vmatpush1.bf16.xpose.msra.mxu0 0
    %2200 = vmatprep.mubr.bf16.mxu0 0
    %2201 = vmatmul.mubr.bf16.gmra.mrb[0].mxu0 %v2163
    %v2202 = vpop.f32.mrb[0].mxu0
    %v2203 = vadd.f32 0.0, %v2202
    %v2204 = vpop.f32.mrb[0].mxu0
    %v2205 = vpop.f32.mrb[0].mxu0
    %v2206 = vpop.f32.mrb[0].mxu0
    %2207 = vdwg.mxu0
    %2208 = vrot.lane.b32.xlu0 %v1489, 104
    %v2209 = vpop.permute.xlu0 %2208
    %2210 = vrot.lane.b32.xlu0 %v1489, 72
    %v2211 = vpop.permute.xlu0 %2210
    %v2213 = vsel %vm162, %v2209, 0
    %v2216 = vsel %vm162, %v2211, 0
    %2218 = vmatprep.subr.bf16.mxu0 0
    %2219 = vmatpush1.bf16.xpose.msra.mxu0 %v2216
    %2220 = vmatprep.subr.bf16.mxu0 0
    %2221 = vmatpush1.bf16.xpose.msra.mxu0 0
    %2222 = vmatprep.subr.bf16.mxu0 0
    %2223 = vmatpush1.bf16.xpose.msra.mxu0 0
    %2224 = vmatprep.subr.bf16.mxu0 0
    %2225 = vmatpush1.bf16.xpose.msra.mxu0 0
    %2226 = vmatprep.subr.bf16.mxu0 0
    %2227 = vmatpush1.bf16.xpose.msra.mxu0 0
    %2228 = vmatprep.subr.bf16.mxu0 0
    %2229 = vmatpush1.bf16.xpose.msra.mxu0 0
    %2230 = vmatprep.subr.bf16.mxu0 0
    %2231 = vmatpush1.bf16.xpose.msra.mxu0 0
    %2232 = vmatprep.subr.bf16.mxu0 0
    %2233 = vmatpush1.bf16.xpose.msra.mxu0 0
    %2234 = vmatprep.subr.bf16.mxu0 0
    %2235 = vmatpush1.bf16.xpose.msra.mxu0 0
    %2236 = vmatprep.subr.bf16.mxu0 0
    %2237 = vmatpush1.bf16.xpose.msra.mxu0 0
    %2238 = vmatprep.subr.bf16.mxu0 0
    %2239 = vmatpush1.bf16.xpose.msra.mxu0 0
    %2240 = vmatprep.subr.bf16.mxu0 0
    %2241 = vmatpush1.bf16.xpose.msra.mxu0 0
    %2242 = vmatprep.subr.bf16.mxu0 0
    %2243 = vmatpush1.bf16.xpose.msra.mxu0 0
    %2244 = vmatprep.subr.bf16.mxu0 0
    %2245 = vmatpush1.bf16.xpose.msra.mxu0 0
    %2246 = vmatprep.subr.bf16.mxu0 0
    %2247 = vmatpush1.bf16.xpose.msra.mxu0 0
    %2248 = vmatprep.subr.bf16.mxu0 0
    %2249 = vmatpush1.bf16.xpose.msra.mxu0 0
    %2250 = vmatprep.mubr.bf16.mxu0 0
    %2251 = vmatmul.mubr.bf16.gmra.mrb[0].mxu0 %v2213
    %v2252 = vpop.f32.mrb[0].mxu0
    %v2253 = vadd.f32 0.0, %v2252
    %v2254 = vpop.f32.mrb[0].mxu0
    %v2255 = vpop.f32.mrb[0].mxu0
    %v2256 = vpop.f32.mrb[0].mxu0
    %2257 = vdwg.mxu0
    %v2258 = vmul.f32 %v2203, 0.35355338
    %v2259 = vmul.f32 %v2253, 0.35355338
    %v2260 = vadd.f32 %v2258, %v264
    %v2261 = vadd.f32 %v2259, %v268
    %v2262 = vsel %vm162, %v2260, -inf
    %2263 = vmax.xlane.f32.xlu0 %v2262
    %v2264 = vpop.xlane.xlu0 %2263
    %v2265 = vsel %vm162, %v2261, -inf
    %2266 = vmax.xlane.f32.xlu0 %v2265
    %v2267 = vpop.xlane.xlu0 %2266
    %v2268 = vsub.f32 %v2260, %v2264
    %v2269 = vsub.f32 %v2261, %v2267
    %v2270 = vmul.f32 %v2268, 1.442695
    %v2271 = vpow.pop %v2270
    %v2272 = vmul.f32 %v2269, 1.442695
    %v2273 = vpow.pop %v2272
    %v2274 = vsel %vm162, %v2271, 0.0
    %2275 = vadd.xlane.f32.xlu0 %v2274
    %v2276 = vpop.xlane.xlu0 %2275
    %v2277 = vsel %vm162, %v2273, 0.0
    %2278 = vadd.xlane.f32.xlu0 %v2277
    %v2279 = vpop.xlane.xlu0 %2278
    %v2280 = vrcp.pop %v2276
    %v2281 = vrcp.pop %v2279
    %v2282 = vpack.c.bf16 %v2271, %v2271
    %v2283 = vpack.c.bf16 %v2273, %v2273
    %2284 = vrot.lane.b32.xlu0 %v1488, 40
    %v2285 = vpop.permute.xlu0 %2284
    %v2287 = vsel %vm162, %v2282, 0
    %v2290 = vsel %vm300, %v2285, 0
    %2292 = vmatprep.subr.bf16.mxu0 0
    %2293 = vmatpush1.bf16.msra.mxu0 %v2290
    %2294 = vmatprep.subr.bf16.mxu0 0
    %2295 = vmatpush1.bf16.msra.mxu0 0
    %2296 = vmatprep.subr.bf16.mxu0 0
    %2297 = vmatpush1.bf16.msra.mxu0 0
    %2298 = vmatprep.subr.bf16.mxu0 0
    %2299 = vmatpush1.bf16.msra.mxu0 0
    %2300 = vmatprep.subr.bf16.mxu0 0
    %2301 = vmatpush1.bf16.msra.mxu0 0
    %2302 = vmatprep.subr.bf16.mxu0 0
    %2303 = vmatpush1.bf16.msra.mxu0 0
    %2304 = vmatprep.subr.bf16.mxu0 0
    %2305 = vmatpush1.bf16.msra.mxu0 0
    %2306 = vmatprep.subr.bf16.mxu0 0
    %2307 = vmatpush1.bf16.msra.mxu0 0
    %2308 = vmatprep.subr.bf16.mxu0 0
    %2309 = vmatpush1.bf16.msra.mxu0 0
    %2310 = vmatprep.subr.bf16.mxu0 0
    %2311 = vmatpush1.bf16.msra.mxu0 0
    %2312 = vmatprep.subr.bf16.mxu0 0
    %2313 = vmatpush1.bf16.msra.mxu0 0
    %2314 = vmatprep.subr.bf16.mxu0 0
    %2315 = vmatpush1.bf16.msra.mxu0 0
    %2316 = vmatprep.subr.bf16.mxu0 0
    %2317 = vmatpush1.bf16.msra.mxu0 0
    %2318 = vmatprep.subr.bf16.mxu0 0
    %2319 = vmatpush1.bf16.msra.mxu0 0
    %2320 = vmatprep.subr.bf16.mxu0 0
    %2321 = vmatpush1.bf16.msra.mxu0 0
    %2322 = vmatprep.subr.bf16.mxu0 0
    %2323 = vmatpush1.bf16.msra.mxu0 0
    %2324 = vmatprep.mubr.bf16.mxu0 0
    %2325 = vmatmul.mubr.bf16.gmra.mrb[0].mxu0 %v2287
    %v2326 = vpop.f32.mrb[0].mxu0
    %v2327 = vadd.f32 0.0, %v2326
    %v2328 = vpop.f32.mrb[0].mxu0
    %v2329 = vpop.f32.mrb[0].mxu0
    %v2330 = vpop.f32.mrb[0].mxu0
    %2331 = vdwg.mxu0
    %2332 = vrot.lane.b32.xlu0 %v1489, 40
    %v2333 = vpop.permute.xlu0 %2332
    %v2335 = vsel %vm162, %v2283, 0
    %v2338 = vsel %vm300, %v2333, 0
    %2340 = vmatprep.subr.bf16.mxu0 0
    %2341 = vmatpush1.bf16.msra.mxu0 %v2338
    %2342 = vmatprep.subr.bf16.mxu0 0
    %2343 = vmatpush1.bf16.msra.mxu0 0
    %2344 = vmatprep.subr.bf16.mxu0 0
    %2345 = vmatpush1.bf16.msra.mxu0 0
    %2346 = vmatprep.subr.bf16.mxu0 0
    %2347 = vmatpush1.bf16.msra.mxu0 0
    %2348 = vmatprep.subr.bf16.mxu0 0
    %2349 = vmatpush1.bf16.msra.mxu0 0
    %2350 = vmatprep.subr.bf16.mxu0 0
    %2351 = vmatpush1.bf16.msra.mxu0 0
    %2352 = vmatprep.subr.bf16.mxu0 0
    %2353 = vmatpush1.bf16.msra.mxu0 0
    %2354 = vmatprep.subr.bf16.mxu0 0
    %2355 = vmatpush1.bf16.msra.mxu0 0
    %2356 = vmatprep.subr.bf16.mxu0 0
    %2357 = vmatpush1.bf16.msra.mxu0 0
    %2358 = vmatprep.subr.bf16.mxu0 0
    %2359 = vmatpush1.bf16.msra.mxu0 0
    %2360 = vmatprep.subr.bf16.mxu0 0
    %2361 = vmatpush1.bf16.msra.mxu0 0
    %2362 = vmatprep.subr.bf16.mxu0 0
    %2363 = vmatpush1.bf16.msra.mxu0 0
    %2364 = vmatprep.subr.bf16.mxu0 0
    %2365 = vmatpush1.bf16.msra.mxu0 0
    %2366 = vmatprep.subr.bf16.mxu0 0
    %2367 = vmatpush1.bf16.msra.mxu0 0
    %2368 = vmatprep.subr.bf16.mxu0 0
    %2369 = vmatpush1.bf16.msra.mxu0 0
    %2370 = vmatprep.subr.bf16.mxu0 0
    %2371 = vmatpush1.bf16.msra.mxu0 0
    %2372 = vmatprep.mubr.bf16.mxu0 0
    %2373 = vmatmul.mubr.bf16.gmra.mrb[0].mxu0 %v2335
    %v2374 = vpop.f32.mrb[0].mxu0
    %v2375 = vadd.f32 0.0, %v2374
    %v2376 = vpop.f32.mrb[0].mxu0
    %v2377 = vpop.f32.mrb[0].mxu0
    %v2378 = vpop.f32.mrb[0].mxu0
    %2379 = vdwg.mxu0
    %v2380 = vmul.f32 %v2327, %v2280
    %v2381 = vmul.f32 %v2375, %v2281
    %2384 = vrot.lane.b32.xlu0 %v1932, 8
    %v2385 = vpop.permute.xlu0 %2384
    %2386 = vrot.lane.b32.xlu0 %v1933, 8
    %v2387 = vpop.permute.xlu0 %2386
    %2392 = vrot.lane.b32.xlu0 %v2156, 16
    %v2393 = vpop.permute.xlu0 %2392
    %2394 = vrot.lane.b32.xlu0 %v2157, 16
    %v2395 = vpop.permute.xlu0 %2394
    %2400 = vrot.lane.b32.xlu0 %v2380, 24
    %v2401 = vpop.permute.xlu0 %2400
    %2402 = vrot.lane.b32.xlu0 %v2381, 24
    %v2403 = vpop.permute.xlu0 %2402
    %v2406 = vsel %vm162, %v1708, %v2385
    %v2407 = vsel %vm162, %v1709, %v2387
    %v2408 = vsel %vm1092, %v2406, %v2393
    %v2409 = vsel %vm1092, %v2407, %v2395
    %v2410 = vsel %vm1095, %v2408, %v2401
    %v2411 = vsel %vm1095, %v2409, %v2403
    %s2412 = scalar_lea.vmem %s4, 16
    %v2413 = vld [vmem:[%s2412] sm:$0xf]
    %v2414 = vld [vmem:[%s2412 + $0x4] sm:$0xf]
    %v2415 = vld [vmem:[%s2412 + $0x8] sm:$0xf]
    %v2416 = vld [vmem:[%s2412 + $0xc] sm:$0xf]
    %v2417 = vpack.c.bf16 %v2411, %v2410
    %s2418 = scalar_lea.vmem %s5, 1
    %v2419 = vld [vmem:[%s2418] sm:$0x1]
    %v2421 = vlaneseq
    %v2422 = vshrl.u32 %v2421, 7
    %v2423 = vsub.s32 0, %v2422
    %v2424 = vrot.slane %v2419, %v2423
    %v2430 = vunpack.c.l.b16 %v2413
    %v2431 = vunpack.c.l.b16 %v2414
    %v2432 = vunpack.c.l.b16 %v2415
    %v2433 = vunpack.c.l.b16 %v2416
    %v2434 = vpack.c.b16 %v2431, %v2430
    %v2435 = vpack.c.b16 %v2433, %v2432
    %v2439 = vsel %vm109, %v2417, 0
    %2441 = vmatprep.subr.bf16.mxu0 0
    %2442 = vmatpush1.bf16.msra.mxu0 %v2434
    %2443 = vmatprep.subr.bf16.mxu0 0
    %2444 = vmatpush1.bf16.msra.mxu0 %v2435
    %2445 = vmatprep.subr.bf16.mxu0 0
    %2446 = vmatpush1.bf16.msra.mxu0 0
    %2447 = vmatprep.subr.bf16.mxu0 0
    %2448 = vmatpush1.bf16.msra.mxu0 0
    %2449 = vmatprep.subr.bf16.mxu0 0
    %2450 = vmatpush1.bf16.msra.mxu0 0
    %2451 = vmatprep.subr.bf16.mxu0 0
    %2452 = vmatpush1.bf16.msra.mxu0 0
    %2453 = vmatprep.subr.bf16.mxu0 0
    %2454 = vmatpush1.bf16.msra.mxu0 0
    %2455 = vmatprep.subr.bf16.mxu0 0
    %2456 = vmatpush1.bf16.msra.mxu0 0
    %2457 = vmatprep.subr.bf16.mxu0 0
    %2458 = vmatpush1.bf16.msra.mxu0 0
    %2459 = vmatprep.subr.bf16.mxu0 0
    %2460 = vmatpush1.bf16.msra.mxu0 0
    %2461 = vmatprep.subr.bf16.mxu0 0
    %2462 = vmatpush1.bf16.msra.mxu0 0
    %2463 = vmatprep.subr.bf16.mxu0 0
    %2464 = vmatpush1.bf16.msra.mxu0 0
    %2465 = vmatprep.subr.bf16.mxu0 0
    %2466 = vmatpush1.bf16.msra.mxu0 0
    %2467 = vmatprep.subr.bf16.mxu0 0
    %2468 = vmatpush1.bf16.msra.mxu0 0
    %2469 = vmatprep.subr.bf16.mxu0 0
    %2470 = vmatpush1.bf16.msra.mxu0 0
    %2471 = vmatprep.subr.bf16.mxu0 0
    %2472 = vmatpush1.bf16.msra.mxu0 0
    %2473 = vmatprep.mubr.bf16.mxu0 0
    %2474 = vmatmul.mubr.bf16.gmra.mrb[0].mxu0 %v2439
    %v2475 = vpop.f32.mrb[0].mxu0
    %v2476 = vadd.f32 %v2424, %v2475
    %v2477 = vpop.f32.mrb[0].mxu0
    %v2478 = vpop.f32.mrb[0].mxu0
    %v2479 = vadd.f32 %v2424, %v2478
    %v2480 = vpop.f32.mrb[0].mxu0
    %2481 = vdwg.mxu0
    %v2482 = vadd.f32 %v2476, %v1412
    %v2483 = vadd.f32 %v2479, %v1413
    %s2484 = scalar_lea.vmem %s10, 1
    %v2485 = vld [vmem:[%s2484] sm:$0x1]
    %s2486 = scalar_lea.vmem %s11, 1
    %v2487 = vld [vmem:[%s2486] sm:$0x1]
    %v2488 = vsel %vm109, %v2482, 0.0
    %2489 = vadd.xlane.f32.xlu0 %v2488
    %v2490 = vpop.xlane.xlu0 %2489
    %v2491 = vsel %vm109, %v2483, 0.0
    %2492 = vadd.xlane.f32.xlu0 %v2491
    %v2493 = vpop.xlane.xlu0 %2492
    %v2494 = vmul.f32 %v2490, %v1176
    %v2495 = vmul.f32 %v2493, %v1176
    %v2496 = vsub.f32 %v2482, %v2494
    %v2497 = vsub.f32 %v2483, %v2495
    %v2498 = vmul.f32 %v2496, %v2496
    %v2499 = vmul.f32 %v2497, %v2497
    %v2500 = vsel %vm109, %v2498, 0.0
    %2501 = vadd.xlane.f32.xlu0 %v2500
    %v2502 = vpop.xlane.xlu0 %2501
    %v2503 = vsel %vm109, %v2499, 0.0
    %2504 = vadd.xlane.f32.xlu0 %v2503
    %v2505 = vpop.xlane.xlu0 %2504
    %v2506 = vmul.f32 %v2502, %v1176
    %v2507 = vmul.f32 %v2505, %v1176
    %v2508 = vadd.f32 %v2506, 1e-05
    %v2509 = vadd.f32 %v2507, 1e-05
    %v2510 = vrsqrt.pop %v2508
    %v2511 = vrsqrt.pop %v2509
    %v2512 = vmul.f32 %v2496, %v2510
    %v2513 = vmul.f32 %v2497, %v2511
    %v2515 = vlaneseq
    %v2516 = vshrl.u32 %v2515, 7
    %v2517 = vsub.s32 0, %v2516
    %v2518 = vrot.slane %v2485, %v2517
    %v2520 = vmul.f32 %v2512, %v2518
    %v2521 = vmul.f32 %v2513, %v2518
    %v2523 = vlaneseq
    %v2524 = vshrl.u32 %v2523, 7
    %v2525 = vsub.s32 0, %v2524
    %v2526 = vrot.slane %v2487, %v2525
    %v2528 = vadd.f32 %v2520, %v2526
    %v2529 = vadd.f32 %v2521, %v2526
    %s2530 = scalar_lea.vmem %s6, 16
    %v2531 = vld [vmem:[%s2530] sm:$0xf]
    %v2532 = vld [vmem:[%s2530 + $0x4] sm:$0xf]
    %v2533 = vld [vmem:[%s2530 + $0x8] sm:$0xf]
    %v2534 = vld [vmem:[%s2530 + $0xc] sm:$0xf]
    %v2535 = vpack.c.bf16 %v2529, %v2528
    %s2536 = scalar_lea.vmem %s7, 1
    %v2537 = vld [vmem:[%s2536] sm:$0x1]
    %v2539 = vlaneseq
    %v2540 = vshrl.u32 %v2539, 7
    %v2541 = vsub.s32 0, %v2540
    %v2542 = vrot.slane %v2537, %v2541
    %v2548 = vunpack.c.l.b16 %v2531
    %v2549 = vunpack.c.l.b16 %v2532
    %v2550 = vunpack.c.l.b16 %v2533
    %v2551 = vunpack.c.l.b16 %v2534
    %v2552 = vpack.c.b16 %v2549, %v2548
    %v2553 = vpack.c.b16 %v2551, %v2550
    %v2557 = vsel %vm109, %v2535, 0
    %2559 = vmatprep.subr.bf16.mxu0 0
    %2560 = vmatpush1.bf16.msra.mxu0 %v2552
    %2561 = vmatprep.subr.bf16.mxu0 0
    %2562 = vmatpush1.bf16.msra.mxu0 %v2553
    %2563 = vmatprep.subr.bf16.mxu0 0
    %2564 = vmatpush1.bf16.msra.mxu0 0
    %2565 = vmatprep.subr.bf16.mxu0 0
    %2566 = vmatpush1.bf16.msra.mxu0 0
    %2567 = vmatprep.subr.bf16.mxu0 0
    %2568 = vmatpush1.bf16.msra.mxu0 0
    %2569 = vmatprep.subr.bf16.mxu0 0
    %2570 = vmatpush1.bf16.msra.mxu0 0
    %2571 = vmatprep.subr.bf16.mxu0 0
    %2572 = vmatpush1.bf16.msra.mxu0 0
    %2573 = vmatprep.subr.bf16.mxu0 0
    %2574 = vmatpush1.bf16.msra.mxu0 0
    %2575 = vmatprep.subr.bf16.mxu0 0
    %2576 = vmatpush1.bf16.msra.mxu0 0
    %2577 = vmatprep.subr.bf16.mxu0 0
    %2578 = vmatpush1.bf16.msra.mxu0 0
    %2579 = vmatprep.subr.bf16.mxu0 0
    %2580 = vmatpush1.bf16.msra.mxu0 0
    %2581 = vmatprep.subr.bf16.mxu0 0
    %2582 = vmatpush1.bf16.msra.mxu0 0
    %2583 = vmatprep.subr.bf16.mxu0 0
    %2584 = vmatpush1.bf16.msra.mxu0 0
    %2585 = vmatprep.subr.bf16.mxu0 0
    %2586 = vmatpush1.bf16.msra.mxu0 0
    %2587 = vmatprep.subr.bf16.mxu0 0
    %2588 = vmatpush1.bf16.msra.mxu0 0
    %2589 = vmatprep.subr.bf16.mxu0 0
    %2590 = vmatpush1.bf16.msra.mxu0 0
    %2591 = vmatprep.mubr.bf16.mxu0 0
    %2592 = vmatmul.mubr.bf16.gmra.mrb[0].mxu0 %v2557
    %v2593 = vpop.f32.mrb[0].mxu0
    %v2594 = vadd.f32 %v2542, %v2593
    %v2595 = vpop.f32.mrb[0].mxu0
    %v2596 = vpop.f32.mrb[0].mxu0
    %v2597 = vadd.f32 %v2542, %v2596
    %v2598 = vpop.f32.mrb[0].mxu0
    %2599 = vdwg.mxu0
    %v2600 = vmax.f32 %v2594, 0.0
    %v2601 = vmax.f32 %v2597, 0.0
    %s2602 = scalar_lea.vmem %s8, 32
    %v2603 = vld [vmem:[%s2602] sm:$0xf]
    %v2604 = vld [vmem:[%s2602 + $0x4] sm:$0xf]
    %v2605 = vld [vmem:[%s2602 + $0x8] sm:$0xf]
    %v2606 = vld [vmem:[%s2602 + $0xc] sm:$0xf]
    %v2607 = vld [vmem:[%s2602 + $0x10] sm:$0xf]
    %v2608 = vld [vmem:[%s2602 + $0x14] sm:$0xf]
    %v2609 = vld [vmem:[%s2602 + $0x18] sm:$0xf]
    %v2610 = vld [vmem:[%s2602 + $0x1c] sm:$0xf]
    %v2611 = vpack.c.bf16 %v2601, %v2600
    %s2612 = scalar_lea.vmem %s9, 1
    %v2613 = vld [vmem:[%s2612] sm:$0x1]
    %v2615 = vlaneseq
    %v2616 = vshrl.u32 %v2615, 7
    %v2617 = vsub.s32 0, %v2616
    %v2618 = vrot.slane %v2613, %v2617
    %v2628 = vunpack.c.l.b16 %v2603
    %v2629 = vunpack.c.l.b16 %v2604
    %v2630 = vunpack.c.l.b16 %v2605
    %v2631 = vunpack.c.l.b16 %v2606
    %v2632 = vunpack.c.l.b16 %v2607
    %v2633 = vunpack.c.l.b16 %v2608
    %v2634 = vunpack.c.l.b16 %v2609
    %v2635 = vunpack.c.l.b16 %v2610
    %v2636 = vpack.c.b16 %v2629, %v2628
    %v2637 = vpack.c.b16 %v2631, %v2630
    %v2638 = vpack.c.b16 %v2633, %v2632
    %v2639 = vpack.c.b16 %v2635, %v2634
    %v2645 = vsel %vm1323, %v2611, 0
    %2647 = vmatprep.subr.bf16.mxu0 0
    %2648 = vmatpush1.bf16.msra.mxu0 %v2636
    %2649 = vmatprep.subr.bf16.mxu0 0
    %2650 = vmatpush1.bf16.msra.mxu0 %v2637
    %2651 = vmatprep.subr.bf16.mxu0 0
    %2652 = vmatpush1.bf16.msra.mxu0 %v2638
    %2653 = vmatprep.subr.bf16.mxu0 0
    %2654 = vmatpush1.bf16.msra.mxu0 %v2639
    %2655 = vmatprep.subr.bf16.mxu0 0
    %2656 = vmatpush1.bf16.msra.mxu0 0
    %2657 = vmatprep.subr.bf16.mxu0 0
    %2658 = vmatpush1.bf16.msra.mxu0 0
    %2659 = vmatprep.subr.bf16.mxu0 0
    %2660 = vmatpush1.bf16.msra.mxu0 0
    %2661 = vmatprep.subr.bf16.mxu0 0
    %2662 = vmatpush1.bf16.msra.mxu0 0
    %2663 = vmatprep.subr.bf16.mxu0 0
    %2664 = vmatpush1.bf16.msra.mxu0 0
    %2665 = vmatprep.subr.bf16.mxu0 0
    %2666 = vmatpush1.bf16.msra.mxu0 0
    %2667 = vmatprep.subr.bf16.mxu0 0
    %2668 = vmatpush1.bf16.msra.mxu0 0
    %2669 = vmatprep.subr.bf16.mxu0 0
    %2670 = vmatpush1.bf16.msra.mxu0 0
    %2671 = vmatprep.subr.bf16.mxu0 0
    %2672 = vmatpush1.bf16.msra.mxu0 0
    %2673 = vmatprep.subr.bf16.mxu0 0
    %2674 = vmatpush1.bf16.msra.mxu0 0
    %2675 = vmatprep.subr.bf16.mxu0 0
    %2676 = vmatpush1.bf16.msra.mxu0 0
    %2677 = vmatprep.subr.bf16.mxu0 0
    %2678 = vmatpush1.bf16.msra.mxu0 0
    %2679 = vmatprep.mubr.bf16.mxu0 0
    %2680 = vmatmul.mubr.bf16.gmra.mrb[0].mxu0 %v2645
    %v2681 = vpop.f32.mrb[0].mxu0
    %v2682 = vadd.f32 %v2618, %v2681
    %v2683 = vpop.f32.mrb[0].mxu0
    %v2684 = vpop.f32.mrb[0].mxu0
    %v2685 = vadd.f32 %v2618, %v2684
    %v2686 = vpop.f32.mrb[0].mxu0
    %2687 = vdwg.mxu0
    %v2688 = vadd.f32 %v2682, %v2528
    %v2689 = vadd.f32 %v2685, %v2529
    %s2690 = scalar_lea.vmem %s12, 1
    %v2691 = vld [vmem:[%s2690] sm:$0x1]
    %s2692 = scalar_lea.vmem %s13, 1
    %v2693 = vld [vmem:[%s2692] sm:$0x1]
    %v2694 = vsel %vm109, %v2688, 0.0
    %2695 = vadd.xlane.f32.xlu0 %v2694
    %v2696 = vpop.xlane.xlu0 %2695
    %v2697 = vsel %vm109, %v2689, 0.0
    %2698 = vadd.xlane.f32.xlu0 %v2697
    %v2699 = vpop.xlane.xlu0 %2698
    %v2700 = vmul.f32 %v2696, %v1176
    %v2701 = vmul.f32 %v2699, %v1176
    %v2702 = vsub.f32 %v2688, %v2700
    %v2703 = vsub.f32 %v2689, %v2701
    %v2704 = vmul.f32 %v2702, %v2702
    %v2705 = vmul.f32 %v2703, %v2703
    %v2706 = vsel %vm109, %v2704, 0.0
    %2707 = vadd.xlane.f32.xlu0 %v2706
    %v2708 = vpop.xlane.xlu0 %2707
    %v2709 = vsel %vm109, %v2705, 0.0
    %2710 = vadd.xlane.f32.xlu0 %v2709
    %v2711 = vpop.xlane.xlu0 %2710
    %v2712 = vmul.f32 %v2708, %v1176
    %v2713 = vmul.f32 %v2711, %v1176
    %v2714 = vadd.f32 %v2712, 1e-05
    %v2715 = vadd.f32 %v2713, 1e-05
    %v2716 = vrsqrt.pop %v2714
    %v2717 = vrsqrt.pop %v2715
    %v2718 = vmul.f32 %v2702, %v2716
    %v2719 = vmul.f32 %v2703, %v2717
    %v2721 = vlaneseq
    %v2722 = vshrl.u32 %v2721, 7
    %v2723 = vsub.s32 0, %v2722
    %v2724 = vrot.slane %v2691, %v2723
    %v2726 = vmul.f32 %v2718, %v2724
    %v2727 = vmul.f32 %v2719, %v2724
    %v2729 = vlaneseq
    %v2730 = vshrl.u32 %v2729, 7
    %v2731 = vsub.s32 0, %v2730
    %v2732 = vrot.slane %v2693, %v2731
    %v2734 = vadd.f32 %v2726, %v2732
    %v2735 = vadd.f32 %v2727, %v2732
    %v2737 = vsel %vm162, %v79, 0
    %2739 = vmatprep.subr.mxu0 0.0
    %2740 = vmatpush1.msra.mxu0 %v2734
    %2741 = vmatprep.subr.mxu0 0.0
    %2742 = vmatpush1.msra.mxu0 0.0
    %2743 = vmatprep.subr.mxu0 0.0
    %2744 = vmatpush1.msra.mxu0 0.0
    %2745 = vmatprep.subr.mxu0 0.0
    %2746 = vmatpush1.msra.mxu0 0.0
    %2747 = vmatprep.subr.mxu0 0.0
    %2748 = vmatpush1.msra.mxu0 0.0
    %2749 = vmatprep.subr.mxu0 0.0
    %2750 = vmatpush1.msra.mxu0 0.0
    %2751 = vmatprep.subr.mxu0 0.0
    %2752 = vmatpush1.msra.mxu0 0.0
    %2753 = vmatprep.subr.mxu0 0.0
    %2754 = vmatpush1.msra.mxu0 0.0
    %2755 = vmatprep.subr.mxu0 0.0
    %2756 = vmatpush1.msra.mxu0 0.0
    %2757 = vmatprep.subr.mxu0 0.0
    %2758 = vmatpush1.msra.mxu0 0.0
    %2759 = vmatprep.subr.mxu0 0.0
    %2760 = vmatpush1.msra.mxu0 0.0
    %2761 = vmatprep.subr.mxu0 0.0
    %2762 = vmatpush1.msra.mxu0 0.0
    %2763 = vmatprep.subr.mxu0 0.0
    %2764 = vmatpush1.msra.mxu0 0.0
    %2765 = vmatprep.subr.mxu0 0.0
    %2766 = vmatpush1.msra.mxu0 0.0
    %2767 = vmatprep.subr.mxu0 0.0
    %2768 = vmatpush1.msra.mxu0 0.0
    %2769 = vmatprep.subr.mxu0 0.0
    %2770 = vmatpush1.msra.mxu0 0.0
    %2771 = vmatprep.subr.mxu0 0.0
    %2772 = vmatpush1.msra.mxu0 0.0
    %2773 = vmatprep.subr.mxu0 0.0
    %2774 = vmatpush1.msra.mxu0 0.0
    %2775 = vmatprep.subr.mxu0 0.0
    %2776 = vmatpush1.msra.mxu0 0.0
    %2777 = vmatprep.subr.mxu0 0.0
    %2778 = vmatpush1.msra.mxu0 0.0
    %2779 = vmatprep.subr.mxu0 0.0
    %2780 = vmatpush1.msra.mxu0 0.0
    %2781 = vmatprep.subr.mxu0 0.0
    %2782 = vmatpush1.msra.mxu0 0.0
    %2783 = vmatprep.subr.mxu0 0.0
    %2784 = vmatpush1.msra.mxu0 0.0
    %2785 = vmatprep.subr.mxu0 0.0
    %2786 = vmatpush1.msra.mxu0 0.0
    %2787 = vmatprep.subr.mxu0 0.0
    %2788 = vmatpush1.msra.mxu0 0.0
    %2789 = vmatprep.subr.mxu0 0.0
    %2790 = vmatpush1.msra.mxu0 0.0
    %2791 = vmatprep.subr.mxu0 0.0
    %2792 = vmatpush1.msra.mxu0 0.0
    %2793 = vmatprep.subr.mxu0 0.0
    %2794 = vmatpush1.msra.mxu0 0.0
    %2795 = vmatprep.subr.mxu0 0.0
    %2796 = vmatpush1.msra.mxu0 0.0
    %2797 = vmatprep.subr.mxu0 0.0
    %2798 = vmatpush1.msra.mxu0 0.0
    %2799 = vmatprep.subr.mxu0 0.0
    %2800 = vmatpush1.msra.mxu0 0.0
    %2801 = vmatprep.subr.mxu0 0.0
    %2802 = vmatpush1.msra.mxu0 0.0
    %2803 = vmatprep.mubr.f32.mxu0 0.0
    %2804 = vmatmul.mubr.f32.gmra.mrb[0].mxu0 %v2737
    %v2805 = vpop.f32.mrb[0].mxu0
    %v2806 = vadd.f32 0.0, %v2805
    %v2807 = vpop.f32.mrb[0].mxu0
    %2808 = vdwg.mxu0
    %v2810 = vsel %vm162, %v80, 0
    %2812 = vmatprep.subr.mxu0 0.0
    %2813 = vmatpush1.msra.mxu0 %v2735
    %2814 = vmatprep.subr.mxu0 0.0
    %2815 = vmatpush1.msra.mxu0 0.0
    %2816 = vmatprep.subr.mxu0 0.0
    %2817 = vmatpush1.msra.mxu0 0.0
    %2818 = vmatprep.subr.mxu0 0.0
    %2819 = vmatpush1.msra.mxu0 0.0
    %2820 = vmatprep.subr.mxu0 0.0
    %2821 = vmatpush1.msra.mxu0 0.0
    %2822 = vmatprep.subr.mxu0 0.0
    %2823 = vmatpush1.msra.mxu0 0.0
    %2824 = vmatprep.subr.mxu0 0.0
    %2825 = vmatpush1.msra.mxu0 0.0
    %2826 = vmatprep.subr.mxu0 0.0
    %2827 = vmatpush1.msra.mxu0 0.0
    %2828 = vmatprep.subr.mxu0 0.0
    %2829 = vmatpush1.msra.mxu0 0.0
    %2830 = vmatprep.subr.mxu0 0.0
    %2831 = vmatpush1.msra.mxu0 0.0
    %2832 = vmatprep.subr.mxu0 0.0
    %2833 = vmatpush1.msra.mxu0 0.0
    %2834 = vmatprep.subr.mxu0 0.0
    %2835 = vmatpush1.msra.mxu0 0.0
    %2836 = vmatprep.subr.mxu0 0.0
    %2837 = vmatpush1.msra.mxu0 0.0
    %2838 = vmatprep.subr.mxu0 0.0
    %2839 = vmatpush1.msra.mxu0 0.0
    %2840 = vmatprep.subr.mxu0 0.0
    %2841 = vmatpush1.msra.mxu0 0.0
    %2842 = vmatprep.subr.mxu0 0.0
    %2843 = vmatpush1.msra.mxu0 0.0
    %2844 = vmatprep.subr.mxu0 0.0
    %2845 = vmatpush1.msra.mxu0 0.0
    %2846 = vmatprep.subr.mxu0 0.0
    %2847 = vmatpush1.msra.mxu0 0.0
    %2848 = vmatprep.subr.mxu0 0.0
    %2849 = vmatpush1.msra.mxu0 0.0
    %2850 = vmatprep.subr.mxu0 0.0
    %2851 = vmatpush1.msra.mxu0 0.0
    %2852 = vmatprep.subr.mxu0 0.0
    %2853 = vmatpush1.msra.mxu0 0.0
    %2854 = vmatprep.subr.mxu0 0.0
    %2855 = vmatpush1.msra.mxu0 0.0
    %2856 = vmatprep.subr.mxu0 0.0
    %2857 = vmatpush1.msra.mxu0 0.0
    %2858 = vmatprep.subr.mxu0 0.0
    %2859 = vmatpush1.msra.mxu0 0.0
    %2860 = vmatprep.subr.mxu0 0.0
    %2861 = vmatpush1.msra.mxu0 0.0
    %2862 = vmatprep.subr.mxu0 0.0
    %2863 = vmatpush1.msra.mxu0 0.0
    %2864 = vmatprep.subr.mxu0 0.0
    %2865 = vmatpush1.msra.mxu0 0.0
    %2866 = vmatprep.subr.mxu0 0.0
    %2867 = vmatpush1.msra.mxu0 0.0
    %2868 = vmatprep.subr.mxu0 0.0
    %2869 = vmatpush1.msra.mxu0 0.0
    %2870 = vmatprep.subr.mxu0 0.0
    %2871 = vmatpush1.msra.mxu0 0.0
    %2872 = vmatprep.subr.mxu0 0.0
    %2873 = vmatpush1.msra.mxu0 0.0
    %2874 = vmatprep.subr.mxu0 0.0
    %2875 = vmatpush1.msra.mxu0 0.0
    %2876 = vmatprep.mubr.f32.mxu0 0.0
    %2877 = vmatmul.mubr.f32.gmra.mrb[0].mxu0 %v2810
    %v2878 = vpop.f32.mrb[0].mxu0
    %v2879 = vadd.f32 0.0, %v2878
    %v2880 = vpop.f32.mrb[0].mxu0
    %2881 = vdwg.mxu0
    %vm2882 = vcmask 57344
    %v2883 = vsel %vm2882, %v79, 0.0
    %2884 = vadd.xlane.f32.xlu0 %v2883
    %v2885 = vpop.xlane.xlu0 %2884
    %v2886 = vsel %vm2882, %v80, 0.0
    %2887 = vadd.xlane.f32.xlu0 %v2886
    %v2888 = vpop.xlane.xlu0 %2887
    %v2889 = vmax.f32 %v2885, 1.0
    %v2890 = vmax.f32 %v2888, 1.0
    %v2891 = vlaneseq
    %v2892 = vshrl.u32 %v2891, 7
    %v2893 = vsub.s32 0, %v2892
    %v2894 = vrot.slane %v2889, %v2893
    %v2895 = vlaneseq
    %v2896 = vshrl.u32 %v2895, 7
    %v2897 = vsub.s32 0, %v2896
    %v2898 = vrot.slane %v2890, %v2897
    %v2899 = vrcp.pop %v2894
    %v2900 = vmul.f32 %v2806, %v2899
    %v2901 = vrcp.pop %v2898
    %v2902 = vmul.f32 %v2879, %v2901
    %v2905 = vrot.slane %v2902, 7
    %vm2906 = vcmask 1041409
    %v2907 = vsel %vm2906, %v2905, %v2900
    %vm2909 = vcmask 254976
    %2910 = vst.msk [vmem:[#allocation7] sm:$0x3] %vm2909, %v2907
    // Predicated region
    $region66: #{tpu_custom_call.1} parent=1 // pred_check
      _
    $region67: #{tpu_custom_call.1} parent=1 // pred_check_branch
      %2912 = sbr.rel (0) target = $region69
    $region68: #{tpu_custom_call.1} parent=1 // pred_region
      %s2914 = ssub.s32 32, 32
      %2915 = vsyncadd [#allocation4], %s2914
      %s2917 = sshll.u32 [#allocation7], 4
      %s2918 = int_to_ptr.vmem [resolvable:$true] %s2917
      %2920 = dma.vmem_to_hbm [thread:$0]  %s2918, 32, %s14, [#allocation4]
    $region69: #{tpu_custom_call.1} parent=1 // pred_fallthru
      _
    // Predicated region
    $region70: #{tpu_custom_call.1} parent=1 // pred_check
      _
    $region71: #{tpu_custom_call.1} parent=1 // pred_check_branch
      %2922 = sbr.rel (0) target = $region73
    $region72: #{tpu_custom_call.1} parent=1 // pred_region
      %2923 = dma.done [#allocation4], 32
    $region73: #{tpu_custom_call.1} parent=1 // pred_fallthru
      _
    %2924 = vsyncpa [#allocation3], 1
    %2925 = vsyncpa [#allocation6], 1
    %2926 = vsyncpa [#allocation4], 1

</llo_original>
